<compile_context>
chip_gen: v7x
topology: tpu7x:2x2x1
jax: 0.10.0
libtpu: 0.0.40
codegen_flags: <defaults>
</compile_context>

<pallas_src>
from functools import partial

import numpy as np
import jax
import jax.numpy as jnp
from jax.experimental import pallas as pl
from jax.experimental.pallas import tpu as pltpu

# ---- deterministic constants -------------------------------------------------
# normalized 3x3 sobel (abs-sum = 8); cross-correlation taps (reference only)
_KX = np.array([[-1.0, 0.0, 1.0],
                [-2.0, 0.0, 2.0],
                [-1.0, 0.0, 1.0]], dtype=np.float32) / 8.0
_KY = _KX.T.copy()

# 7-tap gaussian, sigma = 1.0 (kornia get_gaussian_kernel1d), normalized to sum 1
_xs = np.arange(7, dtype=np.float32) - 3.0
_G1D = np.exp(-(_xs ** 2) / 2.0).astype(np.float32)
_G1D = (_G1D / _G1D.sum()).astype(np.float32)


# ---- banded lane-axis (horizontal) convolution matrices ----------------------
def _reflect_idx(i, n):
    """PyTorch 'reflect' (no edge repeat) index for i in [-3, n+2], n >= 4."""
    if i < 0:
        return -i
    if i >= n:
        return 2 * n - 2 - i
    return i


def _build_lane_matrices(W, Wp, grads_mode):
    """(Wp, Wp) banded matrices; out = in @ M performs the horizontal filter with the
    boundary padding folded into the band.  Rows/cols >= W are zero so the lane padding
    never contributes and stays zero."""
    deriv_scale = 0.125 if grads_mode == "sobel" else 0.5
    dh = np.zeros((Wp, Wp), np.float32)   # horizontal derivative [-1,0,1], replicate pad
    sh = np.zeros((Wp, Wp), np.float32)   # horizontal smooth [1,2,1]/8, replicate pad
    gh = np.zeros((Wp, Wp), np.float32)   # horizontal 7-tap gaussian, reflect pad
    for w in range(W):
        lo, hi = max(w - 1, 0), min(w + 1, W - 1)
        dh[hi, w] += deriv_scale
        dh[lo, w] -= deriv_scale
        sh[lo, w] += 0.125
        sh[w, w] += 0.25
        sh[hi, w] += 0.125
        for o in range(-3, 4):
            gh[_reflect_idx(w + o, W), w] += float(_G1D[o + 3])
    return dh, sh, gh


# ---- the kernel ---------------------------------------------------------------
def _gftt_kernel(sig_ref, dh_ref, sh_ref, gh_ref, x_ref, o_ref, pad_ref, *,
                 grads_mode, use_sigmas):
    """One grid step processes P image planes.

    sig_ref : SMEM (N_pad,) f32            -- sigmas[b]**4 per plane (scalar prefetch)
    dh/sh/gh: VMEM (Wp, Wp) f32            -- banded lane-conv matrices (resident)
    x_ref   : VMEM (P, H, Wp) f32          -- input planes (W padded with zeros)
    o_ref   : VMEM (P, H, Wp) f32          -- Shi-Tomasi response
    pad_ref : VMEM (3P, H+6, Wp) f32       -- row-padded scratch for vertical passes
    """
    P, H, Wp = x_ref.shape

    def lane_matmul(t, m_ref):
        # lane-axis (horizontal) convolution as a banded matmul on the MXU
        n, h, w = t.shape
        r = jnp.dot(t.reshape(n * h, w), m_ref[...],
                    preferred_element_type=jnp.float32,
                    precision=jax.lax.Precision.HIGHEST)
        return r.reshape(n, h, w)

    x = x_ref[...]

    # ---- stage 1: spatial gradients (replicate pad 1) --------------------------
    # vertical neighbors via a row-replicated scratch region (lane-dense stores only)
    pad_ref[0:P, 1:H + 1, :] = x
    pad_ref[0:P, 0:1, :] = x[:, 0:1, :]
    pad_ref[0:P, H + 1:H + 2, :] = x[:, H - 1:H, :]
    r0 = pad_ref[0:P, 0:H, :]
    r1 = x                                  # middle row == x itself (saves one read)
    r2 = pad_ref[0:P, 2:H + 2, :]

    if grads_mode == "sobel":
        vs = (r0 + r2) + 2.0 * r1           # vertical smooth [1, 2, 1]
        vd = r2 - r0                        # vertical derivative [-1, 0, 1]
        dx = lane_matmul(vs, dh_ref)        # horizontal [-1,0,1]/8, replicate folded
        dy = lane_matmul(vd, sh_ref)        # horizontal [1,2,1]/8,  replicate folded
    else:  # 'diff'
        dx = lane_matmul(r1, dh_ref)        # horizontal [-1,0,1]/2, replicate folded
        dy = (r2 - r0) * 0.5                # vertical   [-1,0,1]/2

    a_xx = dx * dx
    a_yy = dy * dy
    a_xy = dx * dy

    # ---- stage 2: 7x7 gaussian (reflect pad 3), 3 moment maps stacked ----------
    # vertical pass via reflect-row scratch sections; horizontal pass on the MXU.
    for k, t in enumerate((a_xx, a_yy, a_xy)):
        s = k * P
        pad_ref[s:s + P, 3:H + 3, :] = t
        pad_ref[s:s + P, 0:1, :] = t[:, 3:4, :]
        pad_ref[s:s + P, 1:2, :] = t[:, 2:3, :]
        pad_ref[s:s + P, 2:3, :] = t[:, 1:2, :]
        pad_ref[s:s + P, H + 3:H + 4, :] = t[:, H - 2:H - 1, :]
        pad_ref[s:s + P, H + 4:H + 5, :] = t[:, H - 3:H - 2, :]
        pad_ref[s:s + P, H + 5:H + 6, :] = t[:, H - 4:H - 3, :]

    g0, g1, g2, g3 = (float(_G1D[0]), float(_G1D[1]),
                      float(_G1D[2]), float(_G1D[3]))
    p0 = pad_ref[:, 0:H, :]
    p1 = pad_ref[:, 1:H + 1, :]
    p2 = pad_ref[:, 2:H + 2, :]
    p3 = pad_ref[:, 3:H + 3, :]
    p4 = pad_ref[:, 4:H + 4, :]
    p5 = pad_ref[:, 5:H + 5, :]
    p6 = pad_ref[:, 6:H + 6, :]
    v = g3 * p3 + g2 * (p2 + p4) + g1 * (p1 + p5) + g0 * (p0 + p6)   # (3P, H, Wp)

    blur = lane_matmul(v, gh_ref)           # gaussian lane pass, reflect folded
    dx2 = blur[0:P]
    dy2 = blur[P:2 * P]
    dxy = blur[2 * P:3 * P]

    # ---- stage 3: minimum eigenvalue of the structure tensor -------------------
    det_m = dx2 * dy2 - dxy * dxy
    tr_m = dx2 + dy2
    disc = jnp.sqrt(jnp.abs(tr_m * tr_m - 4.0 * det_m))
    scores = 0.5 * (tr_m - disc)            # sqrt >= 0  =>  this IS min(e1, e2)

    if use_sigmas:
        base = pl.program_id(0) * P
        for p in range(P):                  # per-plane sigma^4 from SMEM scalars
            o_ref[p] = scores[p] * sig_ref[base + p]
    else:
        o_ref[...] = scores


# ---- plane-block / VMEM budgeting ---------------------------------------------
def _vmem_capacity_bytes() -> int:
    try:
        info = pltpu.get_tpu_info()
        cap = getattr(info, "vmem_capacity_bytes", None)
        if cap:
            return int(cap)
    except Exception:
        pass
    return 64 * 1024 * 1024  # conservative: v7x has 64 MiB VMEM per TensorCore


def _choose_block_planes(n_planes, H, Wp, budget_bytes):
    """Largest plane-block P whose estimated in-kernel live set fits the budget."""
    # double-buffered in/out blocks + (3P, H+6, Wp) scratch + ~14 live f32 temporaries
    per_plane = 4 * Wp * (22 * H + 40)
    fixed = 4 * 6 * Wp * Wp            # three (Wp,Wp) band matrices, double-buffered
    cap = max(1, (budget_bytes - fixed) // per_plane)
    p = int(min(cap, n_planes, 32))    # 32 bounds the unrolled per-plane epilogue
    if n_planes >= 2:
        p = min(p, max(1, n_planes // 2))   # grid >= 2 so both v7x TCs get work
    return max(int(p), 1)


# ---- wrapper -------------------------------------------------------------------
def corner_gftt(x: jax.Array, sigmas: jax.Array | None = None,
                grads_mode: str = "sobel") -> jax.Array:
    """Shi-Tomasi corner response. x: (B, C, H, W); sigmas: optional (B,)."""
    if grads_mode not in ("sobel", "diff"):
        raise ValueError(f"grads_mode must be 'sobel' or 'diff', got {grads_mode!r}")
    if x.ndim != 4:
        raise ValueError(f"expected BxCxHxW input, got shape {x.shape}")
    B, C, H, W = x.shape
    if H < 4 or W < 4:
        raise ValueError("H and W must be >= 4 for the 7x7 reflect-padded blur")

    N = B * C
    Wp = max(128, ((W + 127) // 128) * 128)          # lane-dense last dim

    cap = _vmem_capacity_bytes()
    P = _choose_block_planes(N, H, Wp, int(cap * 0.65))
    n_blocks = (N + P - 1) // P                      # cdiv: B*C need not divide P
    N_pad = n_blocks * P

    xf = x.astype(jnp.float32).reshape(N, H, W)
    if (N_pad, Wp) != (N, W):
        x_in = jnp.pad(xf, ((0, N_pad - N), (0, 0), (0, Wp - W)))
    else:
        x_in = xf

    if sigmas is None:
        sig4 = jnp.ones((N_pad,), jnp.float32)       # unused (use_sigmas=False)
    else:
        sig4 = jnp.repeat(sigmas.astype(jnp.float32) ** 4, C)
        if N_pad != N:
            sig4 = jnp.pad(sig4, (0, N_pad - N), constant_values=1.0)

    dh, sh, gh = _build_lane_matrices(W, Wp, grads_mode)

    kern = partial(_gftt_kernel, grads_mode=grads_mode,
                   use_sigmas=sigmas is not None)

    out = pl.pallas_call(
        kern,
        out_shape=jax.ShapeDtypeStruct((N_pad, H, Wp), jnp.float32),
        grid_spec=pltpu.PrefetchScalarGridSpec(
            num_scalar_prefetch=1,
            grid=(n_blocks,),
            in_specs=[
                pl.BlockSpec((Wp, Wp), lambda i, sig: (0, 0)),     # dh (resident)
                pl.BlockSpec((Wp, Wp), lambda i, sig: (0, 0)),     # sh (resident)
                pl.BlockSpec((Wp, Wp), lambda i, sig: (0, 0)),     # gh (resident)
                pl.BlockSpec((P, H, Wp), lambda i, sig: (i, 0, 0)),
            ],
            out_specs=pl.BlockSpec((P, H, Wp), lambda i, sig: (i, 0, 0)),
            scratch_shapes=[pltpu.VMEM((3 * P, H + 6, Wp), jnp.float32)],
        ),
        compiler_params=pltpu.CompilerParams(
            dimension_semantics=("parallel",),       # planes independent
            vmem_limit_bytes=min(int(cap * 0.85), 100 * 1024 * 1024),
        ),
    )(sig4, jnp.asarray(dh), jnp.asarray(sh), jnp.asarray(gh), x_in)

    out = out[:N, :, :W].reshape(B, C, H, W)
    return out.astype(x.dtype)


# ----------------------------- pure-JAX reference -------------------------------
def _reference(x, sigmas=None):
    B, C, H, W = x.shape
    xf = x.astype(jnp.float32)
    xp = jnp.pad(xf, ((0, 0), (0, 0), (1, 1), (1, 1)), mode="edge")
    dx = jnp.zeros_like(xf)
    dy = jnp.zeros_like(xf)
    for i in range(3):
        for j in range(3):
            p = xp[:, :, i:i + H, j:j + W]
            if _KX[i, j] != 0.0:
                dx = dx + float(_KX[i, j]) * p
            if _KY[i, j] != 0.0:
                dy = dy + float(_KY[i, j]) * p
    a_xx, a_yy, a_xy = dx * dx, dy * dy, dx * dy

    g2d = np.outer(_G1D, _G1D)

    def blur(t):
        tp = jnp.pad(t, ((0, 0), (0, 0), (3, 3), (3, 3)), mode="reflect")
        acc = jnp.zeros_like(t)
        for i in range(7):
            for j in range(7):
                acc = acc + float(g2d[i, j]) * tp[:, :, i:i + H, j:j + W]
        return acc

    dx2, dy2, dxy = blur(a_xx), blur(a_yy), blur(a_xy)
    det_m = dx2 * dy2 - dxy * dxy
    tr_m = dx2 + dy2
    disc = jnp.sqrt(jnp.abs(tr_m * tr_m - 4.0 * det_m))
    scores = 0.5 * (tr_m - disc)
    if sigmas is not None:
        scores = scores * (sigmas.astype(jnp.float32) ** 4).reshape(-1, 1, 1, 1)
    return scores


if __name__ == "__main__":
    key = jax.random.PRNGKey(0)
    kx, ks, k3 = jax.random.split(key, 3)

    # case 1: sigmas provided, P>1, multi-step grid
    B, C, H, W = 2, 4, 16, 16
    x = jax.random.normal(kx, (B, C, H, W), dtype=jnp.float32)
    sigmas = jax.random.uniform(ks, (B,), dtype=jnp.float32, minval=0.5, maxval=2.0)
    out = jax.block_until_ready(corner_gftt(x, sigmas))
    ref = jax.block_until_ready(_reference(x, sigmas))
    np.testing.assert_allclose(np.asarray(out), np.asarray(ref), rtol=2e-4, atol=2e-4)

    # case 2: sigmas=None path
    out2 = jax.block_until_ready(corner_gftt(x))
    np.testing.assert_allclose(np.asarray(out2), np.asarray(_reference(x)),
                               rtol=2e-4, atol=2e-4)

    # case 3: ragged width (W not multiple of 128), prime B*C -> plane padding path
    x3 = jax.random.normal(k3, (1, 5, 8, 20), dtype=jnp.float32)
    out3 = jax.block_until_ready(corner_gftt(x3))
    np.testing.assert_allclose(np.asarray(out3), np.asarray(_reference(x3)),
                               rtol=2e-4, atol=2e-4)

    print("KERNEL_OK")
</pallas_src>

<mosaic_0001>
module attributes {stable_mosaic.version = 11 : i64} {
  func.func @_gftt_kernel(%arg0: i32, %arg1: memref<8xf32, #tpu.memory_space<smem>>, %arg2: memref<128x128xf32, #tpu.memory_space<vmem>>, %arg3: memref<128x128xf32, #tpu.memory_space<vmem>>, %arg4: memref<128x128xf32, #tpu.memory_space<vmem>>, %arg5: memref<4x16x128xf32, #tpu.memory_space<vmem>>, %arg6: memref<4x16x128xf32, #tpu.memory_space<vmem>>, %arg7: memref<12x22x128xf32, #tpu.memory_space<vmem>>) attributes {dimension_semantics = [#tpu.dimension_semantics<parallel>], iteration_bounds = array<i64: 2>, scalar_prefetch = 1 : i64, scratch_operands = 1 : i64, tpu.core_type = #tpu.core_type<tc>, window_params = [{pipeline_mode = #tpu.pipeline_mode<synchronous>, transform_indices = @transform_0, window_bounds = array<i64: 128, 128>}, {pipeline_mode = #tpu.pipeline_mode<synchronous>, transform_indices = @transform_1, window_bounds = array<i64: 128, 128>}, {pipeline_mode = #tpu.pipeline_mode<synchronous>, transform_indices = @transform_2, window_bounds = array<i64: 128, 128>}, {transform_indices = @transform_3, window_bounds = array<i64: 4, 16, 128>}, {transform_indices = @transform_4, window_bounds = array<i64: 4, 16, 128>}]} {
    %c0 = arith.constant 0 : index
    %c0_0 = arith.constant 0 : index
    %c0_1 = arith.constant 0 : index
    %0 = vector.load %arg5[%c0, %c0_0, %c0_1] : memref<4x16x128xf32, #tpu.memory_space<vmem>>, vector<4x16x128xf32>
    %c0_2 = arith.constant 0 : index
    %c1 = arith.constant 1 : index
    %c0_3 = arith.constant 0 : index
    %1 = vector.load %arg7[%c0_2, %c1, %c0_3] : memref<12x22x128xf32, #tpu.memory_space<vmem>>, vector<4x16x128xf32>
    tpu.vector_store %arg7[%c0_2, %c1, %c0_3], %0 {strides = array<i32>} : memref<12x22x128xf32, #tpu.memory_space<vmem>>, vector<4x16x128xf32>,
    %2 = vector.extract_strided_slice %0 {offsets = [0, 0, 0], sizes = [4, 1, 128], strides = [1, 1, 1]} : vector<4x16x128xf32> to vector<4x1x128xf32>
    %c0_4 = arith.constant 0 : index
    %c0_5 = arith.constant 0 : index
    %c0_6 = arith.constant 0 : index
    %3 = vector.load %arg7[%c0_4, %c0_5, %c0_6] : memref<12x22x128xf32, #tpu.memory_space<vmem>>, vector<4x1x128xf32>
    tpu.vector_store %arg7[%c0_4, %c0_5, %c0_6], %2 {strides = array<i32>} : memref<12x22x128xf32, #tpu.memory_space<vmem>>, vector<4x1x128xf32>,
    %4 = vector.extract_strided_slice %0 {offsets = [0, 15, 0], sizes = [4, 1, 128], strides = [1, 1, 1]} : vector<4x16x128xf32> to vector<4x1x128xf32>
    %c0_7 = arith.constant 0 : index
    %c17 = arith.constant 17 : index
    %c0_8 = arith.constant 0 : index
    %5 = vector.load %arg7[%c0_7, %c17, %c0_8] : memref<12x22x128xf32, #tpu.memory_space<vmem>>, vector<4x1x128xf32>
    tpu.vector_store %arg7[%c0_7, %c17, %c0_8], %4 {strides = array<i32>} : memref<12x22x128xf32, #tpu.memory_space<vmem>>, vector<4x1x128xf32>,
    %c0_9 = arith.constant 0 : index
    %c0_10 = arith.constant 0 : index
    %c0_11 = arith.constant 0 : index
    %6 = vector.load %arg7[%c0_9, %c0_10, %c0_11] : memref<12x22x128xf32, #tpu.memory_space<vmem>>, vector<4x16x128xf32>
    %c0_12 = arith.constant 0 : index
    %c2 = arith.constant 2 : index
    %c0_13 = arith.constant 0 : index
    %7 = vector.load %arg7[%c0_12, %c2, %c0_13] : memref<12x22x128xf32, #tpu.memory_space<vmem>>, vector<4x16x128xf32>
    %8 = arith.addf %6, %7 : vector<4x16x128xf32>
    %cst = arith.constant 2.000000e+00 : f32
    %9 = vector.broadcast %cst : f32 to vector<4x16x128xf32>
    %10 = arith.mulf %9, %0 : vector<4x16x128xf32>
    %11 = arith.addf %8, %10 : vector<4x16x128xf32>
    %12 = arith.subf %7, %6 : vector<4x16x128xf32>
    %13 = vector.shape_cast %11 : vector<4x16x128xf32> to vector<64x128xf32>
    %c0_14 = arith.constant 0 : index
    %c0_15 = arith.constant 0 : index
    %14 = vector.load %arg2[%c0_14, %c0_15] : memref<128x128xf32, #tpu.memory_space<vmem>>, vector<128x128xf32>
    %cst_16 = arith.constant dense<0.000000e+00> : vector<64x128xf32>
    %15 = tpu.matmul %13, %14, %cst_16 {dimension_numbers = #tpu.dot_dimension_numbers<[1], [0], [0], [1], [0, 0, 1, 1], [], []>, precision = #tpu.contract_precision<fp32>} : vector<64x128xf32>, vector<128x128xf32>, vector<64x128xf32> -> vector<64x128xf32>
    %16 = vector.shape_cast %15 : vector<64x128xf32> to vector<4x16x128xf32>
    %17 = vector.shape_cast %12 : vector<4x16x128xf32> to vector<64x128xf32>
    %c0_17 = arith.constant 0 : index
    %c0_18 = arith.constant 0 : index
    %18 = vector.load %arg3[%c0_17, %c0_18] : memref<128x128xf32, #tpu.memory_space<vmem>>, vector<128x128xf32>
    %cst_19 = arith.constant dense<0.000000e+00> : vector<64x128xf32>
    %19 = tpu.matmul %17, %18, %cst_19 {dimension_numbers = #tpu.dot_dimension_numbers<[1], [0], [0], [1], [0, 0, 1, 1], [], []>, precision = #tpu.contract_precision<fp32>} : vector<64x128xf32>, vector<128x128xf32>, vector<64x128xf32> -> vector<64x128xf32>
    %20 = vector.shape_cast %19 : vector<64x128xf32> to vector<4x16x128xf32>
    %21 = arith.mulf %16, %16 : vector<4x16x128xf32>
    %22 = arith.mulf %20, %20 : vector<4x16x128xf32>
    %23 = arith.mulf %16, %20 : vector<4x16x128xf32>
    %c0_20 = arith.constant 0 : index
    %c3 = arith.constant 3 : index
    %c0_21 = arith.constant 0 : index
    %24 = vector.load %arg7[%c0_20, %c3, %c0_21] : memref<12x22x128xf32, #tpu.memory_space<vmem>>, vector<4x16x128xf32>
    tpu.vector_store %arg7[%c0_20, %c3, %c0_21], %21 {strides = array<i32>} : memref<12x22x128xf32, #tpu.memory_space<vmem>>, vector<4x16x128xf32>,
    %25 = vector.extract_strided_slice %21 {offsets = [0, 3, 0], sizes = [4, 1, 128], strides = [1, 1, 1]} : vector<4x16x128xf32> to vector<4x1x128xf32>
    %c0_22 = arith.constant 0 : index
    %c0_23 = arith.constant 0 : index
    %c0_24 = arith.constant 0 : index
    %26 = vector.load %arg7[%c0_22, %c0_23, %c0_24] : memref<12x22x128xf32, #tpu.memory_space<vmem>>, vector<4x1x128xf32>
    tpu.vector_store %arg7[%c0_22, %c0_23, %c0_24], %25 {strides = array<i32>} : memref<12x22x128xf32, #tpu.memory_space<vmem>>, vector<4x1x128xf32>,
    %27 = vector.extract_strided_slice %21 {offsets = [0, 2, 0], sizes = [4, 1, 128], strides = [1, 1, 1]} : vector<4x16x128xf32> to vector<4x1x128xf32>
    %c0_25 = arith.constant 0 : index
    %c1_26 = arith.constant 1 : index
    %c0_27 = arith.constant 0 : index
    %28 = vector.load %arg7[%c0_25, %c1_26, %c0_27] : memref<12x22x128xf32, #tpu.memory_space<vmem>>, vector<4x1x128xf32>
    tpu.vector_store %arg7[%c0_25, %c1_26, %c0_27], %27 {strides = array<i32>} : memref<12x22x128xf32, #tpu.memory_space<vmem>>, vector<4x1x128xf32>,
    %29 = vector.extract_strided_slice %21 {offsets = [0, 1, 0], sizes = [4, 1, 128], strides = [1, 1, 1]} : vector<4x16x128xf32> to vector<4x1x128xf32>
    %c0_28 = arith.constant 0 : index
    %c2_29 = arith.constant 2 : index
    %c0_30 = arith.constant 0 : index
    %30 = vector.load %arg7[%c0_28, %c2_29, %c0_30] : memref<12x22x128xf32, #tpu.memory_space<vmem>>, vector<4x1x128xf32>
    tpu.vector_store %arg7[%c0_28, %c2_29, %c0_30], %29 {strides = array<i32>} : memref<12x22x128xf32, #tpu.memory_space<vmem>>, vector<4x1x128xf32>,
    %31 = vector.extract_strided_slice %21 {offsets = [0, 14, 0], sizes = [4, 1, 128], strides = [1, 1, 1]} : vector<4x16x128xf32> to vector<4x1x128xf32>
    %c0_31 = arith.constant 0 : index
    %c19 = arith.constant 19 : index
    %c0_32 = arith.constant 0 : index
    %32 = vector.load %arg7[%c0_31, %c19, %c0_32] : memref<12x22x128xf32, #tpu.memory_space<vmem>>, vector<4x1x128xf32>
    tpu.vector_store %arg7[%c0_31, %c19, %c0_32], %31 {strides = array<i32>} : memref<12x22x128xf32, #tpu.memory_space<vmem>>, vector<4x1x128xf32>,
    %33 = vector.extract_strided_slice %21 {offsets = [0, 13, 0], sizes = [4, 1, 128], strides = [1, 1, 1]} : vector<4x16x128xf32> to vector<4x1x128xf32>
    %c0_33 = arith.constant 0 : index
    %c20 = arith.constant 20 : index
    %c0_34 = arith.constant 0 : index
    %34 = vector.load %arg7[%c0_33, %c20, %c0_34] : memref<12x22x128xf32, #tpu.memory_space<vmem>>, vector<4x1x128xf32>
    tpu.vector_store %arg7[%c0_33, %c20, %c0_34], %33 {strides = array<i32>} : memref<12x22x128xf32, #tpu.memory_space<vmem>>, vector<4x1x128xf32>,
    %35 = vector.extract_strided_slice %21 {offsets = [0, 12, 0], sizes = [4, 1, 128], strides = [1, 1, 1]} : vector<4x16x128xf32> to vector<4x1x128xf32>
    %c0_35 = arith.constant 0 : index
    %c21 = arith.constant 21 : index
    %c0_36 = arith.constant 0 : index
    %36 = vector.load %arg7[%c0_35, %c21, %c0_36] : memref<12x22x128xf32, #tpu.memory_space<vmem>>, vector<4x1x128xf32>
    tpu.vector_store %arg7[%c0_35, %c21, %c0_36], %35 {strides = array<i32>} : memref<12x22x128xf32, #tpu.memory_space<vmem>>, vector<4x1x128xf32>,
    %c4 = arith.constant 4 : index
    %c3_37 = arith.constant 3 : index
    %c0_38 = arith.constant 0 : index
    %37 = vector.load %arg7[%c4, %c3_37, %c0_38] : memref<12x22x128xf32, #tpu.memory_space<vmem>>, vector<4x16x128xf32>
    tpu.vector_store %arg7[%c4, %c3_37, %c0_38], %22 {strides = array<i32>} : memref<12x22x128xf32, #tpu.memory_space<vmem>>, vector<4x16x128xf32>,
    %38 = vector.extract_strided_slice %22 {offsets = [0, 3, 0], sizes = [4, 1, 128], strides = [1, 1, 1]} : vector<4x16x128xf32> to vector<4x1x128xf32>
    %c4_39 = arith.constant 4 : index
    %c0_40 = arith.constant 0 : index
    %c0_41 = arith.constant 0 : index
    %39 = vector.load %arg7[%c4_39, %c0_40, %c0_41] : memref<12x22x128xf32, #tpu.memory_space<vmem>>, vector<4x1x128xf32>
    tpu.vector_store %arg7[%c4_39, %c0_40, %c0_41], %38 {strides = array<i32>} : memref<12x22x128xf32, #tpu.memory_space<vmem>>, vector<4x1x128xf32>,
    %40 = vector.extract_strided_slice %22 {offsets = [0, 2, 0], sizes = [4, 1, 128], strides = [1, 1, 1]} : vector<4x16x128xf32> to vector<4x1x128xf32>
    %c4_42 = arith.constant 4 : index
    %c1_43 = arith.constant 1 : index
    %c0_44 = arith.constant 0 : index
    %41 = vector.load %arg7[%c4_42, %c1_43, %c0_44] : memref<12x22x128xf32, #tpu.memory_space<vmem>>, vector<4x1x128xf32>
    tpu.vector_store %arg7[%c4_42, %c1_43, %c0_44], %40 {strides = array<i32>} : memref<12x22x128xf32, #tpu.memory_space<vmem>>, vector<4x1x128xf32>,
    %42 = vector.extract_strided_slice %22 {offsets = [0, 1, 0], sizes = [4, 1, 128], strides = [1, 1, 1]} : vector<4x16x128xf32> to vector<4x1x128xf32>
    %c4_45 = arith.constant 4 : index
    %c2_46 = arith.constant 2 : index
    %c0_47 = arith.constant 0 : index
    %43 = vector.load %arg7[%c4_45, %c2_46, %c0_47] : memref<12x22x128xf32, #tpu.memory_space<vmem>>, vector<4x1x128xf32>
    tpu.vector_store %arg7[%c4_45, %c2_46, %c0_47], %42 {strides = array<i32>} : memref<12x22x128xf32, #tpu.memory_space<vmem>>, vector<4x1x128xf32>,
    %44 = vector.extract_strided_slice %22 {offsets = [0, 14, 0], sizes = [4, 1, 128], strides = [1, 1, 1]} : vector<4x16x128xf32> to vector<4x1x128xf32>
    %c4_48 = arith.constant 4 : index
    %c19_49 = arith.constant 19 : index
    %c0_50 = arith.constant 0 : index
    %45 = vector.load %arg7[%c4_48, %c19_49, %c0_50] : memref<12x22x128xf32, #tpu.memory_space<vmem>>, vector<4x1x128xf32>
    tpu.vector_store %arg7[%c4_48, %c19_49, %c0_50], %44 {strides = array<i32>} : memref<12x22x128xf32, #tpu.memory_space<vmem>>, vector<4x1x128xf32>,
    %46 = vector.extract_strided_slice %22 {offsets = [0, 13, 0], sizes = [4, 1, 128], strides = [1, 1, 1]} : vector<4x16x128xf32> to vector<4x1x128xf32>
    %c4_51 = arith.constant 4 : index
    %c20_52 = arith.constant 20 : index
    %c0_53 = arith.constant 0 : index
    %47 = vector.load %arg7[%c4_51, %c20_52, %c0_53] : memref<12x22x128xf32, #tpu.memory_space<vmem>>, vector<4x1x128xf32>
    tpu.vector_store %arg7[%c4_51, %c20_52, %c0_53], %46 {strides = array<i32>} : memref<12x22x128xf32, #tpu.memory_space<vmem>>, vector<4x1x128xf32>,
    %48 = vector.extract_strided_slice %22 {offsets = [0, 12, 0], sizes = [4, 1, 128], strides = [1, 1, 1]} : vector<4x16x128xf32> to vector<4x1x128xf32>
    %c4_54 = arith.constant 4 : index
    %c21_55 = arith.constant 21 : index
    %c0_56 = arith.constant 0 : index
    %49 = vector.load %arg7[%c4_54, %c21_55, %c0_56] : memref<12x22x128xf32, #tpu.memory_space<vmem>>, vector<4x1x128xf32>
    tpu.vector_store %arg7[%c4_54, %c21_55, %c0_56], %48 {strides = array<i32>} : memref<12x22x128xf32, #tpu.memory_space<vmem>>, vector<4x1x128xf32>,
    %c8 = arith.constant 8 : index
    %c3_57 = arith.constant 3 : index
    %c0_58 = arith.constant 0 : index
    %50 = vector.load %arg7[%c8, %c3_57, %c0_58] : memref<12x22x128xf32, #tpu.memory_space<vmem>>, vector<4x16x128xf32>
    tpu.vector_store %arg7[%c8, %c3_57, %c0_58], %23 {strides = array<i32>} : memref<12x22x128xf32, #tpu.memory_space<vmem>>, vector<4x16x128xf32>,
    %51 = vector.extract_strided_slice %23 {offsets = [0, 3, 0], sizes = [4, 1, 128], strides = [1, 1, 1]} : vector<4x16x128xf32> to vector<4x1x128xf32>
    %c8_59 = arith.constant 8 : index
    %c0_60 = arith.constant 0 : index
    %c0_61 = arith.constant 0 : index
    %52 = vector.load %arg7[%c8_59, %c0_60, %c0_61] : memref<12x22x128xf32, #tpu.memory_space<vmem>>, vector<4x1x128xf32>
    tpu.vector_store %arg7[%c8_59, %c0_60, %c0_61], %51 {strides = array<i32>} : memref<12x22x128xf32, #tpu.memory_space<vmem>>, vector<4x1x128xf32>,
    %53 = vector.extract_strided_slice %23 {offsets = [0, 2, 0], sizes = [4, 1, 128], strides = [1, 1, 1]} : vector<4x16x128xf32> to vector<4x1x128xf32>
    %c8_62 = arith.constant 8 : index
    %c1_63 = arith.constant 1 : index
    %c0_64 = arith.constant 0 : index
    %54 = vector.load %arg7[%c8_62, %c1_63, %c0_64] : memref<12x22x128xf32, #tpu.memory_space<vmem>>, vector<4x1x128xf32>
    tpu.vector_store %arg7[%c8_62, %c1_63, %c0_64], %53 {strides = array<i32>} : memref<12x22x128xf32, #tpu.memory_space<vmem>>, vector<4x1x128xf32>,
    %55 = vector.extract_strided_slice %23 {offsets = [0, 1, 0], sizes = [4, 1, 128], strides = [1, 1, 1]} : vector<4x16x128xf32> to vector<4x1x128xf32>
    %c8_65 = arith.constant 8 : index
    %c2_66 = arith.constant 2 : index
    %c0_67 = arith.constant 0 : index
    %56 = vector.load %arg7[%c8_65, %c2_66, %c0_67] : memref<12x22x128xf32, #tpu.memory_space<vmem>>, vector<4x1x128xf32>
    tpu.vector_store %arg7[%c8_65, %c2_66, %c0_67], %55 {strides = array<i32>} : memref<12x22x128xf32, #tpu.memory_space<vmem>>, vector<4x1x128xf32>,
    %57 = vector.extract_strided_slice %23 {offsets = [0, 14, 0], sizes = [4, 1, 128], strides = [1, 1, 1]} : vector<4x16x128xf32> to vector<4x1x128xf32>
    %c8_68 = arith.constant 8 : index
    %c19_69 = arith.constant 19 : index
    %c0_70 = arith.constant 0 : index
    %58 = vector.load %arg7[%c8_68, %c19_69, %c0_70] : memref<12x22x128xf32, #tpu.memory_space<vmem>>, vector<4x1x128xf32>
    tpu.vector_store %arg7[%c8_68, %c19_69, %c0_70], %57 {strides = array<i32>} : memref<12x22x128xf32, #tpu.memory_space<vmem>>, vector<4x1x128xf32>,
    %59 = vector.extract_strided_slice %23 {offsets = [0, 13, 0], sizes = [4, 1, 128], strides = [1, 1, 1]} : vector<4x16x128xf32> to vector<4x1x128xf32>
    %c8_71 = arith.constant 8 : index
    %c20_72 = arith.constant 20 : index
    %c0_73 = arith.constant 0 : index
    %60 = vector.load %arg7[%c8_71, %c20_72, %c0_73] : memref<12x22x128xf32, #tpu.memory_space<vmem>>, vector<4x1x128xf32>
    tpu.vector_store %arg7[%c8_71, %c20_72, %c0_73], %59 {strides = array<i32>} : memref<12x22x128xf32, #tpu.memory_space<vmem>>, vector<4x1x128xf32>,
    %61 = vector.extract_strided_slice %23 {offsets = [0, 12, 0], sizes = [4, 1, 128], strides = [1, 1, 1]} : vector<4x16x128xf32> to vector<4x1x128xf32>
    %c8_74 = arith.constant 8 : index
    %c21_75 = arith.constant 21 : index
    %c0_76 = arith.constant 0 : index
    %62 = vector.load %arg7[%c8_74, %c21_75, %c0_76] : memref<12x22x128xf32, #tpu.memory_space<vmem>>, vector<4x1x128xf32>
    tpu.vector_store %arg7[%c8_74, %c21_75, %c0_76], %61 {strides = array<i32>} : memref<12x22x128xf32, #tpu.memory_space<vmem>>, vector<4x1x128xf32>,
    %c0_77 = arith.constant 0 : index
    %c0_78 = arith.constant 0 : index
    %c0_79 = arith.constant 0 : index
    %63 = vector.load %arg7[%c0_77, %c0_78, %c0_79] : memref<12x22x128xf32, #tpu.memory_space<vmem>>, vector<12x16x128xf32>
    %c0_80 = arith.constant 0 : index
    %c1_81 = arith.constant 1 : index
    %c0_82 = arith.constant 0 : index
    %64 = vector.load %arg7[%c0_80, %c1_81, %c0_82] : memref<12x22x128xf32, #tpu.memory_space<vmem>>, vector<12x16x128xf32>
    %c0_83 = arith.constant 0 : index
    %c2_84 = arith.constant 2 : index
    %c0_85 = arith.constant 0 : index
    %65 = vector.load %arg7[%c0_83, %c2_84, %c0_85] : memref<12x22x128xf32, #tpu.memory_space<vmem>>, vector<12x16x128xf32>
    %c0_86 = arith.constant 0 : index
    %c3_87 = arith.constant 3 : index
    %c0_88 = arith.constant 0 : index
    %66 = vector.load %arg7[%c0_86, %c3_87, %c0_88] : memref<12x22x128xf32, #tpu.memory_space<vmem>>, vector<12x16x128xf32>
    %c0_89 = arith.constant 0 : index
    %c4_90 = arith.constant 4 : index
    %c0_91 = arith.constant 0 : index
    %67 = vector.load %arg7[%c0_89, %c4_90, %c0_91] : memref<12x22x128xf32, #tpu.memory_space<vmem>>, vector<12x16x128xf32>
    %c0_92 = arith.constant 0 : index
    %c5 = arith.constant 5 : index
    %c0_93 = arith.constant 0 : index
    %68 = vector.load %arg7[%c0_92, %c5, %c0_93] : memref<12x22x128xf32, #tpu.memory_space<vmem>>, vector<12x16x128xf32>
    %c0_94 = arith.constant 0 : index
    %c6 = arith.constant 6 : index
    %c0_95 = arith.constant 0 : index
    %69 = vector.load %arg7[%c0_94, %c6, %c0_95] : memref<12x22x128xf32, #tpu.memory_space<vmem>>, vector<12x16x128xf32>
    %cst_96 = arith.constant 0.399050266 : f32
    %70 = vector.broadcast %cst_96 : f32 to vector<12x16x128xf32>
    %71 = arith.mulf %70, %66 : vector<12x16x128xf32>
    %72 = arith.addf %65, %67 : vector<12x16x128xf32>
    %cst_97 = arith.constant 0.242036223 : f32
    %73 = vector.broadcast %cst_97 : f32 to vector<12x16x128xf32>
    %74 = arith.mulf %73, %72 : vector<12x16x128xf32>
    %75 = arith.addf %71, %74 : vector<12x16x128xf32>
    %76 = arith.addf %64, %68 : vector<12x16x128xf32>
    %cst_98 = arith.constant 0.0540055782 : f32
    %77 = vector.broadcast %cst_98 : f32 to vector<12x16x128xf32>
    %78 = arith.mulf %77, %76 : vector<12x16x128xf32>
    %79 = arith.addf %75, %78 : vector<12x16x128xf32>
    %80 = arith.addf %63, %69 : vector<12x16x128xf32>
    %cst_99 = arith.constant 0.00443304796 : f32
    %81 = vector.broadcast %cst_99 : f32 to vector<12x16x128xf32>
    %82 = arith.mulf %81, %80 : vector<12x16x128xf32>
    %83 = arith.addf %79, %82 : vector<12x16x128xf32>
    %84 = vector.shape_cast %83 : vector<12x16x128xf32> to vector<192x128xf32>
    %c0_100 = arith.constant 0 : index
    %c0_101 = arith.constant 0 : index
    %85 = vector.load %arg4[%c0_100, %c0_101] : memref<128x128xf32, #tpu.memory_space<vmem>>, vector<128x128xf32>
    %cst_102 = arith.constant dense<0.000000e+00> : vector<192x128xf32>
    %86 = tpu.matmul %84, %85, %cst_102 {dimension_numbers = #tpu.dot_dimension_numbers<[1], [0], [0], [1], [0, 0, 1, 1], [], []>, precision = #tpu.contract_precision<fp32>} : vector<192x128xf32>, vector<128x128xf32>, vector<192x128xf32> -> vector<192x128xf32>
    %87 = vector.shape_cast %86 : vector<192x128xf32> to vector<12x16x128xf32>
    %88 = vector.extract_strided_slice %87 {offsets = [0, 0, 0], sizes = [4, 16, 128], strides = [1, 1, 1]} : vector<12x16x128xf32> to vector<4x16x128xf32>
    %89 = vector.extract_strided_slice %87 {offsets = [4, 0, 0], sizes = [4, 16, 128], strides = [1, 1, 1]} : vector<12x16x128xf32> to vector<4x16x128xf32>
    %90 = vector.extract_strided_slice %87 {offsets = [8, 0, 0], sizes = [4, 16, 128], strides = [1, 1, 1]} : vector<12x16x128xf32> to vector<4x16x128xf32>
    %91 = arith.mulf %88, %89 : vector<4x16x128xf32>
    %92 = arith.mulf %90, %90 : vector<4x16x128xf32>
    %93 = arith.subf %91, %92 : vector<4x16x128xf32>
    %94 = arith.addf %88, %89 : vector<4x16x128xf32>
    %95 = arith.mulf %94, %94 : vector<4x16x128xf32>
    %cst_103 = arith.constant 4.000000e+00 : f32
    %96 = vector.broadcast %cst_103 : f32 to vector<4x16x128xf32>
    %97 = arith.mulf %96, %93 : vector<4x16x128xf32>
    %98 = arith.subf %95, %97 : vector<4x16x128xf32>
    %99 = math.absf %98 : vector<4x16x128xf32>
    %100 = math.sqrt %99 : vector<4x16x128xf32>
    %101 = arith.subf %94, %100 : vector<4x16x128xf32>
    %cst_104 = arith.constant 5.000000e-01 : f32
    %102 = vector.broadcast %cst_104 : f32 to vector<4x16x128xf32>
    %103 = arith.mulf %102, %101 : vector<4x16x128xf32>
    %c4_i32 = arith.constant 4 : i32
    %104 = arith.muli %arg0, %c4_i32 : i32
    %105 = vector.extract_strided_slice %103 {offsets = [0, 0, 0], sizes = [1, 16, 128], strides = [1, 1, 1]} : vector<4x16x128xf32> to vector<1x16x128xf32>
    %106 = vector.shape_cast %105 : vector<1x16x128xf32> to vector<16x128xf32>
    %c0_i32 = arith.constant 0 : i32
    %107 = arith.addi %104, %c0_i32 : i32
    %108 = arith.index_cast %107 : i32 to index
    %109 = memref.load %arg1[%108] : memref<8xf32, #tpu.memory_space<smem>>
    %110 = vector.broadcast %109 : f32 to vector<16x128xf32>
    %111 = arith.mulf %106, %110 : vector<16x128xf32>
    %c0_105 = arith.constant 0 : index
    %c0_106 = arith.constant 0 : index
    %c0_107 = arith.constant 0 : index
    %112 = vector.load %arg6[%c0_105, %c0_106, %c0_107] : memref<4x16x128xf32, #tpu.memory_space<vmem>>, vector<1x16x128xf32>
    %113 = vector.shape_cast %112 : vector<1x16x128xf32> to vector<16x128xf32>
    %114 = vector.shape_cast %111 : vector<16x128xf32> to vector<1x16x128xf32>
    tpu.vector_store %arg6[%c0_105, %c0_106, %c0_107], %114 {strides = array<i32>} : memref<4x16x128xf32, #tpu.memory_space<vmem>>, vector<1x16x128xf32>,
    %115 = vector.extract_strided_slice %103 {offsets = [1, 0, 0], sizes = [1, 16, 128], strides = [1, 1, 1]} : vector<4x16x128xf32> to vector<1x16x128xf32>
    %116 = vector.shape_cast %115 : vector<1x16x128xf32> to vector<16x128xf32>
    %c1_i32 = arith.constant 1 : i32
    %117 = arith.addi %104, %c1_i32 : i32
    %118 = arith.index_cast %117 : i32 to index
    %119 = memref.load %arg1[%118] : memref<8xf32, #tpu.memory_space<smem>>
    %120 = vector.broadcast %119 : f32 to vector<16x128xf32>
    %121 = arith.mulf %116, %120 : vector<16x128xf32>
    %c1_108 = arith.constant 1 : index
    %c0_109 = arith.constant 0 : index
    %c0_110 = arith.constant 0 : index
    %122 = vector.load %arg6[%c1_108, %c0_109, %c0_110] : memref<4x16x128xf32, #tpu.memory_space<vmem>>, vector<1x16x128xf32>
    %123 = vector.shape_cast %122 : vector<1x16x128xf32> to vector<16x128xf32>
    %124 = vector.shape_cast %121 : vector<16x128xf32> to vector<1x16x128xf32>
    tpu.vector_store %arg6[%c1_108, %c0_109, %c0_110], %124 {strides = array<i32>} : memref<4x16x128xf32, #tpu.memory_space<vmem>>, vector<1x16x128xf32>,
    %125 = vector.extract_strided_slice %103 {offsets = [2, 0, 0], sizes = [1, 16, 128], strides = [1, 1, 1]} : vector<4x16x128xf32> to vector<1x16x128xf32>
    %126 = vector.shape_cast %125 : vector<1x16x128xf32> to vector<16x128xf32>
    %c2_i32 = arith.constant 2 : i32
    %127 = arith.addi %104, %c2_i32 : i32
    %128 = arith.index_cast %127 : i32 to index
    %129 = memref.load %arg1[%128] : memref<8xf32, #tpu.memory_space<smem>>
    %130 = vector.broadcast %129 : f32 to vector<16x128xf32>
    %131 = arith.mulf %126, %130 : vector<16x128xf32>
    %c2_111 = arith.constant 2 : index
    %c0_112 = arith.constant 0 : index
    %c0_113 = arith.constant 0 : index
    %132 = vector.load %arg6[%c2_111, %c0_112, %c0_113] : memref<4x16x128xf32, #tpu.memory_space<vmem>>, vector<1x16x128xf32>
    %133 = vector.shape_cast %132 : vector<1x16x128xf32> to vector<16x128xf32>
    %134 = vector.shape_cast %131 : vector<16x128xf32> to vector<1x16x128xf32>
    tpu.vector_store %arg6[%c2_111, %c0_112, %c0_113], %134 {strides = array<i32>} : memref<4x16x128xf32, #tpu.memory_space<vmem>>, vector<1x16x128xf32>,
    %135 = vector.extract_strided_slice %103 {offsets = [3, 0, 0], sizes = [1, 16, 128], strides = [1, 1, 1]} : vector<4x16x128xf32> to vector<1x16x128xf32>
    %136 = vector.shape_cast %135 : vector<1x16x128xf32> to vector<16x128xf32>
    %c3_i32 = arith.constant 3 : i32
    %137 = arith.addi %104, %c3_i32 : i32
    %138 = arith.index_cast %137 : i32 to index
    %139 = memref.load %arg1[%138] : memref<8xf32, #tpu.memory_space<smem>>
    %140 = vector.broadcast %139 : f32 to vector<16x128xf32>
    %141 = arith.mulf %136, %140 : vector<16x128xf32>
    %c3_114 = arith.constant 3 : index
    %c0_115 = arith.constant 0 : index
    %c0_116 = arith.constant 0 : index
    %142 = vector.load %arg6[%c3_114, %c0_115, %c0_116] : memref<4x16x128xf32, #tpu.memory_space<vmem>>, vector<1x16x128xf32>
    %143 = vector.shape_cast %142 : vector<1x16x128xf32> to vector<16x128xf32>
    %144 = vector.shape_cast %141 : vector<16x128xf32> to vector<1x16x128xf32>
    tpu.vector_store %arg6[%c3_114, %c0_115, %c0_116], %144 {strides = array<i32>} : memref<4x16x128xf32, #tpu.memory_space<vmem>>, vector<1x16x128xf32>,
    return
  }
  func.func @transform_0(%arg0: i32, %arg1: memref<8xf32, #tpu.memory_space<smem>>) -> (i32, i32) {
    %c0_i32 = arith.constant 0 : i32
    %c0_i32_0 = arith.constant 0 : i32
    %c0_i32_1 = arith.constant 0 : i32
    return %c0_i32, %c0_i32_0 : i32, i32
  }
  func.func @transform_1(%arg0: i32, %arg1: memref<8xf32, #tpu.memory_space<smem>>) -> (i32, i32) {
    %c0_i32 = arith.constant 0 : i32
    %c0_i32_0 = arith.constant 0 : i32
    %c0_i32_1 = arith.constant 0 : i32
    return %c0_i32, %c0_i32_0 : i32, i32
  }
  func.func @transform_2(%arg0: i32, %arg1: memref<8xf32, #tpu.memory_space<smem>>) -> (i32, i32) {
    %c0_i32 = arith.constant 0 : i32
    %c0_i32_0 = arith.constant 0 : i32
    %c0_i32_1 = arith.constant 0 : i32
    return %c0_i32, %c0_i32_0 : i32, i32
  }
  func.func @transform_3(%arg0: i32, %arg1: memref<8xf32, #tpu.memory_space<smem>>) -> (i32, i32, i32) {
    %c0_i32 = arith.constant 0 : i32
    %c0_i32_0 = arith.constant 0 : i32
    %c0_i32_1 = arith.constant 0 : i32
    return %arg0, %c0_i32, %c0_i32_0 : i32, i32, i32
  }
  func.func @transform_4(%arg0: i32, %arg1: memref<8xf32, #tpu.memory_space<smem>>) -> (i32, i32, i32) {
    %c0_i32 = arith.constant 0 : i32
    %c0_i32_0 = arith.constant 0 : i32
    %c0_i32_1 = arith.constant 0 : i32
    return %arg0, %c0_i32, %c0_i32_0 : i32, i32, i32
  }
}

</mosaic_0001>

<llo_original>
// kernel: tpu_custom_call.1
$region0: #{tpu_custom_call.1}
  #allocation0 [shape = 'u32[]', space=smem, size = 0x4, offset = 0x4, fixed_abs, tag = 'smem constant byte address 0x4 - core index']
  #allocation1 [shape = 'u32[144,128]{1,0:T(1,128)}', space=vmem, size = 0x12000, scoped, tag = 'internal scratch']
  #allocation2 [shape = 'f32[12,22,128]{2,1,0:T(8,128)}', space=vmem, size = 0x24000, scoped, tag = 'scratch operand']
  #allocation3 [shape = 's32[1]{0}', space=sflag, size = 0x4, scoped, tag = 'scoped memory for tpu_custom_call.1']
  #allocation4 [shape = 'u8[512]{0}', space=smem, size = 0x200, scoped, tag = 'prefetched SMEM operand 0']
  %s0 = inlined_call_operand.hbm [shape: f32[8], index: 0, kind: input, shape index: {}]
  %s1 = inlined_call_operand.hbm [shape: f32[128,128], index: 1, kind: input, shape index: {}]
  %s2 = inlined_call_operand.hbm [shape: f32[128,128], index: 2, kind: input, shape index: {}]
  %s3 = inlined_call_operand.hbm [shape: f32[128,128], index: 3, kind: input, shape index: {}]
  %s4 = inlined_call_operand.hbm [shape: f32[8,16,128], index: 4, kind: input, shape index: {}]
  %s5 = inlined_call_operand.hbm [shape: f32[8,16,128], index: 5, kind: output, shape index: {}]
  %s6 = sld [smem:[#allocation0]]
  $region65: #{tpu_custom_call.1} parent=0
    _
  %s8 = ssub.s32 1, %s6
  %s9 = scalar_select 0, %s8, %s6
  %11 = dma.hbm_to_smem %s0, 16, [#allocation4], [#allocation3]
  %12 = dma.done [#allocation3], 16
  %13 = sfence
  $region1: #{tpu_custom_call.1} parent=0
    #allocation5 [shape = 'u8[65536]{0}', space=vmem, size = 0x10000, scoped, tag = 'input window, operand 1, single buffered']
    #allocation6 [shape = 's32[2]{0}', space=sflag, size = 0x8, scoped, tag = 'scoped memory for tpu_custom_call.1']
    #allocation7 [shape = 's32[2]{0}', space=sflag, size = 0x8, scoped, tag = 'scoped memory for tpu_custom_call.1']
    #allocation8 [shape = 'u8[65536]{0}', space=vmem, size = 0x10000, scoped, tag = 'input window, operand 2, single buffered']
    #allocation9 [shape = 's32[1]{0}', space=sflag, size = 0x4, scoped, tag = 'scoped memory for tpu_custom_call.1']
    #allocation10 [shape = 'u8[65536]{0}', space=vmem, size = 0x10000, scoped, tag = 'input window, operand 3, single buffered']
    #allocation11 [shape = 'u8[65536]{0}', space=vmem, size = 0x10000, scoped, tag = 'input window, operand 4']
    #allocation12 [shape = 's32[2]{0}', space=sflag, size = 0x8, scoped, tag = 'scoped memory for tpu_custom_call.1']
    #allocation13 [shape = 'u8[65536]{0}', space=vmem, size = 0x10000, scoped, tag = 'output window, operand 0']
    %14 = vsyncpa [#allocation6], 0
    %15 = vsyncpa [#allocation9], 0
    %16 = vsyncpa [#allocation12], 0
    %s17 = scalar_lea.sflag [#allocation12], 1
    %18 = vsyncpa %s17, 0
    %19 = vsyncpa [#allocation7], 0
    %s20 = scalar_lea.sflag [#allocation7], 1
    %21 = vsyncpa %s20, 0
    loop: start=0, step=1, limit=4
    $region2: #{tpu_custom_call.1} parent=1 // loop_pre_header
      _
    $region3: #{tpu_custom_call.1} parent=1 // loop_header
      %s23 = sphi 0, %s27
      %p24 = scmp.ge.s32.totalorder %s23, 4
      %s31 = sphi 0, %s31
      %s33 = sphi 0, %s31
      %s34 = sphi 0, %s33
      %s48 = sphi 0, %s34
      %s52 = sphi 0, %s52
      %s54 = sphi 0, %s52
      %s55 = sphi 0, %s54
      %s69 = sphi 0, %s55
      %s73 = sphi 0, %s73
      %s75 = sphi 0, %s73
      %s76 = sphi 0, %s75
      %s90 = sphi 0, %s76
      %s96 = sphi 0, %s98
      %s99 = sphi 0, %s96
      %s100 = sphi 0, %s99
      %s116 = sphi 0, %s100
      %s122 = sphi 0, %s124
      %s125 = sphi 0, %s122
      %s126 = sphi 0, %s125
      %s142 = sphi 0, %s126
    $region4: #{tpu_custom_call.1} parent=1 // loop_header_branch
      %26 = sbr.rel (%p24) target = $region8
    $region5: #{tpu_custom_call.1} parent=1 // loop_body
      %s28 = ssub.s32 %s23, 1
      %s29 = ssub.s32 %s23, 2
      %s30 = sadd.s32 %s23, 1
      %s32 = sadd.s32 %s31, 1
      %p35 = scmp.eq.s32.totalorder %s23, 1
      %p36 = scmp.ne.s32.totalorder %s31, %s33
      %p37 = scmp.eq.s32.totalorder %s23, 0
      %p38 = por %p36, %p37
      %p39 = scmp.ne.s32.totalorder %s31, %s33
      %p40 = scmp.eq.s32.totalorder %s28, 1
      %p41 = por %p39, %p40
      %p42 = scmp.ne.s32.totalorder %s33, %s34
      %p43 = scmp.eq.s32.totalorder %s28, 0
      %p44 = por %p42, %p43
      %p45 = scmp.ne.s32.totalorder %s33, %s34
      %p46 = scmp.eq.s32.totalorder %s29, 1
      %p47 = por %p45, %p46
      %p49 = scmp.ne.s32.totalorder %s34, %s48
      %p50 = scmp.eq.s32.totalorder %s29, 0
      %p51 = por %p49, %p50
      %s53 = sadd.s32 %s52, 1
      %p56 = scmp.eq.s32.totalorder %s23, 1
      %p57 = scmp.ne.s32.totalorder %s52, %s54
      %p58 = scmp.eq.s32.totalorder %s23, 0
      %p59 = por %p57, %p58
      %p60 = scmp.ne.s32.totalorder %s52, %s54
      %p61 = scmp.eq.s32.totalorder %s28, 1
      %p62 = por %p60, %p61
      %p63 = scmp.ne.s32.totalorder %s54, %s55
      %p64 = scmp.eq.s32.totalorder %s28, 0
      %p65 = por %p63, %p64
      %p66 = scmp.ne.s32.totalorder %s54, %s55
      %p67 = scmp.eq.s32.totalorder %s29, 1
      %p68 = por %p66, %p67
      %p70 = scmp.ne.s32.totalorder %s55, %s69
      %p71 = scmp.eq.s32.totalorder %s29, 0
      %p72 = por %p70, %p71
      %s74 = sadd.s32 %s73, 1
      %p77 = scmp.eq.s32.totalorder %s23, 1
      %p78 = scmp.ne.s32.totalorder %s73, %s75
      %p79 = scmp.eq.s32.totalorder %s23, 0
      %p80 = por %p78, %p79
      %p81 = scmp.ne.s32.totalorder %s73, %s75
      %p82 = scmp.eq.s32.totalorder %s28, 1
      %p83 = por %p81, %p82
      %p84 = scmp.ne.s32.totalorder %s75, %s76
      %p85 = scmp.eq.s32.totalorder %s28, 0
      %p86 = por %p84, %p85
      %p87 = scmp.ne.s32.totalorder %s75, %s76
      %p88 = scmp.eq.s32.totalorder %s29, 1
      %p89 = por %p87, %p88
      %p91 = scmp.ne.s32.totalorder %s76, %s90
      %p92 = scmp.eq.s32.totalorder %s29, 0
      %p93 = por %p91, %p92
      %s94 = ssub.s32 %s23, %s30
      %p95 = scmp.eq.s32.totalorder %s94, 0
      %s97 = sadd.s32 %s96, 1
      %s98 = scalar_select %p95, %s96, %s97
      %p101 = pneg %p95
      %p102 = scmp.eq.s32.totalorder %s23, 1
      %p103 = por %p101, %p102
      %p104 = scmp.ne.s32.totalorder %s96, %s99
      %p105 = scmp.eq.s32.totalorder %s23, 0
      %p106 = por %p104, %p105
      %p107 = scmp.ne.s32.totalorder %s96, %s99
      %p108 = scmp.eq.s32.totalorder %s28, 1
      %p109 = por %p107, %p108
      %p110 = scmp.ne.s32.totalorder %s99, %s100
      %p111 = scmp.eq.s32.totalorder %s28, 0
      %p112 = por %p110, %p111
      %p113 = scmp.ne.s32.totalorder %s99, %s100
      %p114 = scmp.eq.s32.totalorder %s29, 1
      %p115 = por %p113, %p114
      %p117 = scmp.ne.s32.totalorder %s100, %s116
      %p118 = scmp.eq.s32.totalorder %s29, 0
      %p119 = por %p117, %p118
      %s120 = ssub.s32 %s23, %s30
      %p121 = scmp.eq.s32.totalorder %s120, 0
      %s123 = sadd.s32 %s122, 1
      %s124 = scalar_select %p121, %s122, %s123
      %p127 = pneg %p121
      %p128 = scmp.eq.s32.totalorder %s23, 1
      %p129 = por %p127, %p128
      %p130 = scmp.ne.s32.totalorder %s122, %s125
      %p131 = scmp.eq.s32.totalorder %s23, 0
      %p132 = por %p130, %p131
      %p133 = scmp.ne.s32.totalorder %s122, %s125
      %p134 = scmp.eq.s32.totalorder %s28, 1
      %p135 = por %p133, %p134
      %p136 = scmp.ne.s32.totalorder %s125, %s126
      %p137 = scmp.eq.s32.totalorder %s28, 0
      %p138 = por %p136, %p137
      %p139 = scmp.ne.s32.totalorder %s125, %s126
      %p140 = scmp.eq.s32.totalorder %s29, 1
      %p141 = por %p139, %p140
      %p143 = scmp.ne.s32.totalorder %s126, %s142
      %p144 = scmp.eq.s32.totalorder %s29, 0
      %p145 = por %p143, %p144
      %p146 = scmp.le.s32.totalorder 1, %s23
      %p147 = scmp.lt.s32.totalorder %s23, 3
      %p148 = pnand %p146, %p147
      %p149 = pneg %p148
      // Predicated region
      $region9: #{tpu_custom_call.1} parent=5 // pred_check
        _
      $region10: #{tpu_custom_call.1} parent=5 // pred_check_branch
        %151 = sbr.rel (%p148) target = $region12
      $region11: #{tpu_custom_call.1} parent=5 // pred_region
        %s152 = ssub.s32 %s23, 1
        // Predicated region
        $region13: #{tpu_custom_call.1} parent=11 // pred_check
          %p153 = pneg %p44
        $region14: #{tpu_custom_call.1} parent=11 // pred_check_branch
          %155 = sbr.rel (%p153) target = $region16
        $region15: #{tpu_custom_call.1} parent=11 // pred_region
          %s157 = ssub.s32 2048, 2048
          %158 = vsyncadd [#allocation6], %s157
          %s159 = sshll.u32 [#allocation5], 4
          %s160 = int_to_ptr.vmem [resolvable:$true] %s159
          %165 = dma.hbm_to_vmem [thread:$0]  %s1, 2048, %s160, [#allocation6], 128, 128, 8
        $region16: #{tpu_custom_call.1} parent=11 // pred_fallthru
          _
        // Predicated region
        $region17: #{tpu_custom_call.1} parent=11 // pred_check
          %p166 = pneg %p65
        $region18: #{tpu_custom_call.1} parent=11 // pred_check_branch
          %168 = sbr.rel (%p166) target = $region20
        $region19: #{tpu_custom_call.1} parent=11 // pred_region
          %s170 = ssub.s32 2048, 2048
          %171 = vsyncadd [#allocation9], %s170
          %s172 = sshll.u32 [#allocation8], 4
          %s173 = int_to_ptr.vmem [resolvable:$true] %s172
          %178 = dma.hbm_to_vmem [thread:$0]  %s2, 2048, %s173, [#allocation9], 128, 128, 8
        $region20: #{tpu_custom_call.1} parent=11 // pred_fallthru
          _
        // Predicated region
        $region21: #{tpu_custom_call.1} parent=11 // pred_check
          %p179 = pneg %p86
        $region22: #{tpu_custom_call.1} parent=11 // pred_check_branch
          %181 = sbr.rel (%p179) target = $region24
        $region23: #{tpu_custom_call.1} parent=11 // pred_region
          %s183 = ssub.s32 2048, 2048
          %184 = vsyncadd [#allocation9], %s183
          %s185 = sshll.u32 [#allocation10], 4
          %s186 = int_to_ptr.vmem [resolvable:$true] %s185
          %191 = dma.hbm_to_vmem [thread:$0]  %s3, 2048, %s186, [#allocation9], 128, 128, 8
        $region24: #{tpu_custom_call.1} parent=11 // pred_fallthru
          _
      $region12: #{tpu_custom_call.1} parent=5 // pred_fallthru
        _
      %p192 = scmp.lt.s32.totalorder %s23, 2
      // Predicated region
      $region25: #{tpu_custom_call.1} parent=5 // pred_check
        %p193 = pneg %p192
      $region26: #{tpu_custom_call.1} parent=5 // pred_check_branch
        %195 = sbr.rel (%p193) target = $region28
      $region27: #{tpu_custom_call.1} parent=5 // pred_region
        // Predicated region
        $region29: #{tpu_custom_call.1} parent=27 // pred_check
          %p196 = pneg %p106
        $region30: #{tpu_custom_call.1} parent=27 // pred_check_branch
          %198 = sbr.rel (%p196) target = $region32
        $region31: #{tpu_custom_call.1} parent=27 // pred_region
          %s199 = sand.u32 %s96, 1
          %s200 = scalar_lea.sflag [#allocation12], %s199
          %s201 = sand.u32 %s96, 1
          %s202 = smul.addr %s201, 64
          %s203 = scalar_lea.vmem [#allocation11], %s202
          %s204 = smul.u32 4, %s23
          %s206 = ssub.s32 1024, 1024
          %207 = vsyncadd %s200, %s206
          %s208 = smul.addr %s204, 2
          %s209 = smul.addr %s208, 128
          %s210 = scalar_lea.hbm %s4, %s209
          %s211 = sshll.u32 %s203, 4
          %s212 = int_to_ptr.vmem [resolvable:$true] %s211
          %217 = dma.hbm_to_vmem [thread:$0]  %s210, 1024, %s212, %s200, 128, 128, 8
        $region32: #{tpu_custom_call.1} parent=27 // pred_fallthru
          _
      $region28: #{tpu_custom_call.1} parent=5 // pred_fallthru
        _
      %p218 = scmp.le.s32.totalorder 1, %s23
      %p219 = scmp.lt.s32.totalorder %s23, 3
      %p220 = pnand %p218, %p219
      %p221 = pneg %p220
      // Predicated region
      $region33: #{tpu_custom_call.1} parent=5 // pred_check
        _
      $region34: #{tpu_custom_call.1} parent=5 // pred_check_branch
        %223 = sbr.rel (%p220) target = $region36
      $region35: #{tpu_custom_call.1} parent=5 // pred_region
        %s224 = ssub.s32 %s23, 1
        // Predicated region
        $region37: #{tpu_custom_call.1} parent=35 // pred_check
          %p225 = pneg %p44
        $region38: #{tpu_custom_call.1} parent=35 // pred_check_branch
          %227 = sbr.rel (%p225) target = $region40
        $region39: #{tpu_custom_call.1} parent=35 // pred_region
          %228 = dma.done [#allocation6], 2048
        $region40: #{tpu_custom_call.1} parent=35 // pred_fallthru
          _
        // Predicated region
        $region41: #{tpu_custom_call.1} parent=35 // pred_check
          %p229 = pneg %p65
        $region42: #{tpu_custom_call.1} parent=35 // pred_check_branch
          %231 = sbr.rel (%p229) target = $region44
        $region43: #{tpu_custom_call.1} parent=35 // pred_region
          %232 = dma.done [#allocation9], 2048
        $region44: #{tpu_custom_call.1} parent=35 // pred_fallthru
          _
        // Predicated region
        $region45: #{tpu_custom_call.1} parent=35 // pred_check
          %p233 = pneg %p86
        $region46: #{tpu_custom_call.1} parent=35 // pred_check_branch
          %235 = sbr.rel (%p233) target = $region48
        $region47: #{tpu_custom_call.1} parent=35 // pred_region
          %236 = dma.done [#allocation9], 2048
        $region48: #{tpu_custom_call.1} parent=35 // pred_fallthru
          _
        %s237 = sand.u32 %s99, 1
        %s238 = scalar_lea.sflag [#allocation12], %s237
        %s239 = sand.u32 %s99, 1
        %s240 = smul.addr %s239, 64
        %s241 = scalar_lea.vmem [#allocation11], %s240
        // Predicated region
        $region49: #{tpu_custom_call.1} parent=35 // pred_check
          %p242 = pneg %p112
        $region50: #{tpu_custom_call.1} parent=35 // pred_check_branch
          %244 = sbr.rel (%p242) target = $region52
        $region51: #{tpu_custom_call.1} parent=35 // pred_region
          %245 = dma.done %s238, 1024
        $region52: #{tpu_custom_call.1} parent=35 // pred_fallthru
          _
        %p246 = pneg %p44
        %p247 = pneg %p41
        %p248 = pneg %p65
        %p249 = pneg %p62
        %p250 = pneg %p86
        %p251 = pneg %p83
        %s252 = sand.u32 %s99, 1
        %s253 = scalar_lea.sflag [#allocation12], %s252
        %s254 = sand.u32 %s99, 1
        %s255 = smul.addr %s254, 64
        %s256 = scalar_lea.vmem [#allocation11], %s255
        %p257 = pneg %p112
        %p258 = pneg %p109
        %p259 = pneg %p138
        %p260 = pneg %p135
        %s261 = sand.u32 %s125, 1
        %s262 = scalar_lea.sflag [#allocation7], %s261
        %s263 = sand.u32 %s125, 1
        %s264 = smul.addr %s263, 64
        %s265 = scalar_lea.vmem [#allocation13], %s264
        %s266 = smul.u32 4, %s28
        %s267 = smul.u32 4, %s28
        %v268 = vld [vmem:[%s241] sm:$0xff]
        %v269 = vld [vmem:[%s241 + $0x8] sm:$0xff]
        %v270 = vld [vmem:[%s241 + $0x10] sm:$0xff]
        %v271 = vld [vmem:[%s241 + $0x18] sm:$0xff]
        %v272 = vld [vmem:[%s241 + $0x20] sm:$0xff]
        %v273 = vld [vmem:[%s241 + $0x28] sm:$0xff]
        %v274 = vld [vmem:[%s241 + $0x30] sm:$0xff]
        %v275 = vld [vmem:[%s241 + $0x38] sm:$0xff]
        %276 = vst [vmem:[#allocation2 + $0x1] sm:$0xff] %v268
        %277 = vst [vmem:[#allocation2 + $0x9] sm:$0xff] %v269
        %278 = vst [vmem:[#allocation2 + $0x19] sm:$0xff] %v270
        %279 = vst [vmem:[#allocation2 + $0x21] sm:$0xff] %v271
        %280 = vst [vmem:[#allocation2 + $0x31] sm:$0xff] %v272
        %281 = vst [vmem:[#allocation2 + $0x39] sm:$0xff] %v273
        %282 = vst [vmem:[#allocation2 + $0x49] sm:$0xff] %v274
        %283 = vst [vmem:[#allocation2 + $0x51] sm:$0xff] %v275
        %284 = vst [vmem:[#allocation2] sm:$0x1] %v268
        %285 = vst [vmem:[#allocation2 + $0x18] sm:$0x1] %v270
        %286 = vst [vmem:[#allocation2 + $0x30] sm:$0x1] %v272
        %287 = vst [vmem:[#allocation2 + $0x48] sm:$0x1] %v274
        %288 = vst [vmem:[#allocation2 + $0xa] sm:$0x80] %v269
        %289 = vst [vmem:[#allocation2 + $0x22] sm:$0x80] %v271
        %290 = vst [vmem:[#allocation2 + $0x3a] sm:$0x80] %v273
        %291 = vst [vmem:[#allocation2 + $0x52] sm:$0x80] %v275
        %v292 = vld [vmem:[#allocation2] sm:$0xff]
        %v293 = vld [vmem:[#allocation2 + $0x8] sm:$0xff]
        %v294 = vld [vmem:[#allocation2 + $0x18] sm:$0xff]
        %v295 = vld [vmem:[#allocation2 + $0x20] sm:$0xff]
        %v296 = vld [vmem:[#allocation2 + $0x30] sm:$0xff]
        %v297 = vld [vmem:[#allocation2 + $0x38] sm:$0xff]
        %v298 = vld [vmem:[#allocation2 + $0x48] sm:$0xff]
        %v299 = vld [vmem:[#allocation2 + $0x50] sm:$0xff]
        %v300 = vld [vmem:[#allocation2 + $0x2] sm:$0xff]
        %v301 = vld [vmem:[#allocation2 + $0xa] sm:$0xff]
        %v302 = vld [vmem:[#allocation2 + $0x1a] sm:$0xff]
        %v303 = vld [vmem:[#allocation2 + $0x22] sm:$0xff]
        %v304 = vld [vmem:[#allocation2 + $0x32] sm:$0xff]
        %v305 = vld [vmem:[#allocation2 + $0x3a] sm:$0xff]
        %v306 = vld [vmem:[#allocation2 + $0x4a] sm:$0xff]
        %v307 = vld [vmem:[#allocation2 + $0x52] sm:$0xff]
        %v308 = vadd.f32 %v292, %v300
        %v309 = vadd.f32 %v293, %v301
        %v310 = vadd.f32 %v294, %v302
        %v311 = vadd.f32 %v295, %v303
        %v312 = vadd.f32 %v296, %v304
        %v313 = vadd.f32 %v297, %v305
        %v314 = vadd.f32 %v298, %v306
        %v315 = vadd.f32 %v299, %v307
        %v316 = vmul.f32 %v268, 2.0
        %v317 = vmul.f32 %v269, 2.0
        %v318 = vmul.f32 %v270, 2.0
        %v319 = vmul.f32 %v271, 2.0
        %v320 = vmul.f32 %v272, 2.0
        %v321 = vmul.f32 %v273, 2.0
        %v322 = vmul.f32 %v274, 2.0
        %v323 = vmul.f32 %v275, 2.0
        %v324 = vadd.f32 %v308, %v316
        %v325 = vadd.f32 %v309, %v317
        %v326 = vadd.f32 %v310, %v318
        %v327 = vadd.f32 %v311, %v319
        %v328 = vadd.f32 %v312, %v320
        %v329 = vadd.f32 %v313, %v321
        %v330 = vadd.f32 %v314, %v322
        %v331 = vadd.f32 %v315, %v323
        %v332 = vsub.f32 %v300, %v292
        %v333 = vsub.f32 %v301, %v293
        %v334 = vsub.f32 %v302, %v294
        %v335 = vsub.f32 %v303, %v295
        %v336 = vsub.f32 %v304, %v296
        %v337 = vsub.f32 %v305, %v297
        %v338 = vsub.f32 %v306, %v298
        %v339 = vsub.f32 %v307, %v299
        %v340 = vld [vmem:[#allocation5] sm:$0xff]
        %v341 = vld [vmem:[#allocation5 + $0x8] sm:$0xff]
        %v342 = vld [vmem:[#allocation5 + $0x10] sm:$0xff]
        %v343 = vld [vmem:[#allocation5 + $0x18] sm:$0xff]
        %v344 = vld [vmem:[#allocation5 + $0x20] sm:$0xff]
        %v345 = vld [vmem:[#allocation5 + $0x28] sm:$0xff]
        %v346 = vld [vmem:[#allocation5 + $0x30] sm:$0xff]
        %v347 = vld [vmem:[#allocation5 + $0x38] sm:$0xff]
        %v348 = vld [vmem:[#allocation5 + $0x40] sm:$0xff]
        %v349 = vld [vmem:[#allocation5 + $0x48] sm:$0xff]
        %v350 = vld [vmem:[#allocation5 + $0x50] sm:$0xff]
        %v351 = vld [vmem:[#allocation5 + $0x58] sm:$0xff]
        %v352 = vld [vmem:[#allocation5 + $0x60] sm:$0xff]
        %v353 = vld [vmem:[#allocation5 + $0x68] sm:$0xff]
        %v354 = vld [vmem:[#allocation5 + $0x70] sm:$0xff]
        %v355 = vld [vmem:[#allocation5 + $0x78] sm:$0xff]
        %356 = vmatprep.subr.mxu0 0.0
        %v357 = vand.u32 %v340, 4294901760
        %358 = vmatpush1.msra.mxu0 %v357
        %359 = vmatprep.subr.mxu0 0.0
        %v360 = vand.u32 %v341, 4294901760
        %361 = vmatpush1.msra.mxu0 %v360
        %362 = vmatprep.subr.mxu0 0.0
        %v363 = vand.u32 %v342, 4294901760
        %364 = vmatpush1.msra.mxu0 %v363
        %365 = vmatprep.subr.mxu0 0.0
        %v366 = vand.u32 %v343, 4294901760
        %367 = vmatpush1.msra.mxu0 %v366
        %368 = vmatprep.subr.mxu0 0.0
        %v369 = vand.u32 %v344, 4294901760
        %370 = vmatpush1.msra.mxu0 %v369
        %371 = vmatprep.subr.mxu0 0.0
        %v372 = vand.u32 %v345, 4294901760
        %373 = vmatpush1.msra.mxu0 %v372
        %374 = vmatprep.subr.mxu0 0.0
        %v375 = vand.u32 %v346, 4294901760
        %376 = vmatpush1.msra.mxu0 %v375
        %377 = vmatprep.subr.mxu0 0.0
        %v378 = vand.u32 %v347, 4294901760
        %379 = vmatpush1.msra.mxu0 %v378
        %380 = vmatprep.subr.mxu0 0.0
        %v381 = vand.u32 %v348, 4294901760
        %382 = vmatpush1.msra.mxu0 %v381
        %383 = vmatprep.subr.mxu0 0.0
        %v384 = vand.u32 %v349, 4294901760
        %385 = vmatpush1.msra.mxu0 %v384
        %386 = vmatprep.subr.mxu0 0.0
        %v387 = vand.u32 %v350, 4294901760
        %388 = vmatpush1.msra.mxu0 %v387
        %389 = vmatprep.subr.mxu0 0.0
        %v390 = vand.u32 %v351, 4294901760
        %391 = vmatpush1.msra.mxu0 %v390
        %392 = vmatprep.subr.mxu0 0.0
        %v393 = vand.u32 %v352, 4294901760
        %394 = vmatpush1.msra.mxu0 %v393
        %395 = vmatprep.subr.mxu0 0.0
        %v396 = vand.u32 %v353, 4294901760
        %397 = vmatpush1.msra.mxu0 %v396
        %398 = vmatprep.subr.mxu0 0.0
        %v399 = vand.u32 %v354, 4294901760
        %400 = vmatpush1.msra.mxu0 %v399
        %401 = vmatprep.subr.mxu0 0.0
        %v402 = vand.u32 %v355, 4294901760
        %403 = vmatpush1.msra.mxu0 %v402
        %404 = vmatprep.subr.mxu0 0.0
        %405 = vmatpush1.msra.mxu0 0.0
        %406 = vmatprep.subr.mxu0 0.0
        %407 = vmatpush1.msra.mxu0 0.0
        %408 = vmatprep.subr.mxu0 0.0
        %409 = vmatpush1.msra.mxu0 0.0
        %410 = vmatprep.subr.mxu0 0.0
        %411 = vmatpush1.msra.mxu0 0.0
        %412 = vmatprep.subr.mxu0 0.0
        %413 = vmatpush1.msra.mxu0 0.0
        %414 = vmatprep.subr.mxu0 0.0
        %415 = vmatpush1.msra.mxu0 0.0
        %416 = vmatprep.subr.mxu0 0.0
        %417 = vmatpush1.msra.mxu0 0.0
        %418 = vmatprep.subr.mxu0 0.0
        %419 = vmatpush1.msra.mxu0 0.0
        %420 = vmatprep.subr.mxu0 0.0
        %421 = vmatpush1.msra.mxu0 0.0
        %422 = vmatprep.subr.mxu0 0.0
        %423 = vmatpush1.msra.mxu0 0.0
        %424 = vmatprep.subr.mxu0 0.0
        %425 = vmatpush1.msra.mxu0 0.0
        %426 = vmatprep.subr.mxu0 0.0
        %427 = vmatpush1.msra.mxu0 0.0
        %428 = vmatprep.subr.mxu0 0.0
        %429 = vmatpush1.msra.mxu0 0.0
        %430 = vmatprep.subr.mxu0 0.0
        %431 = vmatpush1.msra.mxu0 0.0
        %432 = vmatprep.subr.mxu0 0.0
        %433 = vmatpush1.msra.mxu0 0.0
        %434 = vmatprep.subr.mxu0 0.0
        %435 = vmatpush1.msra.mxu0 0.0
        %436 = vmatprep.mubr.f32.mxu0 0.0
        %v437 = vand.u32 %v324, 4294901760
        %v438 = vsub.f32 %v324, %v437
        %v439 = vand.u32 %v438, 4294901760
        %v440 = vsub.f32 %v438, %v439
        %v441 = vand.u32 %v440, 4294901760
        %442 = vmatmul.mubr.f32.gmra.mrb[0].mxu0 %v441
        %v443 = vpop.f32.mrb[0].mxu0
        %v444 = vadd.f32 0.0, %v443
        %v445 = vpop.f32.mrb[0].mxu0
        %446 = vmatprep.mubr.f32.mxu0 0.0
        %v447 = vand.u32 %v325, 4294901760
        %v448 = vsub.f32 %v325, %v447
        %v449 = vand.u32 %v448, 4294901760
        %v450 = vsub.f32 %v448, %v449
        %v451 = vand.u32 %v450, 4294901760
        %452 = vmatmul.mubr.f32.gmra.mrb[0].mxu0 %v451
        %v453 = vpop.f32.mrb[0].mxu0
        %v454 = vadd.f32 0.0, %v453
        %v455 = vpop.f32.mrb[0].mxu0
        %456 = vmatprep.mubr.f32.mxu0 0.0
        %v457 = vand.u32 %v326, 4294901760
        %v458 = vsub.f32 %v326, %v457
        %v459 = vand.u32 %v458, 4294901760
        %v460 = vsub.f32 %v458, %v459
        %v461 = vand.u32 %v460, 4294901760
        %462 = vmatmul.mubr.f32.gmra.mrb[0].mxu0 %v461
        %v463 = vpop.f32.mrb[0].mxu0
        %v464 = vadd.f32 0.0, %v463
        %v465 = vpop.f32.mrb[0].mxu0
        %466 = vmatprep.mubr.f32.mxu0 0.0
        %v467 = vand.u32 %v327, 4294901760
        %v468 = vsub.f32 %v327, %v467
        %v469 = vand.u32 %v468, 4294901760
        %v470 = vsub.f32 %v468, %v469
        %v471 = vand.u32 %v470, 4294901760
        %472 = vmatmul.mubr.f32.gmra.mrb[0].mxu0 %v471
        %v473 = vpop.f32.mrb[0].mxu0
        %v474 = vadd.f32 0.0, %v473
        %v475 = vpop.f32.mrb[0].mxu0
        %476 = vmatprep.mubr.f32.mxu0 0.0
        %v477 = vand.u32 %v328, 4294901760
        %v478 = vsub.f32 %v328, %v477
        %v479 = vand.u32 %v478, 4294901760
        %v480 = vsub.f32 %v478, %v479
        %v481 = vand.u32 %v480, 4294901760
        %482 = vmatmul.mubr.f32.gmra.mrb[0].mxu0 %v481
        %v483 = vpop.f32.mrb[0].mxu0
        %v484 = vadd.f32 0.0, %v483
        %v485 = vpop.f32.mrb[0].mxu0
        %486 = vmatprep.mubr.f32.mxu0 0.0
        %v487 = vand.u32 %v329, 4294901760
        %v488 = vsub.f32 %v329, %v487
        %v489 = vand.u32 %v488, 4294901760
        %v490 = vsub.f32 %v488, %v489
        %v491 = vand.u32 %v490, 4294901760
        %492 = vmatmul.mubr.f32.gmra.mrb[0].mxu0 %v491
        %v493 = vpop.f32.mrb[0].mxu0
        %v494 = vadd.f32 0.0, %v493
        %v495 = vpop.f32.mrb[0].mxu0
        %496 = vmatprep.mubr.f32.mxu0 0.0
        %v497 = vand.u32 %v330, 4294901760
        %v498 = vsub.f32 %v330, %v497
        %v499 = vand.u32 %v498, 4294901760
        %v500 = vsub.f32 %v498, %v499
        %v501 = vand.u32 %v500, 4294901760
        %502 = vmatmul.mubr.f32.gmra.mrb[0].mxu0 %v501
        %v503 = vpop.f32.mrb[0].mxu0
        %v504 = vadd.f32 0.0, %v503
        %v505 = vpop.f32.mrb[0].mxu0
        %506 = vmatprep.mubr.f32.mxu0 0.0
        %v507 = vand.u32 %v331, 4294901760
        %v508 = vsub.f32 %v331, %v507
        %v509 = vand.u32 %v508, 4294901760
        %v510 = vsub.f32 %v508, %v509
        %v511 = vand.u32 %v510, 4294901760
        %512 = vmatmul.mubr.f32.gmra.mrb[0].mxu0 %v511
        %v513 = vpop.f32.mrb[0].mxu0
        %v514 = vadd.f32 0.0, %v513
        %v515 = vpop.f32.mrb[0].mxu0
        %516 = vdwg.mxu0
        %517 = vmatprep.subr.mxu0 0.0
        %v518 = vand.u32 %v340, 4294901760
        %v519 = vsub.f32 %v340, %v518
        %v520 = vand.u32 %v519, 4294901760
        %v521 = vsub.f32 %v519, %v520
        %v522 = vand.u32 %v521, 4294901760
        %523 = vmatpush1.msra.mxu0 %v522
        %524 = vmatprep.subr.mxu0 0.0
        %v525 = vand.u32 %v341, 4294901760
        %v526 = vsub.f32 %v341, %v525
        %v527 = vand.u32 %v526, 4294901760
        %v528 = vsub.f32 %v526, %v527
        %v529 = vand.u32 %v528, 4294901760
        %530 = vmatpush1.msra.mxu0 %v529
        %531 = vmatprep.subr.mxu0 0.0
        %v532 = vand.u32 %v342, 4294901760
        %v533 = vsub.f32 %v342, %v532
        %v534 = vand.u32 %v533, 4294901760
        %v535 = vsub.f32 %v533, %v534
        %v536 = vand.u32 %v535, 4294901760
        %537 = vmatpush1.msra.mxu0 %v536
        %538 = vmatprep.subr.mxu0 0.0
        %v539 = vand.u32 %v343, 4294901760
        %v540 = vsub.f32 %v343, %v539
        %v541 = vand.u32 %v540, 4294901760
        %v542 = vsub.f32 %v540, %v541
        %v543 = vand.u32 %v542, 4294901760
        %544 = vmatpush1.msra.mxu0 %v543
        %545 = vmatprep.subr.mxu0 0.0
        %v546 = vand.u32 %v344, 4294901760
        %v547 = vsub.f32 %v344, %v546
        %v548 = vand.u32 %v547, 4294901760
        %v549 = vsub.f32 %v547, %v548
        %v550 = vand.u32 %v549, 4294901760
        %551 = vmatpush1.msra.mxu0 %v550
        %552 = vmatprep.subr.mxu0 0.0
        %v553 = vand.u32 %v345, 4294901760
        %v554 = vsub.f32 %v345, %v553
        %v555 = vand.u32 %v554, 4294901760
        %v556 = vsub.f32 %v554, %v555
        %v557 = vand.u32 %v556, 4294901760
        %558 = vmatpush1.msra.mxu0 %v557
        %559 = vmatprep.subr.mxu0 0.0
        %v560 = vand.u32 %v346, 4294901760
        %v561 = vsub.f32 %v346, %v560
        %v562 = vand.u32 %v561, 4294901760
        %v563 = vsub.f32 %v561, %v562
        %v564 = vand.u32 %v563, 4294901760
        %565 = vmatpush1.msra.mxu0 %v564
        %566 = vmatprep.subr.mxu0 0.0
        %v567 = vand.u32 %v347, 4294901760
        %v568 = vsub.f32 %v347, %v567
        %v569 = vand.u32 %v568, 4294901760
        %v570 = vsub.f32 %v568, %v569
        %v571 = vand.u32 %v570, 4294901760
        %572 = vmatpush1.msra.mxu0 %v571
        %573 = vmatprep.subr.mxu0 0.0
        %v574 = vand.u32 %v348, 4294901760
        %v575 = vsub.f32 %v348, %v574
        %v576 = vand.u32 %v575, 4294901760
        %v577 = vsub.f32 %v575, %v576
        %v578 = vand.u32 %v577, 4294901760
        %579 = vmatpush1.msra.mxu0 %v578
        %580 = vmatprep.subr.mxu0 0.0
        %v581 = vand.u32 %v349, 4294901760
        %v582 = vsub.f32 %v349, %v581
        %v583 = vand.u32 %v582, 4294901760
        %v584 = vsub.f32 %v582, %v583
        %v585 = vand.u32 %v584, 4294901760
        %586 = vmatpush1.msra.mxu0 %v585
        %587 = vmatprep.subr.mxu0 0.0
        %v588 = vand.u32 %v350, 4294901760
        %v589 = vsub.f32 %v350, %v588
        %v590 = vand.u32 %v589, 4294901760
        %v591 = vsub.f32 %v589, %v590
        %v592 = vand.u32 %v591, 4294901760
        %593 = vmatpush1.msra.mxu0 %v592
        %594 = vmatprep.subr.mxu0 0.0
        %v595 = vand.u32 %v351, 4294901760
        %v596 = vsub.f32 %v351, %v595
        %v597 = vand.u32 %v596, 4294901760
        %v598 = vsub.f32 %v596, %v597
        %v599 = vand.u32 %v598, 4294901760
        %600 = vmatpush1.msra.mxu0 %v599
        %601 = vmatprep.subr.mxu0 0.0
        %v602 = vand.u32 %v352, 4294901760
        %v603 = vsub.f32 %v352, %v602
        %v604 = vand.u32 %v603, 4294901760
        %v605 = vsub.f32 %v603, %v604
        %v606 = vand.u32 %v605, 4294901760
        %607 = vmatpush1.msra.mxu0 %v606
        %608 = vmatprep.subr.mxu0 0.0
        %v609 = vand.u32 %v353, 4294901760
        %v610 = vsub.f32 %v353, %v609
        %v611 = vand.u32 %v610, 4294901760
        %v612 = vsub.f32 %v610, %v611
        %v613 = vand.u32 %v612, 4294901760
        %614 = vmatpush1.msra.mxu0 %v613
        %615 = vmatprep.subr.mxu0 0.0
        %v616 = vand.u32 %v354, 4294901760
        %v617 = vsub.f32 %v354, %v616
        %v618 = vand.u32 %v617, 4294901760
        %v619 = vsub.f32 %v617, %v618
        %v620 = vand.u32 %v619, 4294901760
        %621 = vmatpush1.msra.mxu0 %v620
        %622 = vmatprep.subr.mxu0 0.0
        %v623 = vand.u32 %v355, 4294901760
        %v624 = vsub.f32 %v355, %v623
        %v625 = vand.u32 %v624, 4294901760
        %v626 = vsub.f32 %v624, %v625
        %v627 = vand.u32 %v626, 4294901760
        %628 = vmatpush1.msra.mxu0 %v627
        %629 = vmatprep.subr.mxu0 0.0
        %630 = vmatpush1.msra.mxu0 0.0
        %631 = vmatprep.subr.mxu0 0.0
        %632 = vmatpush1.msra.mxu0 0.0
        %633 = vmatprep.subr.mxu0 0.0
        %634 = vmatpush1.msra.mxu0 0.0
        %635 = vmatprep.subr.mxu0 0.0
        %636 = vmatpush1.msra.mxu0 0.0
        %637 = vmatprep.subr.mxu0 0.0
        %638 = vmatpush1.msra.mxu0 0.0
        %639 = vmatprep.subr.mxu0 0.0
        %640 = vmatpush1.msra.mxu0 0.0
        %641 = vmatprep.subr.mxu0 0.0
        %642 = vmatpush1.msra.mxu0 0.0
        %643 = vmatprep.subr.mxu0 0.0
        %644 = vmatpush1.msra.mxu0 0.0
        %645 = vmatprep.subr.mxu0 0.0
        %646 = vmatpush1.msra.mxu0 0.0
        %647 = vmatprep.subr.mxu0 0.0
        %648 = vmatpush1.msra.mxu0 0.0
        %649 = vmatprep.subr.mxu0 0.0
        %650 = vmatpush1.msra.mxu0 0.0
        %651 = vmatprep.subr.mxu0 0.0
        %652 = vmatpush1.msra.mxu0 0.0
        %653 = vmatprep.subr.mxu0 0.0
        %654 = vmatpush1.msra.mxu0 0.0
        %655 = vmatprep.subr.mxu0 0.0
        %656 = vmatpush1.msra.mxu0 0.0
        %657 = vmatprep.subr.mxu0 0.0
        %658 = vmatpush1.msra.mxu0 0.0
        %659 = vmatprep.subr.mxu0 0.0
        %660 = vmatpush1.msra.mxu0 0.0
        %661 = vmatprep.mubr.f32.mxu0 0.0
        %v662 = vand.u32 %v324, 4294901760
        %663 = vmatmul.mubr.f32.gmra.mrb[0].mxu0 %v662
        %v664 = vpop.f32.mrb[0].mxu0
        %v665 = vadd.f32 %v444, %v664
        %v666 = vpop.f32.mrb[0].mxu0
        %667 = vmatprep.mubr.f32.mxu0 0.0
        %v668 = vand.u32 %v325, 4294901760
        %669 = vmatmul.mubr.f32.gmra.mrb[0].mxu0 %v668
        %v670 = vpop.f32.mrb[0].mxu0
        %v671 = vadd.f32 %v454, %v670
        %v672 = vpop.f32.mrb[0].mxu0
        %673 = vmatprep.mubr.f32.mxu0 0.0
        %v674 = vand.u32 %v326, 4294901760
        %675 = vmatmul.mubr.f32.gmra.mrb[0].mxu0 %v674
        %v676 = vpop.f32.mrb[0].mxu0
        %v677 = vadd.f32 %v464, %v676
        %v678 = vpop.f32.mrb[0].mxu0
        %679 = vmatprep.mubr.f32.mxu0 0.0
        %v680 = vand.u32 %v327, 4294901760
        %681 = vmatmul.mubr.f32.gmra.mrb[0].mxu0 %v680
        %v682 = vpop.f32.mrb[0].mxu0
        %v683 = vadd.f32 %v474, %v682
        %v684 = vpop.f32.mrb[0].mxu0
        %685 = vmatprep.mubr.f32.mxu0 0.0
        %v686 = vand.u32 %v328, 4294901760
        %687 = vmatmul.mubr.f32.gmra.mrb[0].mxu0 %v686
        %v688 = vpop.f32.mrb[0].mxu0
        %v689 = vadd.f32 %v484, %v688
        %v690 = vpop.f32.mrb[0].mxu0
        %691 = vmatprep.mubr.f32.mxu0 0.0
        %v692 = vand.u32 %v329, 4294901760
        %693 = vmatmul.mubr.f32.gmra.mrb[0].mxu0 %v692
        %v694 = vpop.f32.mrb[0].mxu0
        %v695 = vadd.f32 %v494, %v694
        %v696 = vpop.f32.mrb[0].mxu0
        %697 = vmatprep.mubr.f32.mxu0 0.0
        %v698 = vand.u32 %v330, 4294901760
        %699 = vmatmul.mubr.f32.gmra.mrb[0].mxu0 %v698
        %v700 = vpop.f32.mrb[0].mxu0
        %v701 = vadd.f32 %v504, %v700
        %v702 = vpop.f32.mrb[0].mxu0
        %703 = vmatprep.mubr.f32.mxu0 0.0
        %v704 = vand.u32 %v331, 4294901760
        %705 = vmatmul.mubr.f32.gmra.mrb[0].mxu0 %v704
        %v706 = vpop.f32.mrb[0].mxu0
        %v707 = vadd.f32 %v514, %v706
        %v708 = vpop.f32.mrb[0].mxu0
        %709 = vdwg.mxu0
        %710 = vmatprep.subr.mxu0 0.0
        %v711 = vand.u32 %v340, 4294901760
        %v712 = vsub.f32 %v340, %v711
        %713 = vmatpush1.msra.mxu0 %v712
        %714 = vmatprep.subr.mxu0 0.0
        %v715 = vand.u32 %v341, 4294901760
        %v716 = vsub.f32 %v341, %v715
        %717 = vmatpush1.msra.mxu0 %v716
        %718 = vmatprep.subr.mxu0 0.0
        %v719 = vand.u32 %v342, 4294901760
        %v720 = vsub.f32 %v342, %v719
        %721 = vmatpush1.msra.mxu0 %v720
        %722 = vmatprep.subr.mxu0 0.0
        %v723 = vand.u32 %v343, 4294901760
        %v724 = vsub.f32 %v343, %v723
        %725 = vmatpush1.msra.mxu0 %v724
        %726 = vmatprep.subr.mxu0 0.0
        %v727 = vand.u32 %v344, 4294901760
        %v728 = vsub.f32 %v344, %v727
        %729 = vmatpush1.msra.mxu0 %v728
        %730 = vmatprep.subr.mxu0 0.0
        %v731 = vand.u32 %v345, 4294901760
        %v732 = vsub.f32 %v345, %v731
        %733 = vmatpush1.msra.mxu0 %v732
        %734 = vmatprep.subr.mxu0 0.0
        %v735 = vand.u32 %v346, 4294901760
        %v736 = vsub.f32 %v346, %v735
        %737 = vmatpush1.msra.mxu0 %v736
        %738 = vmatprep.subr.mxu0 0.0
        %v739 = vand.u32 %v347, 4294901760
        %v740 = vsub.f32 %v347, %v739
        %741 = vmatpush1.msra.mxu0 %v740
        %742 = vmatprep.subr.mxu0 0.0
        %v743 = vand.u32 %v348, 4294901760
        %v744 = vsub.f32 %v348, %v743
        %745 = vmatpush1.msra.mxu0 %v744
        %746 = vmatprep.subr.mxu0 0.0
        %v747 = vand.u32 %v349, 4294901760
        %v748 = vsub.f32 %v349, %v747
        %749 = vmatpush1.msra.mxu0 %v748
        %750 = vmatprep.subr.mxu0 0.0
        %v751 = vand.u32 %v350, 4294901760
        %v752 = vsub.f32 %v350, %v751
        %753 = vmatpush1.msra.mxu0 %v752
        %754 = vmatprep.subr.mxu0 0.0
        %v755 = vand.u32 %v351, 4294901760
        %v756 = vsub.f32 %v351, %v755
        %757 = vmatpush1.msra.mxu0 %v756
        %758 = vmatprep.subr.mxu0 0.0
        %v759 = vand.u32 %v352, 4294901760
        %v760 = vsub.f32 %v352, %v759
        %761 = vmatpush1.msra.mxu0 %v760
        %762 = vmatprep.subr.mxu0 0.0
        %v763 = vand.u32 %v353, 4294901760
        %v764 = vsub.f32 %v353, %v763
        %765 = vmatpush1.msra.mxu0 %v764
        %766 = vmatprep.subr.mxu0 0.0
        %v767 = vand.u32 %v354, 4294901760
        %v768 = vsub.f32 %v354, %v767
        %769 = vmatpush1.msra.mxu0 %v768
        %770 = vmatprep.subr.mxu0 0.0
        %v771 = vand.u32 %v355, 4294901760
        %v772 = vsub.f32 %v355, %v771
        %773 = vmatpush1.msra.mxu0 %v772
        %774 = vmatprep.subr.mxu0 0.0
        %775 = vmatpush1.msra.mxu0 0.0
        %776 = vmatprep.subr.mxu0 0.0
        %777 = vmatpush1.msra.mxu0 0.0
        %778 = vmatprep.subr.mxu0 0.0
        %779 = vmatpush1.msra.mxu0 0.0
        %780 = vmatprep.subr.mxu0 0.0
        %781 = vmatpush1.msra.mxu0 0.0
        %782 = vmatprep.subr.mxu0 0.0
        %783 = vmatpush1.msra.mxu0 0.0
        %784 = vmatprep.subr.mxu0 0.0
        %785 = vmatpush1.msra.mxu0 0.0
        %786 = vmatprep.subr.mxu0 0.0
        %787 = vmatpush1.msra.mxu0 0.0
        %788 = vmatprep.subr.mxu0 0.0
        %789 = vmatpush1.msra.mxu0 0.0
        %790 = vmatprep.subr.mxu0 0.0
        %791 = vmatpush1.msra.mxu0 0.0
        %792 = vmatprep.subr.mxu0 0.0
        %793 = vmatpush1.msra.mxu0 0.0
        %794 = vmatprep.subr.mxu0 0.0
        %795 = vmatpush1.msra.mxu0 0.0
        %796 = vmatprep.subr.mxu0 0.0
        %797 = vmatpush1.msra.mxu0 0.0
        %798 = vmatprep.subr.mxu0 0.0
        %799 = vmatpush1.msra.mxu0 0.0
        %800 = vmatprep.subr.mxu0 0.0
        %801 = vmatpush1.msra.mxu0 0.0
        %802 = vmatprep.subr.mxu0 0.0
        %803 = vmatpush1.msra.mxu0 0.0
        %804 = vmatprep.subr.mxu0 0.0
        %805 = vmatpush1.msra.mxu0 0.0
        %806 = vmatprep.mubr.f32.mxu0 0.0
        %v807 = vand.u32 %v324, 4294901760
        %v808 = vsub.f32 %v324, %v807
        %809 = vmatmul.mubr.f32.gmra.mrb[0].mxu0 %v808
        %v810 = vpop.f32.mrb[0].mxu0
        %v811 = vadd.f32 %v665, %v810
        %v812 = vpop.f32.mrb[0].mxu0
        %813 = vmatprep.mubr.f32.mxu0 0.0
        %v814 = vand.u32 %v325, 4294901760
        %v815 = vsub.f32 %v325, %v814
        %816 = vmatmul.mubr.f32.gmra.mrb[0].mxu0 %v815
        %v817 = vpop.f32.mrb[0].mxu0
        %v818 = vadd.f32 %v671, %v817
        %v819 = vpop.f32.mrb[0].mxu0
        %820 = vmatprep.mubr.f32.mxu0 0.0
        %v821 = vand.u32 %v326, 4294901760
        %v822 = vsub.f32 %v326, %v821
        %823 = vmatmul.mubr.f32.gmra.mrb[0].mxu0 %v822
        %v824 = vpop.f32.mrb[0].mxu0
        %v825 = vadd.f32 %v677, %v824
        %v826 = vpop.f32.mrb[0].mxu0
        %827 = vmatprep.mubr.f32.mxu0 0.0
        %v828 = vand.u32 %v327, 4294901760
        %v829 = vsub.f32 %v327, %v828
        %830 = vmatmul.mubr.f32.gmra.mrb[0].mxu0 %v829
        %v831 = vpop.f32.mrb[0].mxu0
        %v832 = vadd.f32 %v683, %v831
        %v833 = vpop.f32.mrb[0].mxu0
        %834 = vmatprep.mubr.f32.mxu0 0.0
        %v835 = vand.u32 %v328, 4294901760
        %v836 = vsub.f32 %v328, %v835
        %837 = vmatmul.mubr.f32.gmra.mrb[0].mxu0 %v836
        %v838 = vpop.f32.mrb[0].mxu0
        %v839 = vadd.f32 %v689, %v838
        %v840 = vpop.f32.mrb[0].mxu0
        %841 = vmatprep.mubr.f32.mxu0 0.0
        %v842 = vand.u32 %v329, 4294901760
        %v843 = vsub.f32 %v329, %v842
        %844 = vmatmul.mubr.f32.gmra.mrb[0].mxu0 %v843
        %v845 = vpop.f32.mrb[0].mxu0
        %v846 = vadd.f32 %v695, %v845
        %v847 = vpop.f32.mrb[0].mxu0
        %848 = vmatprep.mubr.f32.mxu0 0.0
        %v849 = vand.u32 %v330, 4294901760
        %v850 = vsub.f32 %v330, %v849
        %851 = vmatmul.mubr.f32.gmra.mrb[0].mxu0 %v850
        %v852 = vpop.f32.mrb[0].mxu0
        %v853 = vadd.f32 %v701, %v852
        %v854 = vpop.f32.mrb[0].mxu0
        %855 = vmatprep.mubr.f32.mxu0 0.0
        %v856 = vand.u32 %v331, 4294901760
        %v857 = vsub.f32 %v331, %v856
        %858 = vmatmul.mubr.f32.gmra.mrb[0].mxu0 %v857
        %v859 = vpop.f32.mrb[0].mxu0
        %v860 = vadd.f32 %v707, %v859
        %v861 = vpop.f32.mrb[0].mxu0
        %862 = vdwg.mxu0
        %863 = vmatprep.subr.mxu0 0.0
        %v864 = vand.u32 %v340, 4294901760
        %865 = vmatpush1.msra.mxu0 %v864
        %866 = vmatprep.subr.mxu0 0.0
        %v867 = vand.u32 %v341, 4294901760
        %868 = vmatpush1.msra.mxu0 %v867
        %869 = vmatprep.subr.mxu0 0.0
        %v870 = vand.u32 %v342, 4294901760
        %871 = vmatpush1.msra.mxu0 %v870
        %872 = vmatprep.subr.mxu0 0.0
        %v873 = vand.u32 %v343, 4294901760
        %874 = vmatpush1.msra.mxu0 %v873
        %875 = vmatprep.subr.mxu0 0.0
        %v876 = vand.u32 %v344, 4294901760
        %877 = vmatpush1.msra.mxu0 %v876
        %878 = vmatprep.subr.mxu0 0.0
        %v879 = vand.u32 %v345, 4294901760
        %880 = vmatpush1.msra.mxu0 %v879
        %881 = vmatprep.subr.mxu0 0.0
        %v882 = vand.u32 %v346, 4294901760
        %883 = vmatpush1.msra.mxu0 %v882
        %884 = vmatprep.subr.mxu0 0.0
        %v885 = vand.u32 %v347, 4294901760
        %886 = vmatpush1.msra.mxu0 %v885
        %887 = vmatprep.subr.mxu0 0.0
        %v888 = vand.u32 %v348, 4294901760
        %889 = vmatpush1.msra.mxu0 %v888
        %890 = vmatprep.subr.mxu0 0.0
        %v891 = vand.u32 %v349, 4294901760
        %892 = vmatpush1.msra.mxu0 %v891
        %893 = vmatprep.subr.mxu0 0.0
        %v894 = vand.u32 %v350, 4294901760
        %895 = vmatpush1.msra.mxu0 %v894
        %896 = vmatprep.subr.mxu0 0.0
        %v897 = vand.u32 %v351, 4294901760
        %898 = vmatpush1.msra.mxu0 %v897
        %899 = vmatprep.subr.mxu0 0.0
        %v900 = vand.u32 %v352, 4294901760
        %901 = vmatpush1.msra.mxu0 %v900
        %902 = vmatprep.subr.mxu0 0.0
        %v903 = vand.u32 %v353, 4294901760
        %904 = vmatpush1.msra.mxu0 %v903
        %905 = vmatprep.subr.mxu0 0.0
        %v906 = vand.u32 %v354, 4294901760
        %907 = vmatpush1.msra.mxu0 %v906
        %908 = vmatprep.subr.mxu0 0.0
        %v909 = vand.u32 %v355, 4294901760
        %910 = vmatpush1.msra.mxu0 %v909
        %911 = vmatprep.subr.mxu0 0.0
        %912 = vmatpush1.msra.mxu0 0.0
        %913 = vmatprep.subr.mxu0 0.0
        %914 = vmatpush1.msra.mxu0 0.0
        %915 = vmatprep.subr.mxu0 0.0
        %916 = vmatpush1.msra.mxu0 0.0
        %917 = vmatprep.subr.mxu0 0.0
        %918 = vmatpush1.msra.mxu0 0.0
        %919 = vmatprep.subr.mxu0 0.0
        %920 = vmatpush1.msra.mxu0 0.0
        %921 = vmatprep.subr.mxu0 0.0
        %922 = vmatpush1.msra.mxu0 0.0
        %923 = vmatprep.subr.mxu0 0.0
        %924 = vmatpush1.msra.mxu0 0.0
        %925 = vmatprep.subr.mxu0 0.0
        %926 = vmatpush1.msra.mxu0 0.0
        %927 = vmatprep.subr.mxu0 0.0
        %928 = vmatpush1.msra.mxu0 0.0
        %929 = vmatprep.subr.mxu0 0.0
        %930 = vmatpush1.msra.mxu0 0.0
        %931 = vmatprep.subr.mxu0 0.0
        %932 = vmatpush1.msra.mxu0 0.0
        %933 = vmatprep.subr.mxu0 0.0
        %934 = vmatpush1.msra.mxu0 0.0
        %935 = vmatprep.subr.mxu0 0.0
        %936 = vmatpush1.msra.mxu0 0.0
        %937 = vmatprep.subr.mxu0 0.0
        %938 = vmatpush1.msra.mxu0 0.0
        %939 = vmatprep.subr.mxu0 0.0
        %940 = vmatpush1.msra.mxu0 0.0
        %941 = vmatprep.subr.mxu0 0.0
        %942 = vmatpush1.msra.mxu0 0.0
        %943 = vmatprep.mubr.f32.mxu0 0.0
        %v944 = vand.u32 %v324, 4294901760
        %v945 = vsub.f32 %v324, %v944
        %v946 = vand.u32 %v945, 4294901760
        %947 = vmatmul.mubr.f32.gmra.mrb[0].mxu0 %v946
        %v948 = vpop.f32.mrb[0].mxu0
        %v949 = vadd.f32 %v811, %v948
        %v950 = vpop.f32.mrb[0].mxu0
        %951 = vmatprep.mubr.f32.mxu0 0.0
        %v952 = vand.u32 %v325, 4294901760
        %v953 = vsub.f32 %v325, %v952
        %v954 = vand.u32 %v953, 4294901760
        %955 = vmatmul.mubr.f32.gmra.mrb[0].mxu0 %v954
        %v956 = vpop.f32.mrb[0].mxu0
        %v957 = vadd.f32 %v818, %v956
        %v958 = vpop.f32.mrb[0].mxu0
        %959 = vmatprep.mubr.f32.mxu0 0.0
        %v960 = vand.u32 %v326, 4294901760
        %v961 = vsub.f32 %v326, %v960
        %v962 = vand.u32 %v961, 4294901760
        %963 = vmatmul.mubr.f32.gmra.mrb[0].mxu0 %v962
        %v964 = vpop.f32.mrb[0].mxu0
        %v965 = vadd.f32 %v825, %v964
        %v966 = vpop.f32.mrb[0].mxu0
        %967 = vmatprep.mubr.f32.mxu0 0.0
        %v968 = vand.u32 %v327, 4294901760
        %v969 = vsub.f32 %v327, %v968
        %v970 = vand.u32 %v969, 4294901760
        %971 = vmatmul.mubr.f32.gmra.mrb[0].mxu0 %v970
        %v972 = vpop.f32.mrb[0].mxu0
        %v973 = vadd.f32 %v832, %v972
        %v974 = vpop.f32.mrb[0].mxu0
        %975 = vmatprep.mubr.f32.mxu0 0.0
        %v976 = vand.u32 %v328, 4294901760
        %v977 = vsub.f32 %v328, %v976
        %v978 = vand.u32 %v977, 4294901760
        %979 = vmatmul.mubr.f32.gmra.mrb[0].mxu0 %v978
        %v980 = vpop.f32.mrb[0].mxu0
        %v981 = vadd.f32 %v839, %v980
        %v982 = vpop.f32.mrb[0].mxu0
        %983 = vmatprep.mubr.f32.mxu0 0.0
        %v984 = vand.u32 %v329, 4294901760
        %v985 = vsub.f32 %v329, %v984
        %v986 = vand.u32 %v985, 4294901760
        %987 = vmatmul.mubr.f32.gmra.mrb[0].mxu0 %v986
        %v988 = vpop.f32.mrb[0].mxu0
        %v989 = vadd.f32 %v846, %v988
        %v990 = vpop.f32.mrb[0].mxu0
        %991 = vmatprep.mubr.f32.mxu0 0.0
        %v992 = vand.u32 %v330, 4294901760
        %v993 = vsub.f32 %v330, %v992
        %v994 = vand.u32 %v993, 4294901760
        %995 = vmatmul.mubr.f32.gmra.mrb[0].mxu0 %v994
        %v996 = vpop.f32.mrb[0].mxu0
        %v997 = vadd.f32 %v853, %v996
        %v998 = vpop.f32.mrb[0].mxu0
        %999 = vmatprep.mubr.f32.mxu0 0.0
        %v1000 = vand.u32 %v331, 4294901760
        %v1001 = vsub.f32 %v331, %v1000
        %v1002 = vand.u32 %v1001, 4294901760
        %1003 = vmatmul.mubr.f32.gmra.mrb[0].mxu0 %v1002
        %v1004 = vpop.f32.mrb[0].mxu0
        %v1005 = vadd.f32 %v860, %v1004
        %v1006 = vpop.f32.mrb[0].mxu0
        %1007 = vdwg.mxu0
        %1008 = vmatprep.subr.mxu0 0.0
        %v1009 = vand.u32 %v340, 4294901760
        %v1010 = vsub.f32 %v340, %v1009
        %v1011 = vand.u32 %v1010, 4294901760
        %1012 = vmatpush1.msra.mxu0 %v1011
        %1013 = vmatprep.subr.mxu0 0.0
        %v1014 = vand.u32 %v341, 4294901760
        %v1015 = vsub.f32 %v341, %v1014
        %v1016 = vand.u32 %v1015, 4294901760
        %1017 = vmatpush1.msra.mxu0 %v1016
        %1018 = vmatprep.subr.mxu0 0.0
        %v1019 = vand.u32 %v342, 4294901760
        %v1020 = vsub.f32 %v342, %v1019
        %v1021 = vand.u32 %v1020, 4294901760
        %1022 = vmatpush1.msra.mxu0 %v1021
        %1023 = vmatprep.subr.mxu0 0.0
        %v1024 = vand.u32 %v343, 4294901760
        %v1025 = vsub.f32 %v343, %v1024
        %v1026 = vand.u32 %v1025, 4294901760
        %1027 = vmatpush1.msra.mxu0 %v1026
        %1028 = vmatprep.subr.mxu0 0.0
        %v1029 = vand.u32 %v344, 4294901760
        %v1030 = vsub.f32 %v344, %v1029
        %v1031 = vand.u32 %v1030, 4294901760
        %1032 = vmatpush1.msra.mxu0 %v1031
        %1033 = vmatprep.subr.mxu0 0.0
        %v1034 = vand.u32 %v345, 4294901760
        %v1035 = vsub.f32 %v345, %v1034
        %v1036 = vand.u32 %v1035, 4294901760
        %1037 = vmatpush1.msra.mxu0 %v1036
        %1038 = vmatprep.subr.mxu0 0.0
        %v1039 = vand.u32 %v346, 4294901760
        %v1040 = vsub.f32 %v346, %v1039
        %v1041 = vand.u32 %v1040, 4294901760
        %1042 = vmatpush1.msra.mxu0 %v1041
        %1043 = vmatprep.subr.mxu0 0.0
        %v1044 = vand.u32 %v347, 4294901760
        %v1045 = vsub.f32 %v347, %v1044
        %v1046 = vand.u32 %v1045, 4294901760
        %1047 = vmatpush1.msra.mxu0 %v1046
        %1048 = vmatprep.subr.mxu0 0.0
        %v1049 = vand.u32 %v348, 4294901760
        %v1050 = vsub.f32 %v348, %v1049
        %v1051 = vand.u32 %v1050, 4294901760
        %1052 = vmatpush1.msra.mxu0 %v1051
        %1053 = vmatprep.subr.mxu0 0.0
        %v1054 = vand.u32 %v349, 4294901760
        %v1055 = vsub.f32 %v349, %v1054
        %v1056 = vand.u32 %v1055, 4294901760
        %1057 = vmatpush1.msra.mxu0 %v1056
        %1058 = vmatprep.subr.mxu0 0.0
        %v1059 = vand.u32 %v350, 4294901760
        %v1060 = vsub.f32 %v350, %v1059
        %v1061 = vand.u32 %v1060, 4294901760
        %1062 = vmatpush1.msra.mxu0 %v1061
        %1063 = vmatprep.subr.mxu0 0.0
        %v1064 = vand.u32 %v351, 4294901760
        %v1065 = vsub.f32 %v351, %v1064
        %v1066 = vand.u32 %v1065, 4294901760
        %1067 = vmatpush1.msra.mxu0 %v1066
        %1068 = vmatprep.subr.mxu0 0.0
        %v1069 = vand.u32 %v352, 4294901760
        %v1070 = vsub.f32 %v352, %v1069
        %v1071 = vand.u32 %v1070, 4294901760
        %1072 = vmatpush1.msra.mxu0 %v1071
        %1073 = vmatprep.subr.mxu0 0.0
        %v1074 = vand.u32 %v353, 4294901760
        %v1075 = vsub.f32 %v353, %v1074
        %v1076 = vand.u32 %v1075, 4294901760
        %1077 = vmatpush1.msra.mxu0 %v1076
        %1078 = vmatprep.subr.mxu0 0.0
        %v1079 = vand.u32 %v354, 4294901760
        %v1080 = vsub.f32 %v354, %v1079
        %v1081 = vand.u32 %v1080, 4294901760
        %1082 = vmatpush1.msra.mxu0 %v1081
        %1083 = vmatprep.subr.mxu0 0.0
        %v1084 = vand.u32 %v355, 4294901760
        %v1085 = vsub.f32 %v355, %v1084
        %v1086 = vand.u32 %v1085, 4294901760
        %1087 = vmatpush1.msra.mxu0 %v1086
        %1088 = vmatprep.subr.mxu0 0.0
        %1089 = vmatpush1.msra.mxu0 0.0
        %1090 = vmatprep.subr.mxu0 0.0
        %1091 = vmatpush1.msra.mxu0 0.0
        %1092 = vmatprep.subr.mxu0 0.0
        %1093 = vmatpush1.msra.mxu0 0.0
        %1094 = vmatprep.subr.mxu0 0.0
        %1095 = vmatpush1.msra.mxu0 0.0
        %1096 = vmatprep.subr.mxu0 0.0
        %1097 = vmatpush1.msra.mxu0 0.0
        %1098 = vmatprep.subr.mxu0 0.0
        %1099 = vmatpush1.msra.mxu0 0.0
        %1100 = vmatprep.subr.mxu0 0.0
        %1101 = vmatpush1.msra.mxu0 0.0
        %1102 = vmatprep.subr.mxu0 0.0
        %1103 = vmatpush1.msra.mxu0 0.0
        %1104 = vmatprep.subr.mxu0 0.0
        %1105 = vmatpush1.msra.mxu0 0.0
        %1106 = vmatprep.subr.mxu0 0.0
        %1107 = vmatpush1.msra.mxu0 0.0
        %1108 = vmatprep.subr.mxu0 0.0
        %1109 = vmatpush1.msra.mxu0 0.0
        %1110 = vmatprep.subr.mxu0 0.0
        %1111 = vmatpush1.msra.mxu0 0.0
        %1112 = vmatprep.subr.mxu0 0.0
        %1113 = vmatpush1.msra.mxu0 0.0
        %1114 = vmatprep.subr.mxu0 0.0
        %1115 = vmatpush1.msra.mxu0 0.0
        %1116 = vmatprep.subr.mxu0 0.0
        %1117 = vmatpush1.msra.mxu0 0.0
        %1118 = vmatprep.subr.mxu0 0.0
        %1119 = vmatpush1.msra.mxu0 0.0
        %1120 = vmatprep.mubr.f32.mxu0 0.0
        %v1121 = vand.u32 %v324, 4294901760
        %1122 = vmatmul.mubr.f32.gmra.mrb[0].mxu0 %v1121
        %v1123 = vpop.f32.mrb[0].mxu0
        %v1124 = vadd.f32 %v949, %v1123
        %v1125 = vpop.f32.mrb[0].mxu0
        %1126 = vmatprep.mubr.f32.mxu0 0.0
        %v1127 = vand.u32 %v325, 4294901760
        %1128 = vmatmul.mubr.f32.gmra.mrb[0].mxu0 %v1127
        %v1129 = vpop.f32.mrb[0].mxu0
        %v1130 = vadd.f32 %v957, %v1129
        %v1131 = vpop.f32.mrb[0].mxu0
        %1132 = vmatprep.mubr.f32.mxu0 0.0
        %v1133 = vand.u32 %v326, 4294901760
        %1134 = vmatmul.mubr.f32.gmra.mrb[0].mxu0 %v1133
        %v1135 = vpop.f32.mrb[0].mxu0
        %v1136 = vadd.f32 %v965, %v1135
        %v1137 = vpop.f32.mrb[0].mxu0
        %1138 = vmatprep.mubr.f32.mxu0 0.0
        %v1139 = vand.u32 %v327, 4294901760
        %1140 = vmatmul.mubr.f32.gmra.mrb[0].mxu0 %v1139
        %v1141 = vpop.f32.mrb[0].mxu0
        %v1142 = vadd.f32 %v973, %v1141
        %v1143 = vpop.f32.mrb[0].mxu0
        %1144 = vmatprep.mubr.f32.mxu0 0.0
        %v1145 = vand.u32 %v328, 4294901760
        %1146 = vmatmul.mubr.f32.gmra.mrb[0].mxu0 %v1145
        %v1147 = vpop.f32.mrb[0].mxu0
        %v1148 = vadd.f32 %v981, %v1147
        %v1149 = vpop.f32.mrb[0].mxu0
        %1150 = vmatprep.mubr.f32.mxu0 0.0
        %v1151 = vand.u32 %v329, 4294901760
        %1152 = vmatmul.mubr.f32.gmra.mrb[0].mxu0 %v1151
        %v1153 = vpop.f32.mrb[0].mxu0
        %v1154 = vadd.f32 %v989, %v1153
        %v1155 = vpop.f32.mrb[0].mxu0
        %1156 = vmatprep.mubr.f32.mxu0 0.0
        %v1157 = vand.u32 %v330, 4294901760
        %1158 = vmatmul.mubr.f32.gmra.mrb[0].mxu0 %v1157
        %v1159 = vpop.f32.mrb[0].mxu0
        %v1160 = vadd.f32 %v997, %v1159
        %v1161 = vpop.f32.mrb[0].mxu0
        %1162 = vmatprep.mubr.f32.mxu0 0.0
        %v1163 = vand.u32 %v331, 4294901760
        %1164 = vmatmul.mubr.f32.gmra.mrb[0].mxu0 %v1163
        %v1165 = vpop.f32.mrb[0].mxu0
        %v1166 = vadd.f32 %v1005, %v1165
        %v1167 = vpop.f32.mrb[0].mxu0
        %1168 = vdwg.mxu0
        %1169 = vmatprep.subr.mxu0 0.0
        %v1170 = vand.u32 %v340, 4294901760
        %1171 = vmatpush1.msra.mxu0 %v1170
        %1172 = vmatprep.subr.mxu0 0.0
        %v1173 = vand.u32 %v341, 4294901760
        %1174 = vmatpush1.msra.mxu0 %v1173
        %1175 = vmatprep.subr.mxu0 0.0
        %v1176 = vand.u32 %v342, 4294901760
        %1177 = vmatpush1.msra.mxu0 %v1176
        %1178 = vmatprep.subr.mxu0 0.0
        %v1179 = vand.u32 %v343, 4294901760
        %1180 = vmatpush1.msra.mxu0 %v1179
        %1181 = vmatprep.subr.mxu0 0.0
        %v1182 = vand.u32 %v344, 4294901760
        %1183 = vmatpush1.msra.mxu0 %v1182
        %1184 = vmatprep.subr.mxu0 0.0
        %v1185 = vand.u32 %v345, 4294901760
        %1186 = vmatpush1.msra.mxu0 %v1185
        %1187 = vmatprep.subr.mxu0 0.0
        %v1188 = vand.u32 %v346, 4294901760
        %1189 = vmatpush1.msra.mxu0 %v1188
        %1190 = vmatprep.subr.mxu0 0.0
        %v1191 = vand.u32 %v347, 4294901760
        %1192 = vmatpush1.msra.mxu0 %v1191
        %1193 = vmatprep.subr.mxu0 0.0
        %v1194 = vand.u32 %v348, 4294901760
        %1195 = vmatpush1.msra.mxu0 %v1194
        %1196 = vmatprep.subr.mxu0 0.0
        %v1197 = vand.u32 %v349, 4294901760
        %1198 = vmatpush1.msra.mxu0 %v1197
        %1199 = vmatprep.subr.mxu0 0.0
        %v1200 = vand.u32 %v350, 4294901760
        %1201 = vmatpush1.msra.mxu0 %v1200
        %1202 = vmatprep.subr.mxu0 0.0
        %v1203 = vand.u32 %v351, 4294901760
        %1204 = vmatpush1.msra.mxu0 %v1203
        %1205 = vmatprep.subr.mxu0 0.0
        %v1206 = vand.u32 %v352, 4294901760
        %1207 = vmatpush1.msra.mxu0 %v1206
        %1208 = vmatprep.subr.mxu0 0.0
        %v1209 = vand.u32 %v353, 4294901760
        %1210 = vmatpush1.msra.mxu0 %v1209
        %1211 = vmatprep.subr.mxu0 0.0
        %v1212 = vand.u32 %v354, 4294901760
        %1213 = vmatpush1.msra.mxu0 %v1212
        %1214 = vmatprep.subr.mxu0 0.0
        %v1215 = vand.u32 %v355, 4294901760
        %1216 = vmatpush1.msra.mxu0 %v1215
        %1217 = vmatprep.subr.mxu0 0.0
        %1218 = vmatpush1.msra.mxu0 0.0
        %1219 = vmatprep.subr.mxu0 0.0
        %1220 = vmatpush1.msra.mxu0 0.0
        %1221 = vmatprep.subr.mxu0 0.0
        %1222 = vmatpush1.msra.mxu0 0.0
        %1223 = vmatprep.subr.mxu0 0.0
        %1224 = vmatpush1.msra.mxu0 0.0
        %1225 = vmatprep.subr.mxu0 0.0
        %1226 = vmatpush1.msra.mxu0 0.0
        %1227 = vmatprep.subr.mxu0 0.0
        %1228 = vmatpush1.msra.mxu0 0.0
        %1229 = vmatprep.subr.mxu0 0.0
        %1230 = vmatpush1.msra.mxu0 0.0
        %1231 = vmatprep.subr.mxu0 0.0
        %1232 = vmatpush1.msra.mxu0 0.0
        %1233 = vmatprep.subr.mxu0 0.0
        %1234 = vmatpush1.msra.mxu0 0.0
        %1235 = vmatprep.subr.mxu0 0.0
        %1236 = vmatpush1.msra.mxu0 0.0
        %1237 = vmatprep.subr.mxu0 0.0
        %1238 = vmatpush1.msra.mxu0 0.0
        %1239 = vmatprep.subr.mxu0 0.0
        %1240 = vmatpush1.msra.mxu0 0.0
        %1241 = vmatprep.subr.mxu0 0.0
        %1242 = vmatpush1.msra.mxu0 0.0
        %1243 = vmatprep.subr.mxu0 0.0
        %1244 = vmatpush1.msra.mxu0 0.0
        %1245 = vmatprep.subr.mxu0 0.0
        %1246 = vmatpush1.msra.mxu0 0.0
        %1247 = vmatprep.subr.mxu0 0.0
        %1248 = vmatpush1.msra.mxu0 0.0
        %1249 = vmatprep.mubr.f32.mxu0 0.0
        %v1250 = vand.u32 %v324, 4294901760
        %1251 = vmatmul.mubr.f32.gmra.mrb[0].mxu0 %v1250
        %v1252 = vpop.f32.mrb[0].mxu0
        %v1253 = vadd.f32 %v1124, %v1252
        %v1254 = vpop.f32.mrb[0].mxu0
        %1255 = vmatprep.mubr.f32.mxu0 0.0
        %v1256 = vand.u32 %v325, 4294901760
        %1257 = vmatmul.mubr.f32.gmra.mrb[0].mxu0 %v1256
        %v1258 = vpop.f32.mrb[0].mxu0
        %v1259 = vadd.f32 %v1130, %v1258
        %v1260 = vpop.f32.mrb[0].mxu0
        %1261 = vmatprep.mubr.f32.mxu0 0.0
        %v1262 = vand.u32 %v326, 4294901760
        %1263 = vmatmul.mubr.f32.gmra.mrb[0].mxu0 %v1262
        %v1264 = vpop.f32.mrb[0].mxu0
        %v1265 = vadd.f32 %v1136, %v1264
        %v1266 = vpop.f32.mrb[0].mxu0
        %1267 = vmatprep.mubr.f32.mxu0 0.0
        %v1268 = vand.u32 %v327, 4294901760
        %1269 = vmatmul.mubr.f32.gmra.mrb[0].mxu0 %v1268
        %v1270 = vpop.f32.mrb[0].mxu0
        %v1271 = vadd.f32 %v1142, %v1270
        %v1272 = vpop.f32.mrb[0].mxu0
        %1273 = vmatprep.mubr.f32.mxu0 0.0
        %v1274 = vand.u32 %v328, 4294901760
        %1275 = vmatmul.mubr.f32.gmra.mrb[0].mxu0 %v1274
        %v1276 = vpop.f32.mrb[0].mxu0
        %v1277 = vadd.f32 %v1148, %v1276
        %v1278 = vpop.f32.mrb[0].mxu0
        %1279 = vmatprep.mubr.f32.mxu0 0.0
        %v1280 = vand.u32 %v329, 4294901760
        %1281 = vmatmul.mubr.f32.gmra.mrb[0].mxu0 %v1280
        %v1282 = vpop.f32.mrb[0].mxu0
        %v1283 = vadd.f32 %v1154, %v1282
        %v1284 = vpop.f32.mrb[0].mxu0
        %1285 = vmatprep.mubr.f32.mxu0 0.0
        %v1286 = vand.u32 %v330, 4294901760
        %1287 = vmatmul.mubr.f32.gmra.mrb[0].mxu0 %v1286
        %v1288 = vpop.f32.mrb[0].mxu0
        %v1289 = vadd.f32 %v1160, %v1288
        %v1290 = vpop.f32.mrb[0].mxu0
        %1291 = vmatprep.mubr.f32.mxu0 0.0
        %v1292 = vand.u32 %v331, 4294901760
        %1293 = vmatmul.mubr.f32.gmra.mrb[0].mxu0 %v1292
        %v1294 = vpop.f32.mrb[0].mxu0
        %v1295 = vadd.f32 %v1166, %v1294
        %v1296 = vpop.f32.mrb[0].mxu0
        %1297 = vdwg.mxu0
        %v1298 = vld [vmem:[#allocation8] sm:$0xff]
        %v1299 = vld [vmem:[#allocation8 + $0x8] sm:$0xff]
        %v1300 = vld [vmem:[#allocation8 + $0x10] sm:$0xff]
        %v1301 = vld [vmem:[#allocation8 + $0x18] sm:$0xff]
        %v1302 = vld [vmem:[#allocation8 + $0x20] sm:$0xff]
        %v1303 = vld [vmem:[#allocation8 + $0x28] sm:$0xff]
        %v1304 = vld [vmem:[#allocation8 + $0x30] sm:$0xff]
        %v1305 = vld [vmem:[#allocation8 + $0x38] sm:$0xff]
        %v1306 = vld [vmem:[#allocation8 + $0x40] sm:$0xff]
        %v1307 = vld [vmem:[#allocation8 + $0x48] sm:$0xff]
        %v1308 = vld [vmem:[#allocation8 + $0x50] sm:$0xff]
        %v1309 = vld [vmem:[#allocation8 + $0x58] sm:$0xff]
        %v1310 = vld [vmem:[#allocation8 + $0x60] sm:$0xff]
        %v1311 = vld [vmem:[#allocation8 + $0x68] sm:$0xff]
        %v1312 = vld [vmem:[#allocation8 + $0x70] sm:$0xff]
        %v1313 = vld [vmem:[#allocation8 + $0x78] sm:$0xff]
        %1314 = vmatprep.subr.mxu0 0.0
        %v1315 = vand.u32 %v1298, 4294901760
        %1316 = vmatpush1.msra.mxu0 %v1315
        %1317 = vmatprep.subr.mxu0 0.0
        %v1318 = vand.u32 %v1299, 4294901760
        %1319 = vmatpush1.msra.mxu0 %v1318
        %1320 = vmatprep.subr.mxu0 0.0
        %v1321 = vand.u32 %v1300, 4294901760
        %1322 = vmatpush1.msra.mxu0 %v1321
        %1323 = vmatprep.subr.mxu0 0.0
        %v1324 = vand.u32 %v1301, 4294901760
        %1325 = vmatpush1.msra.mxu0 %v1324
        %1326 = vmatprep.subr.mxu0 0.0
        %v1327 = vand.u32 %v1302, 4294901760
        %1328 = vmatpush1.msra.mxu0 %v1327
        %1329 = vmatprep.subr.mxu0 0.0
        %v1330 = vand.u32 %v1303, 4294901760
        %1331 = vmatpush1.msra.mxu0 %v1330
        %1332 = vmatprep.subr.mxu0 0.0
        %v1333 = vand.u32 %v1304, 4294901760
        %1334 = vmatpush1.msra.mxu0 %v1333
        %1335 = vmatprep.subr.mxu0 0.0
        %v1336 = vand.u32 %v1305, 4294901760
        %1337 = vmatpush1.msra.mxu0 %v1336
        %1338 = vmatprep.subr.mxu0 0.0
        %v1339 = vand.u32 %v1306, 4294901760
        %1340 = vmatpush1.msra.mxu0 %v1339
        %1341 = vmatprep.subr.mxu0 0.0
        %v1342 = vand.u32 %v1307, 4294901760
        %1343 = vmatpush1.msra.mxu0 %v1342
        %1344 = vmatprep.subr.mxu0 0.0
        %v1345 = vand.u32 %v1308, 4294901760
        %1346 = vmatpush1.msra.mxu0 %v1345
        %1347 = vmatprep.subr.mxu0 0.0
        %v1348 = vand.u32 %v1309, 4294901760
        %1349 = vmatpush1.msra.mxu0 %v1348
        %1350 = vmatprep.subr.mxu0 0.0
        %v1351 = vand.u32 %v1310, 4294901760
        %1352 = vmatpush1.msra.mxu0 %v1351
        %1353 = vmatprep.subr.mxu0 0.0
        %v1354 = vand.u32 %v1311, 4294901760
        %1355 = vmatpush1.msra.mxu0 %v1354
        %1356 = vmatprep.subr.mxu0 0.0
        %v1357 = vand.u32 %v1312, 4294901760
        %1358 = vmatpush1.msra.mxu0 %v1357
        %1359 = vmatprep.subr.mxu0 0.0
        %v1360 = vand.u32 %v1313, 4294901760
        %1361 = vmatpush1.msra.mxu0 %v1360
        %1362 = vmatprep.subr.mxu0 0.0
        %1363 = vmatpush1.msra.mxu0 0.0
        %1364 = vmatprep.subr.mxu0 0.0
        %1365 = vmatpush1.msra.mxu0 0.0
        %1366 = vmatprep.subr.mxu0 0.0
        %1367 = vmatpush1.msra.mxu0 0.0
        %1368 = vmatprep.subr.mxu0 0.0
        %1369 = vmatpush1.msra.mxu0 0.0
        %1370 = vmatprep.subr.mxu0 0.0
        %1371 = vmatpush1.msra.mxu0 0.0
        %1372 = vmatprep.subr.mxu0 0.0
        %1373 = vmatpush1.msra.mxu0 0.0
        %1374 = vmatprep.subr.mxu0 0.0
        %1375 = vmatpush1.msra.mxu0 0.0
        %1376 = vmatprep.subr.mxu0 0.0
        %1377 = vmatpush1.msra.mxu0 0.0
        %1378 = vmatprep.subr.mxu0 0.0
        %1379 = vmatpush1.msra.mxu0 0.0
        %1380 = vmatprep.subr.mxu0 0.0
        %1381 = vmatpush1.msra.mxu0 0.0
        %1382 = vmatprep.subr.mxu0 0.0
        %1383 = vmatpush1.msra.mxu0 0.0
        %1384 = vmatprep.subr.mxu0 0.0
        %1385 = vmatpush1.msra.mxu0 0.0
        %1386 = vmatprep.subr.mxu0 0.0
        %1387 = vmatpush1.msra.mxu0 0.0
        %1388 = vmatprep.subr.mxu0 0.0
        %1389 = vmatpush1.msra.mxu0 0.0
        %1390 = vmatprep.subr.mxu0 0.0
        %1391 = vmatpush1.msra.mxu0 0.0
        %1392 = vmatprep.subr.mxu0 0.0
        %1393 = vmatpush1.msra.mxu0 0.0
        %1394 = vmatprep.mubr.f32.mxu0 0.0
        %v1395 = vand.u32 %v332, 4294901760
        %v1396 = vsub.f32 %v332, %v1395
        %v1397 = vand.u32 %v1396, 4294901760
        %v1398 = vsub.f32 %v1396, %v1397
        %v1399 = vand.u32 %v1398, 4294901760
        %1400 = vmatmul.mubr.f32.gmra.mrb[0].mxu0 %v1399
        %v1401 = vpop.f32.mrb[0].mxu0
        %v1402 = vadd.f32 0.0, %v1401
        %v1403 = vpop.f32.mrb[0].mxu0
        %1404 = vmatprep.mubr.f32.mxu0 0.0
        %v1405 = vand.u32 %v333, 4294901760
        %v1406 = vsub.f32 %v333, %v1405
        %v1407 = vand.u32 %v1406, 4294901760
        %v1408 = vsub.f32 %v1406, %v1407
        %v1409 = vand.u32 %v1408, 4294901760
        %1410 = vmatmul.mubr.f32.gmra.mrb[0].mxu0 %v1409
        %v1411 = vpop.f32.mrb[0].mxu0
        %v1412 = vadd.f32 0.0, %v1411
        %v1413 = vpop.f32.mrb[0].mxu0
        %1414 = vmatprep.mubr.f32.mxu0 0.0
        %v1415 = vand.u32 %v334, 4294901760
        %v1416 = vsub.f32 %v334, %v1415
        %v1417 = vand.u32 %v1416, 4294901760
        %v1418 = vsub.f32 %v1416, %v1417
        %v1419 = vand.u32 %v1418, 4294901760
        %1420 = vmatmul.mubr.f32.gmra.mrb[0].mxu0 %v1419
        %v1421 = vpop.f32.mrb[0].mxu0
        %v1422 = vadd.f32 0.0, %v1421
        %v1423 = vpop.f32.mrb[0].mxu0
        %1424 = vmatprep.mubr.f32.mxu0 0.0
        %v1425 = vand.u32 %v335, 4294901760
        %v1426 = vsub.f32 %v335, %v1425
        %v1427 = vand.u32 %v1426, 4294901760
        %v1428 = vsub.f32 %v1426, %v1427
        %v1429 = vand.u32 %v1428, 4294901760
        %1430 = vmatmul.mubr.f32.gmra.mrb[0].mxu0 %v1429
        %v1431 = vpop.f32.mrb[0].mxu0
        %v1432 = vadd.f32 0.0, %v1431
        %v1433 = vpop.f32.mrb[0].mxu0
        %1434 = vmatprep.mubr.f32.mxu0 0.0
        %v1435 = vand.u32 %v336, 4294901760
        %v1436 = vsub.f32 %v336, %v1435
        %v1437 = vand.u32 %v1436, 4294901760
        %v1438 = vsub.f32 %v1436, %v1437
        %v1439 = vand.u32 %v1438, 4294901760
        %1440 = vmatmul.mubr.f32.gmra.mrb[0].mxu0 %v1439
        %v1441 = vpop.f32.mrb[0].mxu0
        %v1442 = vadd.f32 0.0, %v1441
        %v1443 = vpop.f32.mrb[0].mxu0
        %1444 = vmatprep.mubr.f32.mxu0 0.0
        %v1445 = vand.u32 %v337, 4294901760
        %v1446 = vsub.f32 %v337, %v1445
        %v1447 = vand.u32 %v1446, 4294901760
        %v1448 = vsub.f32 %v1446, %v1447
        %v1449 = vand.u32 %v1448, 4294901760
        %1450 = vmatmul.mubr.f32.gmra.mrb[0].mxu0 %v1449
        %v1451 = vpop.f32.mrb[0].mxu0
        %v1452 = vadd.f32 0.0, %v1451
        %v1453 = vpop.f32.mrb[0].mxu0
        %1454 = vmatprep.mubr.f32.mxu0 0.0
        %v1455 = vand.u32 %v338, 4294901760
        %v1456 = vsub.f32 %v338, %v1455
        %v1457 = vand.u32 %v1456, 4294901760
        %v1458 = vsub.f32 %v1456, %v1457
        %v1459 = vand.u32 %v1458, 4294901760
        %1460 = vmatmul.mubr.f32.gmra.mrb[0].mxu0 %v1459
        %v1461 = vpop.f32.mrb[0].mxu0
        %v1462 = vadd.f32 0.0, %v1461
        %v1463 = vpop.f32.mrb[0].mxu0
        %1464 = vmatprep.mubr.f32.mxu0 0.0
        %v1465 = vand.u32 %v339, 4294901760
        %v1466 = vsub.f32 %v339, %v1465
        %v1467 = vand.u32 %v1466, 4294901760
        %v1468 = vsub.f32 %v1466, %v1467
        %v1469 = vand.u32 %v1468, 4294901760
        %1470 = vmatmul.mubr.f32.gmra.mrb[0].mxu0 %v1469
        %v1471 = vpop.f32.mrb[0].mxu0
        %v1472 = vadd.f32 0.0, %v1471
        %v1473 = vpop.f32.mrb[0].mxu0
        %1474 = vdwg.mxu0
        %1475 = vmatprep.subr.mxu0 0.0
        %v1476 = vand.u32 %v1298, 4294901760
        %v1477 = vsub.f32 %v1298, %v1476
        %v1478 = vand.u32 %v1477, 4294901760
        %v1479 = vsub.f32 %v1477, %v1478
        %v1480 = vand.u32 %v1479, 4294901760
        %1481 = vmatpush1.msra.mxu0 %v1480
        %1482 = vmatprep.subr.mxu0 0.0
        %v1483 = vand.u32 %v1299, 4294901760
        %v1484 = vsub.f32 %v1299, %v1483
        %v1485 = vand.u32 %v1484, 4294901760
        %v1486 = vsub.f32 %v1484, %v1485
        %v1487 = vand.u32 %v1486, 4294901760
        %1488 = vmatpush1.msra.mxu0 %v1487
        %1489 = vmatprep.subr.mxu0 0.0
        %v1490 = vand.u32 %v1300, 4294901760
        %v1491 = vsub.f32 %v1300, %v1490
        %v1492 = vand.u32 %v1491, 4294901760
        %v1493 = vsub.f32 %v1491, %v1492
        %v1494 = vand.u32 %v1493, 4294901760
        %1495 = vmatpush1.msra.mxu0 %v1494
        %1496 = vmatprep.subr.mxu0 0.0
        %v1497 = vand.u32 %v1301, 4294901760
        %v1498 = vsub.f32 %v1301, %v1497
        %v1499 = vand.u32 %v1498, 4294901760
        %v1500 = vsub.f32 %v1498, %v1499
        %v1501 = vand.u32 %v1500, 4294901760
        %1502 = vmatpush1.msra.mxu0 %v1501
        %1503 = vmatprep.subr.mxu0 0.0
        %v1504 = vand.u32 %v1302, 4294901760
        %v1505 = vsub.f32 %v1302, %v1504
        %v1506 = vand.u32 %v1505, 4294901760
        %v1507 = vsub.f32 %v1505, %v1506
        %v1508 = vand.u32 %v1507, 4294901760
        %1509 = vmatpush1.msra.mxu0 %v1508
        %1510 = vmatprep.subr.mxu0 0.0
        %v1511 = vand.u32 %v1303, 4294901760
        %v1512 = vsub.f32 %v1303, %v1511
        %v1513 = vand.u32 %v1512, 4294901760
        %v1514 = vsub.f32 %v1512, %v1513
        %v1515 = vand.u32 %v1514, 4294901760
        %1516 = vmatpush1.msra.mxu0 %v1515
        %1517 = vmatprep.subr.mxu0 0.0
        %v1518 = vand.u32 %v1304, 4294901760
        %v1519 = vsub.f32 %v1304, %v1518
        %v1520 = vand.u32 %v1519, 4294901760
        %v1521 = vsub.f32 %v1519, %v1520
        %v1522 = vand.u32 %v1521, 4294901760
        %1523 = vmatpush1.msra.mxu0 %v1522
        %1524 = vmatprep.subr.mxu0 0.0
        %v1525 = vand.u32 %v1305, 4294901760
        %v1526 = vsub.f32 %v1305, %v1525
        %v1527 = vand.u32 %v1526, 4294901760
        %v1528 = vsub.f32 %v1526, %v1527
        %v1529 = vand.u32 %v1528, 4294901760
        %1530 = vmatpush1.msra.mxu0 %v1529
        %1531 = vmatprep.subr.mxu0 0.0
        %v1532 = vand.u32 %v1306, 4294901760
        %v1533 = vsub.f32 %v1306, %v1532
        %v1534 = vand.u32 %v1533, 4294901760
        %v1535 = vsub.f32 %v1533, %v1534
        %v1536 = vand.u32 %v1535, 4294901760
        %1537 = vmatpush1.msra.mxu0 %v1536
        %1538 = vmatprep.subr.mxu0 0.0
        %v1539 = vand.u32 %v1307, 4294901760
        %v1540 = vsub.f32 %v1307, %v1539
        %v1541 = vand.u32 %v1540, 4294901760
        %v1542 = vsub.f32 %v1540, %v1541
        %v1543 = vand.u32 %v1542, 4294901760
        %1544 = vmatpush1.msra.mxu0 %v1543
        %1545 = vmatprep.subr.mxu0 0.0
        %v1546 = vand.u32 %v1308, 4294901760
        %v1547 = vsub.f32 %v1308, %v1546
        %v1548 = vand.u32 %v1547, 4294901760
        %v1549 = vsub.f32 %v1547, %v1548
        %v1550 = vand.u32 %v1549, 4294901760
        %1551 = vmatpush1.msra.mxu0 %v1550
        %1552 = vmatprep.subr.mxu0 0.0
        %v1553 = vand.u32 %v1309, 4294901760
        %v1554 = vsub.f32 %v1309, %v1553
        %v1555 = vand.u32 %v1554, 4294901760
        %v1556 = vsub.f32 %v1554, %v1555
        %v1557 = vand.u32 %v1556, 4294901760
        %1558 = vmatpush1.msra.mxu0 %v1557
        %1559 = vmatprep.subr.mxu0 0.0
        %v1560 = vand.u32 %v1310, 4294901760
        %v1561 = vsub.f32 %v1310, %v1560
        %v1562 = vand.u32 %v1561, 4294901760
        %v1563 = vsub.f32 %v1561, %v1562
        %v1564 = vand.u32 %v1563, 4294901760
        %1565 = vmatpush1.msra.mxu0 %v1564
        %1566 = vmatprep.subr.mxu0 0.0
        %v1567 = vand.u32 %v1311, 4294901760
        %v1568 = vsub.f32 %v1311, %v1567
        %v1569 = vand.u32 %v1568, 4294901760
        %v1570 = vsub.f32 %v1568, %v1569
        %v1571 = vand.u32 %v1570, 4294901760
        %1572 = vmatpush1.msra.mxu0 %v1571
        %1573 = vmatprep.subr.mxu0 0.0
        %v1574 = vand.u32 %v1312, 4294901760
        %v1575 = vsub.f32 %v1312, %v1574
        %v1576 = vand.u32 %v1575, 4294901760
        %v1577 = vsub.f32 %v1575, %v1576
        %v1578 = vand.u32 %v1577, 4294901760
        %1579 = vmatpush1.msra.mxu0 %v1578
        %1580 = vmatprep.subr.mxu0 0.0
        %v1581 = vand.u32 %v1313, 4294901760
        %v1582 = vsub.f32 %v1313, %v1581
        %v1583 = vand.u32 %v1582, 4294901760
        %v1584 = vsub.f32 %v1582, %v1583
        %v1585 = vand.u32 %v1584, 4294901760
        %1586 = vmatpush1.msra.mxu0 %v1585
        %1587 = vmatprep.subr.mxu0 0.0
        %1588 = vmatpush1.msra.mxu0 0.0
        %1589 = vmatprep.subr.mxu0 0.0
        %1590 = vmatpush1.msra.mxu0 0.0
        %1591 = vmatprep.subr.mxu0 0.0
        %1592 = vmatpush1.msra.mxu0 0.0
        %1593 = vmatprep.subr.mxu0 0.0
        %1594 = vmatpush1.msra.mxu0 0.0
        %1595 = vmatprep.subr.mxu0 0.0
        %1596 = vmatpush1.msra.mxu0 0.0
        %1597 = vmatprep.subr.mxu0 0.0
        %1598 = vmatpush1.msra.mxu0 0.0
        %1599 = vmatprep.subr.mxu0 0.0
        %1600 = vmatpush1.msra.mxu0 0.0
        %1601 = vmatprep.subr.mxu0 0.0
        %1602 = vmatpush1.msra.mxu0 0.0
        %1603 = vmatprep.subr.mxu0 0.0
        %1604 = vmatpush1.msra.mxu0 0.0
        %1605 = vmatprep.subr.mxu0 0.0
        %1606 = vmatpush1.msra.mxu0 0.0
        %1607 = vmatprep.subr.mxu0 0.0
        %1608 = vmatpush1.msra.mxu0 0.0
        %1609 = vmatprep.subr.mxu0 0.0
        %1610 = vmatpush1.msra.mxu0 0.0
        %1611 = vmatprep.subr.mxu0 0.0
        %1612 = vmatpush1.msra.mxu0 0.0
        %1613 = vmatprep.subr.mxu0 0.0
        %1614 = vmatpush1.msra.mxu0 0.0
        %1615 = vmatprep.subr.mxu0 0.0
        %1616 = vmatpush1.msra.mxu0 0.0
        %1617 = vmatprep.subr.mxu0 0.0
        %1618 = vmatpush1.msra.mxu0 0.0
        %1619 = vmatprep.mubr.f32.mxu0 0.0
        %v1620 = vand.u32 %v332, 4294901760
        %1621 = vmatmul.mubr.f32.gmra.mrb[0].mxu0 %v1620
        %v1622 = vpop.f32.mrb[0].mxu0
        %v1623 = vadd.f32 %v1402, %v1622
        %v1624 = vpop.f32.mrb[0].mxu0
        %1625 = vmatprep.mubr.f32.mxu0 0.0
        %v1626 = vand.u32 %v333, 4294901760
        %1627 = vmatmul.mubr.f32.gmra.mrb[0].mxu0 %v1626
        %v1628 = vpop.f32.mrb[0].mxu0
        %v1629 = vadd.f32 %v1412, %v1628
        %v1630 = vpop.f32.mrb[0].mxu0
        %1631 = vmatprep.mubr.f32.mxu0 0.0
        %v1632 = vand.u32 %v334, 4294901760
        %1633 = vmatmul.mubr.f32.gmra.mrb[0].mxu0 %v1632
        %v1634 = vpop.f32.mrb[0].mxu0
        %v1635 = vadd.f32 %v1422, %v1634
        %v1636 = vpop.f32.mrb[0].mxu0
        %1637 = vmatprep.mubr.f32.mxu0 0.0
        %v1638 = vand.u32 %v335, 4294901760
        %1639 = vmatmul.mubr.f32.gmra.mrb[0].mxu0 %v1638
        %v1640 = vpop.f32.mrb[0].mxu0
        %v1641 = vadd.f32 %v1432, %v1640
        %v1642 = vpop.f32.mrb[0].mxu0
        %1643 = vmatprep.mubr.f32.mxu0 0.0
        %v1644 = vand.u32 %v336, 4294901760
        %1645 = vmatmul.mubr.f32.gmra.mrb[0].mxu0 %v1644
        %v1646 = vpop.f32.mrb[0].mxu0
        %v1647 = vadd.f32 %v1442, %v1646
        %v1648 = vpop.f32.mrb[0].mxu0
        %1649 = vmatprep.mubr.f32.mxu0 0.0
        %v1650 = vand.u32 %v337, 4294901760
        %1651 = vmatmul.mubr.f32.gmra.mrb[0].mxu0 %v1650
        %v1652 = vpop.f32.mrb[0].mxu0
        %v1653 = vadd.f32 %v1452, %v1652
        %v1654 = vpop.f32.mrb[0].mxu0
        %1655 = vmatprep.mubr.f32.mxu0 0.0
        %v1656 = vand.u32 %v338, 4294901760
        %1657 = vmatmul.mubr.f32.gmra.mrb[0].mxu0 %v1656
        %v1658 = vpop.f32.mrb[0].mxu0
        %v1659 = vadd.f32 %v1462, %v1658
        %v1660 = vpop.f32.mrb[0].mxu0
        %1661 = vmatprep.mubr.f32.mxu0 0.0
        %v1662 = vand.u32 %v339, 4294901760
        %1663 = vmatmul.mubr.f32.gmra.mrb[0].mxu0 %v1662
        %v1664 = vpop.f32.mrb[0].mxu0
        %v1665 = vadd.f32 %v1472, %v1664
        %v1666 = vpop.f32.mrb[0].mxu0
        %1667 = vdwg.mxu0
        %1668 = vmatprep.subr.mxu0 0.0
        %v1669 = vand.u32 %v1298, 4294901760
        %v1670 = vsub.f32 %v1298, %v1669
        %1671 = vmatpush1.msra.mxu0 %v1670
        %1672 = vmatprep.subr.mxu0 0.0
        %v1673 = vand.u32 %v1299, 4294901760
        %v1674 = vsub.f32 %v1299, %v1673
        %1675 = vmatpush1.msra.mxu0 %v1674
        %1676 = vmatprep.subr.mxu0 0.0
        %v1677 = vand.u32 %v1300, 4294901760
        %v1678 = vsub.f32 %v1300, %v1677
        %1679 = vmatpush1.msra.mxu0 %v1678
        %1680 = vmatprep.subr.mxu0 0.0
        %v1681 = vand.u32 %v1301, 4294901760
        %v1682 = vsub.f32 %v1301, %v1681
        %1683 = vmatpush1.msra.mxu0 %v1682
        %1684 = vmatprep.subr.mxu0 0.0
        %v1685 = vand.u32 %v1302, 4294901760
        %v1686 = vsub.f32 %v1302, %v1685
        %1687 = vmatpush1.msra.mxu0 %v1686
        %1688 = vmatprep.subr.mxu0 0.0
        %v1689 = vand.u32 %v1303, 4294901760
        %v1690 = vsub.f32 %v1303, %v1689
        %1691 = vmatpush1.msra.mxu0 %v1690
        %1692 = vmatprep.subr.mxu0 0.0
        %v1693 = vand.u32 %v1304, 4294901760
        %v1694 = vsub.f32 %v1304, %v1693
        %1695 = vmatpush1.msra.mxu0 %v1694
        %1696 = vmatprep.subr.mxu0 0.0
        %v1697 = vand.u32 %v1305, 4294901760
        %v1698 = vsub.f32 %v1305, %v1697
        %1699 = vmatpush1.msra.mxu0 %v1698
        %1700 = vmatprep.subr.mxu0 0.0
        %v1701 = vand.u32 %v1306, 4294901760
        %v1702 = vsub.f32 %v1306, %v1701
        %1703 = vmatpush1.msra.mxu0 %v1702
        %1704 = vmatprep.subr.mxu0 0.0
        %v1705 = vand.u32 %v1307, 4294901760
        %v1706 = vsub.f32 %v1307, %v1705
        %1707 = vmatpush1.msra.mxu0 %v1706
        %1708 = vmatprep.subr.mxu0 0.0
        %v1709 = vand.u32 %v1308, 4294901760
        %v1710 = vsub.f32 %v1308, %v1709
        %1711 = vmatpush1.msra.mxu0 %v1710
        %1712 = vmatprep.subr.mxu0 0.0
        %v1713 = vand.u32 %v1309, 4294901760
        %v1714 = vsub.f32 %v1309, %v1713
        %1715 = vmatpush1.msra.mxu0 %v1714
        %1716 = vmatprep.subr.mxu0 0.0
        %v1717 = vand.u32 %v1310, 4294901760
        %v1718 = vsub.f32 %v1310, %v1717
        %1719 = vmatpush1.msra.mxu0 %v1718
        %1720 = vmatprep.subr.mxu0 0.0
        %v1721 = vand.u32 %v1311, 4294901760
        %v1722 = vsub.f32 %v1311, %v1721
        %1723 = vmatpush1.msra.mxu0 %v1722
        %1724 = vmatprep.subr.mxu0 0.0
        %v1725 = vand.u32 %v1312, 4294901760
        %v1726 = vsub.f32 %v1312, %v1725
        %1727 = vmatpush1.msra.mxu0 %v1726
        %1728 = vmatprep.subr.mxu0 0.0
        %v1729 = vand.u32 %v1313, 4294901760
        %v1730 = vsub.f32 %v1313, %v1729
        %1731 = vmatpush1.msra.mxu0 %v1730
        %1732 = vmatprep.subr.mxu0 0.0
        %1733 = vmatpush1.msra.mxu0 0.0
        %1734 = vmatprep.subr.mxu0 0.0
        %1735 = vmatpush1.msra.mxu0 0.0
        %1736 = vmatprep.subr.mxu0 0.0
        %1737 = vmatpush1.msra.mxu0 0.0
        %1738 = vmatprep.subr.mxu0 0.0
        %1739 = vmatpush1.msra.mxu0 0.0
        %1740 = vmatprep.subr.mxu0 0.0
        %1741 = vmatpush1.msra.mxu0 0.0
        %1742 = vmatprep.subr.mxu0 0.0
        %1743 = vmatpush1.msra.mxu0 0.0
        %1744 = vmatprep.subr.mxu0 0.0
        %1745 = vmatpush1.msra.mxu0 0.0
        %1746 = vmatprep.subr.mxu0 0.0
        %1747 = vmatpush1.msra.mxu0 0.0
        %1748 = vmatprep.subr.mxu0 0.0
        %1749 = vmatpush1.msra.mxu0 0.0
        %1750 = vmatprep.subr.mxu0 0.0
        %1751 = vmatpush1.msra.mxu0 0.0
        %1752 = vmatprep.subr.mxu0 0.0
        %1753 = vmatpush1.msra.mxu0 0.0
        %1754 = vmatprep.subr.mxu0 0.0
        %1755 = vmatpush1.msra.mxu0 0.0
        %1756 = vmatprep.subr.mxu0 0.0
        %1757 = vmatpush1.msra.mxu0 0.0
        %1758 = vmatprep.subr.mxu0 0.0
        %1759 = vmatpush1.msra.mxu0 0.0
        %1760 = vmatprep.subr.mxu0 0.0
        %1761 = vmatpush1.msra.mxu0 0.0
        %1762 = vmatprep.subr.mxu0 0.0
        %1763 = vmatpush1.msra.mxu0 0.0
        %1764 = vmatprep.mubr.f32.mxu0 0.0
        %v1765 = vand.u32 %v332, 4294901760
        %v1766 = vsub.f32 %v332, %v1765
        %1767 = vmatmul.mubr.f32.gmra.mrb[0].mxu0 %v1766
        %v1768 = vpop.f32.mrb[0].mxu0
        %v1769 = vadd.f32 %v1623, %v1768
        %v1770 = vpop.f32.mrb[0].mxu0
        %1771 = vmatprep.mubr.f32.mxu0 0.0
        %v1772 = vand.u32 %v333, 4294901760
        %v1773 = vsub.f32 %v333, %v1772
        %1774 = vmatmul.mubr.f32.gmra.mrb[0].mxu0 %v1773
        %v1775 = vpop.f32.mrb[0].mxu0
        %v1776 = vadd.f32 %v1629, %v1775
        %v1777 = vpop.f32.mrb[0].mxu0
        %1778 = vmatprep.mubr.f32.mxu0 0.0
        %v1779 = vand.u32 %v334, 4294901760
        %v1780 = vsub.f32 %v334, %v1779
        %1781 = vmatmul.mubr.f32.gmra.mrb[0].mxu0 %v1780
        %v1782 = vpop.f32.mrb[0].mxu0
        %v1783 = vadd.f32 %v1635, %v1782
        %v1784 = vpop.f32.mrb[0].mxu0
        %1785 = vmatprep.mubr.f32.mxu0 0.0
        %v1786 = vand.u32 %v335, 4294901760
        %v1787 = vsub.f32 %v335, %v1786
        %1788 = vmatmul.mubr.f32.gmra.mrb[0].mxu0 %v1787
        %v1789 = vpop.f32.mrb[0].mxu0
        %v1790 = vadd.f32 %v1641, %v1789
        %v1791 = vpop.f32.mrb[0].mxu0
        %1792 = vmatprep.mubr.f32.mxu0 0.0
        %v1793 = vand.u32 %v336, 4294901760
        %v1794 = vsub.f32 %v336, %v1793
        %1795 = vmatmul.mubr.f32.gmra.mrb[0].mxu0 %v1794
        %v1796 = vpop.f32.mrb[0].mxu0
        %v1797 = vadd.f32 %v1647, %v1796
        %v1798 = vpop.f32.mrb[0].mxu0
        %1799 = vmatprep.mubr.f32.mxu0 0.0
        %v1800 = vand.u32 %v337, 4294901760
        %v1801 = vsub.f32 %v337, %v1800
        %1802 = vmatmul.mubr.f32.gmra.mrb[0].mxu0 %v1801
        %v1803 = vpop.f32.mrb[0].mxu0
        %v1804 = vadd.f32 %v1653, %v1803
        %v1805 = vpop.f32.mrb[0].mxu0
        %1806 = vmatprep.mubr.f32.mxu0 0.0
        %v1807 = vand.u32 %v338, 4294901760
        %v1808 = vsub.f32 %v338, %v1807
        %1809 = vmatmul.mubr.f32.gmra.mrb[0].mxu0 %v1808
        %v1810 = vpop.f32.mrb[0].mxu0
        %v1811 = vadd.f32 %v1659, %v1810
        %v1812 = vpop.f32.mrb[0].mxu0
        %1813 = vmatprep.mubr.f32.mxu0 0.0
        %v1814 = vand.u32 %v339, 4294901760
        %v1815 = vsub.f32 %v339, %v1814
        %1816 = vmatmul.mubr.f32.gmra.mrb[0].mxu0 %v1815
        %v1817 = vpop.f32.mrb[0].mxu0
        %v1818 = vadd.f32 %v1665, %v1817
        %v1819 = vpop.f32.mrb[0].mxu0
        %1820 = vdwg.mxu0
        %1821 = vmatprep.subr.mxu0 0.0
        %v1822 = vand.u32 %v1298, 4294901760
        %1823 = vmatpush1.msra.mxu0 %v1822
        %1824 = vmatprep.subr.mxu0 0.0
        %v1825 = vand.u32 %v1299, 4294901760
        %1826 = vmatpush1.msra.mxu0 %v1825
        %1827 = vmatprep.subr.mxu0 0.0
        %v1828 = vand.u32 %v1300, 4294901760
        %1829 = vmatpush1.msra.mxu0 %v1828
        %1830 = vmatprep.subr.mxu0 0.0
        %v1831 = vand.u32 %v1301, 4294901760
        %1832 = vmatpush1.msra.mxu0 %v1831
        %1833 = vmatprep.subr.mxu0 0.0
        %v1834 = vand.u32 %v1302, 4294901760
        %1835 = vmatpush1.msra.mxu0 %v1834
        %1836 = vmatprep.subr.mxu0 0.0
        %v1837 = vand.u32 %v1303, 4294901760
        %1838 = vmatpush1.msra.mxu0 %v1837
        %1839 = vmatprep.subr.mxu0 0.0
        %v1840 = vand.u32 %v1304, 4294901760
        %1841 = vmatpush1.msra.mxu0 %v1840
        %1842 = vmatprep.subr.mxu0 0.0
        %v1843 = vand.u32 %v1305, 4294901760
        %1844 = vmatpush1.msra.mxu0 %v1843
        %1845 = vmatprep.subr.mxu0 0.0
        %v1846 = vand.u32 %v1306, 4294901760
        %1847 = vmatpush1.msra.mxu0 %v1846
        %1848 = vmatprep.subr.mxu0 0.0
        %v1849 = vand.u32 %v1307, 4294901760
        %1850 = vmatpush1.msra.mxu0 %v1849
        %1851 = vmatprep.subr.mxu0 0.0
        %v1852 = vand.u32 %v1308, 4294901760
        %1853 = vmatpush1.msra.mxu0 %v1852
        %1854 = vmatprep.subr.mxu0 0.0
        %v1855 = vand.u32 %v1309, 4294901760
        %1856 = vmatpush1.msra.mxu0 %v1855
        %1857 = vmatprep.subr.mxu0 0.0
        %v1858 = vand.u32 %v1310, 4294901760
        %1859 = vmatpush1.msra.mxu0 %v1858
        %1860 = vmatprep.subr.mxu0 0.0
        %v1861 = vand.u32 %v1311, 4294901760
        %1862 = vmatpush1.msra.mxu0 %v1861
        %1863 = vmatprep.subr.mxu0 0.0
        %v1864 = vand.u32 %v1312, 4294901760
        %1865 = vmatpush1.msra.mxu0 %v1864
        %1866 = vmatprep.subr.mxu0 0.0
        %v1867 = vand.u32 %v1313, 4294901760
        %1868 = vmatpush1.msra.mxu0 %v1867
        %1869 = vmatprep.subr.mxu0 0.0
        %1870 = vmatpush1.msra.mxu0 0.0
        %1871 = vmatprep.subr.mxu0 0.0
        %1872 = vmatpush1.msra.mxu0 0.0
        %1873 = vmatprep.subr.mxu0 0.0
        %1874 = vmatpush1.msra.mxu0 0.0
        %1875 = vmatprep.subr.mxu0 0.0
        %1876 = vmatpush1.msra.mxu0 0.0
        %1877 = vmatprep.subr.mxu0 0.0
        %1878 = vmatpush1.msra.mxu0 0.0
        %1879 = vmatprep.subr.mxu0 0.0
        %1880 = vmatpush1.msra.mxu0 0.0
        %1881 = vmatprep.subr.mxu0 0.0
        %1882 = vmatpush1.msra.mxu0 0.0
        %1883 = vmatprep.subr.mxu0 0.0
        %1884 = vmatpush1.msra.mxu0 0.0
        %1885 = vmatprep.subr.mxu0 0.0
        %1886 = vmatpush1.msra.mxu0 0.0
        %1887 = vmatprep.subr.mxu0 0.0
        %1888 = vmatpush1.msra.mxu0 0.0
        %1889 = vmatprep.subr.mxu0 0.0
        %1890 = vmatpush1.msra.mxu0 0.0
        %1891 = vmatprep.subr.mxu0 0.0
        %1892 = vmatpush1.msra.mxu0 0.0
        %1893 = vmatprep.subr.mxu0 0.0
        %1894 = vmatpush1.msra.mxu0 0.0
        %1895 = vmatprep.subr.mxu0 0.0
        %1896 = vmatpush1.msra.mxu0 0.0
        %1897 = vmatprep.subr.mxu0 0.0
        %1898 = vmatpush1.msra.mxu0 0.0
        %1899 = vmatprep.subr.mxu0 0.0
        %1900 = vmatpush1.msra.mxu0 0.0
        %1901 = vmatprep.mubr.f32.mxu0 0.0
        %v1902 = vand.u32 %v332, 4294901760
        %v1903 = vsub.f32 %v332, %v1902
        %v1904 = vand.u32 %v1903, 4294901760
        %1905 = vmatmul.mubr.f32.gmra.mrb[0].mxu0 %v1904
        %v1906 = vpop.f32.mrb[0].mxu0
        %v1907 = vadd.f32 %v1769, %v1906
        %v1908 = vpop.f32.mrb[0].mxu0
        %1909 = vmatprep.mubr.f32.mxu0 0.0
        %v1910 = vand.u32 %v333, 4294901760
        %v1911 = vsub.f32 %v333, %v1910
        %v1912 = vand.u32 %v1911, 4294901760
        %1913 = vmatmul.mubr.f32.gmra.mrb[0].mxu0 %v1912
        %v1914 = vpop.f32.mrb[0].mxu0
        %v1915 = vadd.f32 %v1776, %v1914
        %v1916 = vpop.f32.mrb[0].mxu0
        %1917 = vmatprep.mubr.f32.mxu0 0.0
        %v1918 = vand.u32 %v334, 4294901760
        %v1919 = vsub.f32 %v334, %v1918
        %v1920 = vand.u32 %v1919, 4294901760
        %1921 = vmatmul.mubr.f32.gmra.mrb[0].mxu0 %v1920
        %v1922 = vpop.f32.mrb[0].mxu0
        %v1923 = vadd.f32 %v1783, %v1922
        %v1924 = vpop.f32.mrb[0].mxu0
        %1925 = vmatprep.mubr.f32.mxu0 0.0
        %v1926 = vand.u32 %v335, 4294901760
        %v1927 = vsub.f32 %v335, %v1926
        %v1928 = vand.u32 %v1927, 4294901760
        %1929 = vmatmul.mubr.f32.gmra.mrb[0].mxu0 %v1928
        %v1930 = vpop.f32.mrb[0].mxu0
        %v1931 = vadd.f32 %v1790, %v1930
        %v1932 = vpop.f32.mrb[0].mxu0
        %1933 = vmatprep.mubr.f32.mxu0 0.0
        %v1934 = vand.u32 %v336, 4294901760
        %v1935 = vsub.f32 %v336, %v1934
        %v1936 = vand.u32 %v1935, 4294901760
        %1937 = vmatmul.mubr.f32.gmra.mrb[0].mxu0 %v1936
        %v1938 = vpop.f32.mrb[0].mxu0
        %v1939 = vadd.f32 %v1797, %v1938
        %v1940 = vpop.f32.mrb[0].mxu0
        %1941 = vmatprep.mubr.f32.mxu0 0.0
        %v1942 = vand.u32 %v337, 4294901760
        %v1943 = vsub.f32 %v337, %v1942
        %v1944 = vand.u32 %v1943, 4294901760
        %1945 = vmatmul.mubr.f32.gmra.mrb[0].mxu0 %v1944
        %v1946 = vpop.f32.mrb[0].mxu0
        %v1947 = vadd.f32 %v1804, %v1946
        %v1948 = vpop.f32.mrb[0].mxu0
        %1949 = vmatprep.mubr.f32.mxu0 0.0
        %v1950 = vand.u32 %v338, 4294901760
        %v1951 = vsub.f32 %v338, %v1950
        %v1952 = vand.u32 %v1951, 4294901760
        %1953 = vmatmul.mubr.f32.gmra.mrb[0].mxu0 %v1952
        %v1954 = vpop.f32.mrb[0].mxu0
        %v1955 = vadd.f32 %v1811, %v1954
        %v1956 = vpop.f32.mrb[0].mxu0
        %1957 = vmatprep.mubr.f32.mxu0 0.0
        %v1958 = vand.u32 %v339, 4294901760
        %v1959 = vsub.f32 %v339, %v1958
        %v1960 = vand.u32 %v1959, 4294901760
        %1961 = vmatmul.mubr.f32.gmra.mrb[0].mxu0 %v1960
        %v1962 = vpop.f32.mrb[0].mxu0
        %v1963 = vadd.f32 %v1818, %v1962
        %v1964 = vpop.f32.mrb[0].mxu0
        %1965 = vdwg.mxu0
        %1966 = vmatprep.subr.mxu0 0.0
        %v1967 = vand.u32 %v1298, 4294901760
        %v1968 = vsub.f32 %v1298, %v1967
        %v1969 = vand.u32 %v1968, 4294901760
        %1970 = vmatpush1.msra.mxu0 %v1969
        %1971 = vmatprep.subr.mxu0 0.0
        %v1972 = vand.u32 %v1299, 4294901760
        %v1973 = vsub.f32 %v1299, %v1972
        %v1974 = vand.u32 %v1973, 4294901760
        %1975 = vmatpush1.msra.mxu0 %v1974
        %1976 = vmatprep.subr.mxu0 0.0
        %v1977 = vand.u32 %v1300, 4294901760
        %v1978 = vsub.f32 %v1300, %v1977
        %v1979 = vand.u32 %v1978, 4294901760
        %1980 = vmatpush1.msra.mxu0 %v1979
        %1981 = vmatprep.subr.mxu0 0.0
        %v1982 = vand.u32 %v1301, 4294901760
        %v1983 = vsub.f32 %v1301, %v1982
        %v1984 = vand.u32 %v1983, 4294901760
        %1985 = vmatpush1.msra.mxu0 %v1984
        %1986 = vmatprep.subr.mxu0 0.0
        %v1987 = vand.u32 %v1302, 4294901760
        %v1988 = vsub.f32 %v1302, %v1987
        %v1989 = vand.u32 %v1988, 4294901760
        %1990 = vmatpush1.msra.mxu0 %v1989
        %1991 = vmatprep.subr.mxu0 0.0
        %v1992 = vand.u32 %v1303, 4294901760
        %v1993 = vsub.f32 %v1303, %v1992
        %v1994 = vand.u32 %v1993, 4294901760
        %1995 = vmatpush1.msra.mxu0 %v1994
        %1996 = vmatprep.subr.mxu0 0.0
        %v1997 = vand.u32 %v1304, 4294901760
        %v1998 = vsub.f32 %v1304, %v1997
        %v1999 = vand.u32 %v1998, 4294901760
        %2000 = vmatpush1.msra.mxu0 %v1999
        %2001 = vmatprep.subr.mxu0 0.0
        %v2002 = vand.u32 %v1305, 4294901760
        %v2003 = vsub.f32 %v1305, %v2002
        %v2004 = vand.u32 %v2003, 4294901760
        %2005 = vmatpush1.msra.mxu0 %v2004
        %2006 = vmatprep.subr.mxu0 0.0
        %v2007 = vand.u32 %v1306, 4294901760
        %v2008 = vsub.f32 %v1306, %v2007
        %v2009 = vand.u32 %v2008, 4294901760
        %2010 = vmatpush1.msra.mxu0 %v2009
        %2011 = vmatprep.subr.mxu0 0.0
        %v2012 = vand.u32 %v1307, 4294901760
        %v2013 = vsub.f32 %v1307, %v2012
        %v2014 = vand.u32 %v2013, 4294901760
        %2015 = vmatpush1.msra.mxu0 %v2014
        %2016 = vmatprep.subr.mxu0 0.0
        %v2017 = vand.u32 %v1308, 4294901760
        %v2018 = vsub.f32 %v1308, %v2017
        %v2019 = vand.u32 %v2018, 4294901760
        %2020 = vmatpush1.msra.mxu0 %v2019
        %2021 = vmatprep.subr.mxu0 0.0
        %v2022 = vand.u32 %v1309, 4294901760
        %v2023 = vsub.f32 %v1309, %v2022
        %v2024 = vand.u32 %v2023, 4294901760
        %2025 = vmatpush1.msra.mxu0 %v2024
        %2026 = vmatprep.subr.mxu0 0.0
        %v2027 = vand.u32 %v1310, 4294901760
        %v2028 = vsub.f32 %v1310, %v2027
        %v2029 = vand.u32 %v2028, 4294901760
        %2030 = vmatpush1.msra.mxu0 %v2029
        %2031 = vmatprep.subr.mxu0 0.0
        %v2032 = vand.u32 %v1311, 4294901760
        %v2033 = vsub.f32 %v1311, %v2032
        %v2034 = vand.u32 %v2033, 4294901760
        %2035 = vmatpush1.msra.mxu0 %v2034
        %2036 = vmatprep.subr.mxu0 0.0
        %v2037 = vand.u32 %v1312, 4294901760
        %v2038 = vsub.f32 %v1312, %v2037
        %v2039 = vand.u32 %v2038, 4294901760
        %2040 = vmatpush1.msra.mxu0 %v2039
        %2041 = vmatprep.subr.mxu0 0.0
        %v2042 = vand.u32 %v1313, 4294901760
        %v2043 = vsub.f32 %v1313, %v2042
        %v2044 = vand.u32 %v2043, 4294901760
        %2045 = vmatpush1.msra.mxu0 %v2044
        %2046 = vmatprep.subr.mxu0 0.0
        %2047 = vmatpush1.msra.mxu0 0.0
        %2048 = vmatprep.subr.mxu0 0.0
        %2049 = vmatpush1.msra.mxu0 0.0
        %2050 = vmatprep.subr.mxu0 0.0
        %2051 = vmatpush1.msra.mxu0 0.0
        %2052 = vmatprep.subr.mxu0 0.0
        %2053 = vmatpush1.msra.mxu0 0.0
        %2054 = vmatprep.subr.mxu0 0.0
        %2055 = vmatpush1.msra.mxu0 0.0
        %2056 = vmatprep.subr.mxu0 0.0
        %2057 = vmatpush1.msra.mxu0 0.0
        %2058 = vmatprep.subr.mxu0 0.0
        %2059 = vmatpush1.msra.mxu0 0.0
        %2060 = vmatprep.subr.mxu0 0.0
        %2061 = vmatpush1.msra.mxu0 0.0
        %2062 = vmatprep.subr.mxu0 0.0
        %2063 = vmatpush1.msra.mxu0 0.0
        %2064 = vmatprep.subr.mxu0 0.0
        %2065 = vmatpush1.msra.mxu0 0.0
        %2066 = vmatprep.subr.mxu0 0.0
        %2067 = vmatpush1.msra.mxu0 0.0
        %2068 = vmatprep.subr.mxu0 0.0
        %2069 = vmatpush1.msra.mxu0 0.0
        %2070 = vmatprep.subr.mxu0 0.0
        %2071 = vmatpush1.msra.mxu0 0.0
        %2072 = vmatprep.subr.mxu0 0.0
        %2073 = vmatpush1.msra.mxu0 0.0
        %2074 = vmatprep.subr.mxu0 0.0
        %2075 = vmatpush1.msra.mxu0 0.0
        %2076 = vmatprep.subr.mxu0 0.0
        %2077 = vmatpush1.msra.mxu0 0.0
        %2078 = vmatprep.mubr.f32.mxu0 0.0
        %v2079 = vand.u32 %v332, 4294901760
        %2080 = vmatmul.mubr.f32.gmra.mrb[0].mxu0 %v2079
        %v2081 = vpop.f32.mrb[0].mxu0
        %v2082 = vadd.f32 %v1907, %v2081
        %v2083 = vpop.f32.mrb[0].mxu0
        %2084 = vmatprep.mubr.f32.mxu0 0.0
        %v2085 = vand.u32 %v333, 4294901760
        %2086 = vmatmul.mubr.f32.gmra.mrb[0].mxu0 %v2085
        %v2087 = vpop.f32.mrb[0].mxu0
        %v2088 = vadd.f32 %v1915, %v2087
        %v2089 = vpop.f32.mrb[0].mxu0
        %2090 = vmatprep.mubr.f32.mxu0 0.0
        %v2091 = vand.u32 %v334, 4294901760
        %2092 = vmatmul.mubr.f32.gmra.mrb[0].mxu0 %v2091
        %v2093 = vpop.f32.mrb[0].mxu0
        %v2094 = vadd.f32 %v1923, %v2093
        %v2095 = vpop.f32.mrb[0].mxu0
        %2096 = vmatprep.mubr.f32.mxu0 0.0
        %v2097 = vand.u32 %v335, 4294901760
        %2098 = vmatmul.mubr.f32.gmra.mrb[0].mxu0 %v2097
        %v2099 = vpop.f32.mrb[0].mxu0
        %v2100 = vadd.f32 %v1931, %v2099
        %v2101 = vpop.f32.mrb[0].mxu0
        %2102 = vmatprep.mubr.f32.mxu0 0.0
        %v2103 = vand.u32 %v336, 4294901760
        %2104 = vmatmul.mubr.f32.gmra.mrb[0].mxu0 %v2103
        %v2105 = vpop.f32.mrb[0].mxu0
        %v2106 = vadd.f32 %v1939, %v2105
        %v2107 = vpop.f32.mrb[0].mxu0
        %2108 = vmatprep.mubr.f32.mxu0 0.0
        %v2109 = vand.u32 %v337, 4294901760
        %2110 = vmatmul.mubr.f32.gmra.mrb[0].mxu0 %v2109
        %v2111 = vpop.f32.mrb[0].mxu0
        %v2112 = vadd.f32 %v1947, %v2111
        %v2113 = vpop.f32.mrb[0].mxu0
        %2114 = vmatprep.mubr.f32.mxu0 0.0
        %v2115 = vand.u32 %v338, 4294901760
        %2116 = vmatmul.mubr.f32.gmra.mrb[0].mxu0 %v2115
        %v2117 = vpop.f32.mrb[0].mxu0
        %v2118 = vadd.f32 %v1955, %v2117
        %v2119 = vpop.f32.mrb[0].mxu0
        %2120 = vmatprep.mubr.f32.mxu0 0.0
        %v2121 = vand.u32 %v339, 4294901760
        %2122 = vmatmul.mubr.f32.gmra.mrb[0].mxu0 %v2121
        %v2123 = vpop.f32.mrb[0].mxu0
        %v2124 = vadd.f32 %v1963, %v2123
        %v2125 = vpop.f32.mrb[0].mxu0
        %2126 = vdwg.mxu0
        %2127 = vmatprep.subr.mxu0 0.0
        %v2128 = vand.u32 %v1298, 4294901760
        %2129 = vmatpush1.msra.mxu0 %v2128
        %2130 = vmatprep.subr.mxu0 0.0
        %v2131 = vand.u32 %v1299, 4294901760
        %2132 = vmatpush1.msra.mxu0 %v2131
        %2133 = vmatprep.subr.mxu0 0.0
        %v2134 = vand.u32 %v1300, 4294901760
        %2135 = vmatpush1.msra.mxu0 %v2134
        %2136 = vmatprep.subr.mxu0 0.0
        %v2137 = vand.u32 %v1301, 4294901760
        %2138 = vmatpush1.msra.mxu0 %v2137
        %2139 = vmatprep.subr.mxu0 0.0
        %v2140 = vand.u32 %v1302, 4294901760
        %2141 = vmatpush1.msra.mxu0 %v2140
        %2142 = vmatprep.subr.mxu0 0.0
        %v2143 = vand.u32 %v1303, 4294901760
        %2144 = vmatpush1.msra.mxu0 %v2143
        %2145 = vmatprep.subr.mxu0 0.0
        %v2146 = vand.u32 %v1304, 4294901760
        %2147 = vmatpush1.msra.mxu0 %v2146
        %2148 = vmatprep.subr.mxu0 0.0
        %v2149 = vand.u32 %v1305, 4294901760
        %2150 = vmatpush1.msra.mxu0 %v2149
        %2151 = vmatprep.subr.mxu0 0.0
        %v2152 = vand.u32 %v1306, 4294901760
        %2153 = vmatpush1.msra.mxu0 %v2152
        %2154 = vmatprep.subr.mxu0 0.0
        %v2155 = vand.u32 %v1307, 4294901760
        %2156 = vmatpush1.msra.mxu0 %v2155
        %2157 = vmatprep.subr.mxu0 0.0
        %v2158 = vand.u32 %v1308, 4294901760
        %2159 = vmatpush1.msra.mxu0 %v2158
        %2160 = vmatprep.subr.mxu0 0.0
        %v2161 = vand.u32 %v1309, 4294901760
        %2162 = vmatpush1.msra.mxu0 %v2161
        %2163 = vmatprep.subr.mxu0 0.0
        %v2164 = vand.u32 %v1310, 4294901760
        %2165 = vmatpush1.msra.mxu0 %v2164
        %2166 = vmatprep.subr.mxu0 0.0
        %v2167 = vand.u32 %v1311, 4294901760
        %2168 = vmatpush1.msra.mxu0 %v2167
        %2169 = vmatprep.subr.mxu0 0.0
        %v2170 = vand.u32 %v1312, 4294901760
        %2171 = vmatpush1.msra.mxu0 %v2170
        %2172 = vmatprep.subr.mxu0 0.0
        %v2173 = vand.u32 %v1313, 4294901760
        %2174 = vmatpush1.msra.mxu0 %v2173
        %2175 = vmatprep.subr.mxu0 0.0
        %2176 = vmatpush1.msra.mxu0 0.0
        %2177 = vmatprep.subr.mxu0 0.0
        %2178 = vmatpush1.msra.mxu0 0.0
        %2179 = vmatprep.subr.mxu0 0.0
        %2180 = vmatpush1.msra.mxu0 0.0
        %2181 = vmatprep.subr.mxu0 0.0
        %2182 = vmatpush1.msra.mxu0 0.0
        %2183 = vmatprep.subr.mxu0 0.0
        %2184 = vmatpush1.msra.mxu0 0.0
        %2185 = vmatprep.subr.mxu0 0.0
        %2186 = vmatpush1.msra.mxu0 0.0
        %2187 = vmatprep.subr.mxu0 0.0
        %2188 = vmatpush1.msra.mxu0 0.0
        %2189 = vmatprep.subr.mxu0 0.0
        %2190 = vmatpush1.msra.mxu0 0.0
        %2191 = vmatprep.subr.mxu0 0.0
        %2192 = vmatpush1.msra.mxu0 0.0
        %2193 = vmatprep.subr.mxu0 0.0
        %2194 = vmatpush1.msra.mxu0 0.0
        %2195 = vmatprep.subr.mxu0 0.0
        %2196 = vmatpush1.msra.mxu0 0.0
        %2197 = vmatprep.subr.mxu0 0.0
        %2198 = vmatpush1.msra.mxu0 0.0
        %2199 = vmatprep.subr.mxu0 0.0
        %2200 = vmatpush1.msra.mxu0 0.0
        %2201 = vmatprep.subr.mxu0 0.0
        %2202 = vmatpush1.msra.mxu0 0.0
        %2203 = vmatprep.subr.mxu0 0.0
        %2204 = vmatpush1.msra.mxu0 0.0
        %2205 = vmatprep.subr.mxu0 0.0
        %2206 = vmatpush1.msra.mxu0 0.0
        %2207 = vmatprep.mubr.f32.mxu0 0.0
        %v2208 = vand.u32 %v332, 4294901760
        %2209 = vmatmul.mubr.f32.gmra.mrb[0].mxu0 %v2208
        %v2210 = vpop.f32.mrb[0].mxu0
        %v2211 = vadd.f32 %v2082, %v2210
        %v2212 = vpop.f32.mrb[0].mxu0
        %2213 = vmatprep.mubr.f32.mxu0 0.0
        %v2214 = vand.u32 %v333, 4294901760
        %2215 = vmatmul.mubr.f32.gmra.mrb[0].mxu0 %v2214
        %v2216 = vpop.f32.mrb[0].mxu0
        %v2217 = vadd.f32 %v2088, %v2216
        %v2218 = vpop.f32.mrb[0].mxu0
        %2219 = vmatprep.mubr.f32.mxu0 0.0
        %v2220 = vand.u32 %v334, 4294901760
        %2221 = vmatmul.mubr.f32.gmra.mrb[0].mxu0 %v2220
        %v2222 = vpop.f32.mrb[0].mxu0
        %v2223 = vadd.f32 %v2094, %v2222
        %v2224 = vpop.f32.mrb[0].mxu0
        %2225 = vmatprep.mubr.f32.mxu0 0.0
        %v2226 = vand.u32 %v335, 4294901760
        %2227 = vmatmul.mubr.f32.gmra.mrb[0].mxu0 %v2226
        %v2228 = vpop.f32.mrb[0].mxu0
        %v2229 = vadd.f32 %v2100, %v2228
        %v2230 = vpop.f32.mrb[0].mxu0
        %2231 = vmatprep.mubr.f32.mxu0 0.0
        %v2232 = vand.u32 %v336, 4294901760
        %2233 = vmatmul.mubr.f32.gmra.mrb[0].mxu0 %v2232
        %v2234 = vpop.f32.mrb[0].mxu0
        %v2235 = vadd.f32 %v2106, %v2234
        %v2236 = vpop.f32.mrb[0].mxu0
        %2237 = vmatprep.mubr.f32.mxu0 0.0
        %v2238 = vand.u32 %v337, 4294901760
        %2239 = vmatmul.mubr.f32.gmra.mrb[0].mxu0 %v2238
        %v2240 = vpop.f32.mrb[0].mxu0
        %v2241 = vadd.f32 %v2112, %v2240
        %v2242 = vpop.f32.mrb[0].mxu0
        %2243 = vmatprep.mubr.f32.mxu0 0.0
        %v2244 = vand.u32 %v338, 4294901760
        %2245 = vmatmul.mubr.f32.gmra.mrb[0].mxu0 %v2244
        %v2246 = vpop.f32.mrb[0].mxu0
        %v2247 = vadd.f32 %v2118, %v2246
        %v2248 = vpop.f32.mrb[0].mxu0
        %2249 = vmatprep.mubr.f32.mxu0 0.0
        %v2250 = vand.u32 %v339, 4294901760
        %2251 = vmatmul.mubr.f32.gmra.mrb[0].mxu0 %v2250
        %v2252 = vpop.f32.mrb[0].mxu0
        %v2253 = vadd.f32 %v2124, %v2252
        %v2254 = vpop.f32.mrb[0].mxu0
        %2255 = vdwg.mxu0
        %v2256 = vmul.f32 %v1253, %v1253
        %v2257 = vmul.f32 %v1259, %v1259
        %v2258 = vmul.f32 %v1265, %v1265
        %v2259 = vmul.f32 %v1271, %v1271
        %v2260 = vmul.f32 %v1277, %v1277
        %v2261 = vmul.f32 %v1283, %v1283
        %v2262 = vmul.f32 %v1289, %v1289
        %v2263 = vmul.f32 %v1295, %v1295
        %v2264 = vmul.f32 %v2211, %v2211
        %v2265 = vmul.f32 %v2217, %v2217
        %v2266 = vmul.f32 %v2223, %v2223
        %v2267 = vmul.f32 %v2229, %v2229
        %v2268 = vmul.f32 %v2235, %v2235
        %v2269 = vmul.f32 %v2241, %v2241
        %v2270 = vmul.f32 %v2247, %v2247
        %v2271 = vmul.f32 %v2253, %v2253
        %v2272 = vmul.f32 %v1253, %v2211
        %v2273 = vmul.f32 %v1259, %v2217
        %v2274 = vmul.f32 %v1265, %v2223
        %v2275 = vmul.f32 %v1271, %v2229
        %v2276 = vmul.f32 %v1277, %v2235
        %v2277 = vmul.f32 %v1283, %v2241
        %v2278 = vmul.f32 %v1289, %v2247
        %v2279 = vmul.f32 %v1295, %v2253
        %2280 = vst [vmem:[#allocation2 + $0x3] sm:$0xff] %v2256
        %2281 = vst [vmem:[#allocation2 + $0xb] sm:$0xff] %v2257
        %2282 = vst [vmem:[#allocation2 + $0x1b] sm:$0xff] %v2258
        %2283 = vst [vmem:[#allocation2 + $0x23] sm:$0xff] %v2259
        %2284 = vst [vmem:[#allocation2 + $0x33] sm:$0xff] %v2260
        %2285 = vst [vmem:[#allocation2 + $0x3b] sm:$0xff] %v2261
        %2286 = vst [vmem:[#allocation2 + $0x4b] sm:$0xff] %v2262
        %2287 = vst [vmem:[#allocation2 + $0x53] sm:$0xff] %v2263
        %2288 = vst [vmem:[#allocation2 - $0x3] sm:$0x8] %v2256
        %2289 = vst [vmem:[#allocation2 + $0x15] sm:$0x8] %v2258
        %2290 = vst [vmem:[#allocation2 + $0x2d] sm:$0x8] %v2260
        %2291 = vst [vmem:[#allocation2 + $0x45] sm:$0x8] %v2262
        %2292 = vst [vmem:[#allocation2 - $0x1] sm:$0x4] %v2256
        %2293 = vst [vmem:[#allocation2 + $0x17] sm:$0x4] %v2258
        %2294 = vst [vmem:[#allocation2 + $0x2f] sm:$0x4] %v2260
        %2295 = vst [vmem:[#allocation2 + $0x47] sm:$0x4] %v2262
        %2296 = vst [vmem:[#allocation2 + $0x1] sm:$0x2] %v2256
        %2297 = vst [vmem:[#allocation2 + $0x19] sm:$0x2] %v2258
        %2298 = vst [vmem:[#allocation2 + $0x31] sm:$0x2] %v2260
        %2299 = vst [vmem:[#allocation2 + $0x49] sm:$0x2] %v2262
        %2300 = vst [vmem:[#allocation2 + $0xd] sm:$0x40] %v2257
        %2301 = vst [vmem:[#allocation2 + $0x25] sm:$0x40] %v2259
        %2302 = vst [vmem:[#allocation2 + $0x3d] sm:$0x40] %v2261
        %2303 = vst [vmem:[#allocation2 + $0x55] sm:$0x40] %v2263
        %2304 = vst [vmem:[#allocation2 + $0xf] sm:$0x20] %v2257
        %2305 = vst [vmem:[#allocation2 + $0x27] sm:$0x20] %v2259
        %2306 = vst [vmem:[#allocation2 + $0x3f] sm:$0x20] %v2261
        %2307 = vst [vmem:[#allocation2 + $0x57] sm:$0x20] %v2263
        %2308 = vst [vmem:[#allocation2 + $0x11] sm:$0x10] %v2257
        %2309 = vst [vmem:[#allocation2 + $0x29] sm:$0x10] %v2259
        %2310 = vst [vmem:[#allocation2 + $0x41] sm:$0x10] %v2261
        %2311 = vst [vmem:[#allocation2 + $0x59] sm:$0x10] %v2263
        %s2312 = scalar_lea.vmem [#allocation2], 96
        %2313 = vst [vmem:[%s2312 + $0x3] sm:$0xff] %v2264
        %2314 = vst [vmem:[%s2312 + $0xb] sm:$0xff] %v2265
        %2315 = vst [vmem:[%s2312 + $0x1b] sm:$0xff] %v2266
        %2316 = vst [vmem:[%s2312 + $0x23] sm:$0xff] %v2267
        %2317 = vst [vmem:[%s2312 + $0x33] sm:$0xff] %v2268
        %2318 = vst [vmem:[%s2312 + $0x3b] sm:$0xff] %v2269
        %2319 = vst [vmem:[%s2312 + $0x4b] sm:$0xff] %v2270
        %2320 = vst [vmem:[%s2312 + $0x53] sm:$0xff] %v2271
        %2321 = vst [vmem:[%s2312 - $0x3] sm:$0x8] %v2264
        %2322 = vst [vmem:[%s2312 + $0x15] sm:$0x8] %v2266
        %2323 = vst [vmem:[%s2312 + $0x2d] sm:$0x8] %v2268
        %2324 = vst [vmem:[%s2312 + $0x45] sm:$0x8] %v2270
        %2325 = vst [vmem:[%s2312 - $0x1] sm:$0x4] %v2264
        %2326 = vst [vmem:[%s2312 + $0x17] sm:$0x4] %v2266
        %2327 = vst [vmem:[%s2312 + $0x2f] sm:$0x4] %v2268
        %2328 = vst [vmem:[%s2312 + $0x47] sm:$0x4] %v2270
        %2329 = vst [vmem:[%s2312 + $0x1] sm:$0x2] %v2264
        %2330 = vst [vmem:[%s2312 + $0x19] sm:$0x2] %v2266
        %2331 = vst [vmem:[%s2312 + $0x31] sm:$0x2] %v2268
        %2332 = vst [vmem:[%s2312 + $0x49] sm:$0x2] %v2270
        %2333 = vst [vmem:[%s2312 + $0xd] sm:$0x40] %v2265
        %2334 = vst [vmem:[%s2312 + $0x25] sm:$0x40] %v2267
        %2335 = vst [vmem:[%s2312 + $0x3d] sm:$0x40] %v2269
        %2336 = vst [vmem:[%s2312 + $0x55] sm:$0x40] %v2271
        %2337 = vst [vmem:[%s2312 + $0xf] sm:$0x20] %v2265
        %2338 = vst [vmem:[%s2312 + $0x27] sm:$0x20] %v2267
        %2339 = vst [vmem:[%s2312 + $0x3f] sm:$0x20] %v2269
        %2340 = vst [vmem:[%s2312 + $0x57] sm:$0x20] %v2271
        %2341 = vst [vmem:[%s2312 + $0x11] sm:$0x10] %v2265
        %2342 = vst [vmem:[%s2312 + $0x29] sm:$0x10] %v2267
        %2343 = vst [vmem:[%s2312 + $0x41] sm:$0x10] %v2269
        %2344 = vst [vmem:[%s2312 + $0x59] sm:$0x10] %v2271
        %s2345 = scalar_lea.vmem [#allocation2], 192
        %2346 = vst [vmem:[%s2345 + $0x3] sm:$0xff] %v2272
        %2347 = vst [vmem:[%s2345 + $0xb] sm:$0xff] %v2273
        %2348 = vst [vmem:[%s2345 + $0x1b] sm:$0xff] %v2274
        %2349 = vst [vmem:[%s2345 + $0x23] sm:$0xff] %v2275
        %2350 = vst [vmem:[%s2345 + $0x33] sm:$0xff] %v2276
        %2351 = vst [vmem:[%s2345 + $0x3b] sm:$0xff] %v2277
        %2352 = vst [vmem:[%s2345 + $0x4b] sm:$0xff] %v2278
        %2353 = vst [vmem:[%s2345 + $0x53] sm:$0xff] %v2279
        %2354 = vst [vmem:[%s2345 - $0x3] sm:$0x8] %v2272
        %2355 = vst [vmem:[%s2345 + $0x15] sm:$0x8] %v2274
        %2356 = vst [vmem:[%s2345 + $0x2d] sm:$0x8] %v2276
        %2357 = vst [vmem:[%s2345 + $0x45] sm:$0x8] %v2278
        %2358 = vst [vmem:[%s2345 - $0x1] sm:$0x4] %v2272
        %2359 = vst [vmem:[%s2345 + $0x17] sm:$0x4] %v2274
        %2360 = vst [vmem:[%s2345 + $0x2f] sm:$0x4] %v2276
        %2361 = vst [vmem:[%s2345 + $0x47] sm:$0x4] %v2278
        %2362 = vst [vmem:[%s2345 + $0x1] sm:$0x2] %v2272
        %2363 = vst [vmem:[%s2345 + $0x19] sm:$0x2] %v2274
        %2364 = vst [vmem:[%s2345 + $0x31] sm:$0x2] %v2276
        %2365 = vst [vmem:[%s2345 + $0x49] sm:$0x2] %v2278
        %2366 = vst [vmem:[%s2345 + $0xd] sm:$0x40] %v2273
        %2367 = vst [vmem:[%s2345 + $0x25] sm:$0x40] %v2275
        %2368 = vst [vmem:[%s2345 + $0x3d] sm:$0x40] %v2277
        %2369 = vst [vmem:[%s2345 + $0x55] sm:$0x40] %v2279
        %2370 = vst [vmem:[%s2345 + $0xf] sm:$0x20] %v2273
        %2371 = vst [vmem:[%s2345 + $0x27] sm:$0x20] %v2275
        %2372 = vst [vmem:[%s2345 + $0x3f] sm:$0x20] %v2277
        %2373 = vst [vmem:[%s2345 + $0x57] sm:$0x20] %v2279
        %2374 = vst [vmem:[%s2345 + $0x11] sm:$0x10] %v2273
        %2375 = vst [vmem:[%s2345 + $0x29] sm:$0x10] %v2275
        %2376 = vst [vmem:[%s2345 + $0x41] sm:$0x10] %v2277
        %2377 = vst [vmem:[%s2345 + $0x59] sm:$0x10] %v2279
        %v2378 = vld [vmem:[#allocation2] sm:$0xff]
        %v2379 = vld [vmem:[#allocation2 + $0x8] sm:$0xff]
        %v2380 = vld [vmem:[#allocation2 + $0x18] sm:$0xff]
        %v2381 = vld [vmem:[#allocation2 + $0x20] sm:$0xff]
        %v2382 = vld [vmem:[#allocation2 + $0x30] sm:$0xff]
        %v2383 = vld [vmem:[#allocation2 + $0x38] sm:$0xff]
        %v2384 = vld [vmem:[#allocation2 + $0x48] sm:$0xff]
        %v2385 = vld [vmem:[#allocation2 + $0x50] sm:$0xff]
        %v2386 = vld [vmem:[#allocation2 + $0x60] sm:$0xff]
        %v2387 = vld [vmem:[#allocation2 + $0x68] sm:$0xff]
        %v2388 = vld [vmem:[#allocation2 + $0x78] sm:$0xff]
        %v2389 = vld [vmem:[#allocation2 + $0x80] sm:$0xff]
        %v2390 = vld [vmem:[#allocation2 + $0x90] sm:$0xff]
        %v2391 = vld [vmem:[#allocation2 + $0x98] sm:$0xff]
        %v2392 = vld [vmem:[#allocation2 + $0xa8] sm:$0xff]
        %v2393 = vld [vmem:[#allocation2 + $0xb0] sm:$0xff]
        %v2394 = vld [vmem:[#allocation2 + $0xc0] sm:$0xff]
        %v2395 = vld [vmem:[#allocation2 + $0xc8] sm:$0xff]
        %v2396 = vld [vmem:[#allocation2 + $0xd8] sm:$0xff]
        %v2397 = vld [vmem:[#allocation2 + $0xe0] sm:$0xff]
        %v2398 = vld [vmem:[#allocation2 + $0xf0] sm:$0xff]
        %v2399 = vld [vmem:[#allocation2 + $0xf8] sm:$0xff]
        %v2400 = vld [vmem:[#allocation2 + $0x108] sm:$0xff]
        %v2401 = vld [vmem:[#allocation2 + $0x110] sm:$0xff]
        %v2402 = vld [vmem:[#allocation2 + $0x1] sm:$0xff]
        %v2403 = vld [vmem:[#allocation2 + $0x9] sm:$0xff]
        %v2404 = vld [vmem:[#allocation2 + $0x19] sm:$0xff]
        %v2405 = vld [vmem:[#allocation2 + $0x21] sm:$0xff]
        %v2406 = vld [vmem:[#allocation2 + $0x31] sm:$0xff]
        %v2407 = vld [vmem:[#allocation2 + $0x39] sm:$0xff]
        %v2408 = vld [vmem:[#allocation2 + $0x49] sm:$0xff]
        %v2409 = vld [vmem:[#allocation2 + $0x51] sm:$0xff]
        %v2410 = vld [vmem:[#allocation2 + $0x61] sm:$0xff]
        %v2411 = vld [vmem:[#allocation2 + $0x69] sm:$0xff]
        %v2412 = vld [vmem:[#allocation2 + $0x79] sm:$0xff]
        %v2413 = vld [vmem:[#allocation2 + $0x81] sm:$0xff]
        %v2414 = vld [vmem:[#allocation2 + $0x91] sm:$0xff]
        %v2415 = vld [vmem:[#allocation2 + $0x99] sm:$0xff]
        %v2416 = vld [vmem:[#allocation2 + $0xa9] sm:$0xff]
        %v2417 = vld [vmem:[#allocation2 + $0xb1] sm:$0xff]
        %v2418 = vld [vmem:[#allocation2 + $0xc1] sm:$0xff]
        %v2419 = vld [vmem:[#allocation2 + $0xc9] sm:$0xff]
        %v2420 = vld [vmem:[#allocation2 + $0xd9] sm:$0xff]
        %v2421 = vld [vmem:[#allocation2 + $0xe1] sm:$0xff]
        %v2422 = vld [vmem:[#allocation2 + $0xf1] sm:$0xff]
        %v2423 = vld [vmem:[#allocation2 + $0xf9] sm:$0xff]
        %v2424 = vld [vmem:[#allocation2 + $0x109] sm:$0xff]
        %v2425 = vld [vmem:[#allocation2 + $0x111] sm:$0xff]
        %v2426 = vld [vmem:[#allocation2 + $0x2] sm:$0xff]
        %v2427 = vld [vmem:[#allocation2 + $0xa] sm:$0xff]
        %v2428 = vld [vmem:[#allocation2 + $0x1a] sm:$0xff]
        %v2429 = vld [vmem:[#allocation2 + $0x22] sm:$0xff]
        %v2430 = vld [vmem:[#allocation2 + $0x32] sm:$0xff]
        %v2431 = vld [vmem:[#allocation2 + $0x3a] sm:$0xff]
        %v2432 = vld [vmem:[#allocation2 + $0x4a] sm:$0xff]
        %v2433 = vld [vmem:[#allocation2 + $0x52] sm:$0xff]
        %v2434 = vld [vmem:[#allocation2 + $0x62] sm:$0xff]
        %v2435 = vld [vmem:[#allocation2 + $0x6a] sm:$0xff]
        %v2436 = vld [vmem:[#allocation2 + $0x7a] sm:$0xff]
        %v2437 = vld [vmem:[#allocation2 + $0x82] sm:$0xff]
        %v2438 = vld [vmem:[#allocation2 + $0x92] sm:$0xff]
        %v2439 = vld [vmem:[#allocation2 + $0x9a] sm:$0xff]
        %v2440 = vld [vmem:[#allocation2 + $0xaa] sm:$0xff]
        %v2441 = vld [vmem:[#allocation2 + $0xb2] sm:$0xff]
        %v2442 = vld [vmem:[#allocation2 + $0xc2] sm:$0xff]
        %v2443 = vld [vmem:[#allocation2 + $0xca] sm:$0xff]
        %v2444 = vld [vmem:[#allocation2 + $0xda] sm:$0xff]
        %v2445 = vld [vmem:[#allocation2 + $0xe2] sm:$0xff]
        %v2446 = vld [vmem:[#allocation2 + $0xf2] sm:$0xff]
        %v2447 = vld [vmem:[#allocation2 + $0xfa] sm:$0xff]
        %v2448 = vld [vmem:[#allocation2 + $0x10a] sm:$0xff]
        %v2449 = vld [vmem:[#allocation2 + $0x112] sm:$0xff]
        %v2450 = vld [vmem:[#allocation2 + $0x3] sm:$0xff]
        %v2451 = vld [vmem:[#allocation2 + $0xb] sm:$0xff]
        %v2452 = vld [vmem:[#allocation2 + $0x1b] sm:$0xff]
        %v2453 = vld [vmem:[#allocation2 + $0x23] sm:$0xff]
        %v2454 = vld [vmem:[#allocation2 + $0x33] sm:$0xff]
        %v2455 = vld [vmem:[#allocation2 + $0x3b] sm:$0xff]
        %v2456 = vld [vmem:[#allocation2 + $0x4b] sm:$0xff]
        %v2457 = vld [vmem:[#allocation2 + $0x53] sm:$0xff]
        %v2458 = vld [vmem:[#allocation2 + $0x63] sm:$0xff]
        %v2459 = vld [vmem:[#allocation2 + $0x6b] sm:$0xff]
        %v2460 = vld [vmem:[#allocation2 + $0x7b] sm:$0xff]
        %v2461 = vld [vmem:[#allocation2 + $0x83] sm:$0xff]
        %v2462 = vld [vmem:[#allocation2 + $0x93] sm:$0xff]
        %v2463 = vld [vmem:[#allocation2 + $0x9b] sm:$0xff]
        %v2464 = vld [vmem:[#allocation2 + $0xab] sm:$0xff]
        %v2465 = vld [vmem:[#allocation2 + $0xb3] sm:$0xff]
        %v2466 = vld [vmem:[#allocation2 + $0xc3] sm:$0xff]
        %v2467 = vld [vmem:[#allocation2 + $0xcb] sm:$0xff]
        %v2468 = vld [vmem:[#allocation2 + $0xdb] sm:$0xff]
        %v2469 = vld [vmem:[#allocation2 + $0xe3] sm:$0xff]
        %v2470 = vld [vmem:[#allocation2 + $0xf3] sm:$0xff]
        %v2471 = vld [vmem:[#allocation2 + $0xfb] sm:$0xff]
        %v2472 = vld [vmem:[#allocation2 + $0x10b] sm:$0xff]
        %v2473 = vld [vmem:[#allocation2 + $0x113] sm:$0xff]
        %v2474 = vld [vmem:[#allocation2 + $0x4] sm:$0xff]
        %v2475 = vld [vmem:[#allocation2 + $0xc] sm:$0xff]
        %v2476 = vld [vmem:[#allocation2 + $0x1c] sm:$0xff]
        %v2477 = vld [vmem:[#allocation2 + $0x24] sm:$0xff]
        %v2478 = vld [vmem:[#allocation2 + $0x34] sm:$0xff]
        %v2479 = vld [vmem:[#allocation2 + $0x3c] sm:$0xff]
        %v2480 = vld [vmem:[#allocation2 + $0x4c] sm:$0xff]
        %v2481 = vld [vmem:[#allocation2 + $0x54] sm:$0xff]
        %v2482 = vld [vmem:[#allocation2 + $0x64] sm:$0xff]
        %v2483 = vld [vmem:[#allocation2 + $0x6c] sm:$0xff]
        %v2484 = vld [vmem:[#allocation2 + $0x7c] sm:$0xff]
        %v2485 = vld [vmem:[#allocation2 + $0x84] sm:$0xff]
        %v2486 = vld [vmem:[#allocation2 + $0x94] sm:$0xff]
        %v2487 = vld [vmem:[#allocation2 + $0x9c] sm:$0xff]
        %v2488 = vld [vmem:[#allocation2 + $0xac] sm:$0xff]
        %v2489 = vld [vmem:[#allocation2 + $0xb4] sm:$0xff]
        %v2490 = vld [vmem:[#allocation2 + $0xc4] sm:$0xff]
        %v2491 = vld [vmem:[#allocation2 + $0xcc] sm:$0xff]
        %v2492 = vld [vmem:[#allocation2 + $0xdc] sm:$0xff]
        %v2493 = vld [vmem:[#allocation2 + $0xe4] sm:$0xff]
        %v2494 = vld [vmem:[#allocation2 + $0xf4] sm:$0xff]
        %v2495 = vld [vmem:[#allocation2 + $0xfc] sm:$0xff]
        %v2496 = vld [vmem:[#allocation2 + $0x10c] sm:$0xff]
        %v2497 = vld [vmem:[#allocation2 + $0x114] sm:$0xff]
        %v2498 = vld [vmem:[#allocation2 + $0x5] sm:$0xff]
        %v2499 = vld [vmem:[#allocation2 + $0xd] sm:$0xff]
        %v2500 = vld [vmem:[#allocation2 + $0x1d] sm:$0xff]
        %v2501 = vld [vmem:[#allocation2 + $0x25] sm:$0xff]
        %v2502 = vld [vmem:[#allocation2 + $0x35] sm:$0xff]
        %v2503 = vld [vmem:[#allocation2 + $0x3d] sm:$0xff]
        %v2504 = vld [vmem:[#allocation2 + $0x4d] sm:$0xff]
        %v2505 = vld [vmem:[#allocation2 + $0x55] sm:$0xff]
        %v2506 = vld [vmem:[#allocation2 + $0x65] sm:$0xff]
        %v2507 = vld [vmem:[#allocation2 + $0x6d] sm:$0xff]
        %v2508 = vld [vmem:[#allocation2 + $0x7d] sm:$0xff]
        %v2509 = vld [vmem:[#allocation2 + $0x85] sm:$0xff]
        %v2510 = vld [vmem:[#allocation2 + $0x95] sm:$0xff]
        %v2511 = vld [vmem:[#allocation2 + $0x9d] sm:$0xff]
        %v2512 = vld [vmem:[#allocation2 + $0xad] sm:$0xff]
        %v2513 = vld [vmem:[#allocation2 + $0xb5] sm:$0xff]
        %v2514 = vld [vmem:[#allocation2 + $0xc5] sm:$0xff]
        %v2515 = vld [vmem:[#allocation2 + $0xcd] sm:$0xff]
        %v2516 = vld [vmem:[#allocation2 + $0xdd] sm:$0xff]
        %v2517 = vld [vmem:[#allocation2 + $0xe5] sm:$0xff]
        %v2518 = vld [vmem:[#allocation2 + $0xf5] sm:$0xff]
        %v2519 = vld [vmem:[#allocation2 + $0xfd] sm:$0xff]
        %v2520 = vld [vmem:[#allocation2 + $0x10d] sm:$0xff]
        %v2521 = vld [vmem:[#allocation2 + $0x115] sm:$0xff]
        %v2522 = vld [vmem:[#allocation2 + $0x6] sm:$0xff]
        %v2523 = vld [vmem:[#allocation2 + $0xe] sm:$0xff]
        %v2524 = vld [vmem:[#allocation2 + $0x1e] sm:$0xff]
        %v2525 = vld [vmem:[#allocation2 + $0x26] sm:$0xff]
        %v2526 = vld [vmem:[#allocation2 + $0x36] sm:$0xff]
        %v2527 = vld [vmem:[#allocation2 + $0x3e] sm:$0xff]
        %v2528 = vld [vmem:[#allocation2 + $0x4e] sm:$0xff]
        %v2529 = vld [vmem:[#allocation2 + $0x56] sm:$0xff]
        %v2530 = vld [vmem:[#allocation2 + $0x66] sm:$0xff]
        %v2531 = vld [vmem:[#allocation2 + $0x6e] sm:$0xff]
        %v2532 = vld [vmem:[#allocation2 + $0x7e] sm:$0xff]
        %v2533 = vld [vmem:[#allocation2 + $0x86] sm:$0xff]
        %v2534 = vld [vmem:[#allocation2 + $0x96] sm:$0xff]
        %v2535 = vld [vmem:[#allocation2 + $0x9e] sm:$0xff]
        %v2536 = vld [vmem:[#allocation2 + $0xae] sm:$0xff]
        %v2537 = vld [vmem:[#allocation2 + $0xb6] sm:$0xff]
        %v2538 = vld [vmem:[#allocation2 + $0xc6] sm:$0xff]
        %v2539 = vld [vmem:[#allocation2 + $0xce] sm:$0xff]
        %v2540 = vld [vmem:[#allocation2 + $0xde] sm:$0xff]
        %v2541 = vld [vmem:[#allocation2 + $0xe6] sm:$0xff]
        %v2542 = vld [vmem:[#allocation2 + $0xf6] sm:$0xff]
        %v2543 = vld [vmem:[#allocation2 + $0xfe] sm:$0xff]
        %v2544 = vld [vmem:[#allocation2 + $0x10e] sm:$0xff]
        %v2545 = vld [vmem:[#allocation2 + $0x116] sm:$0xff]
        %v2546 = vmul.f32 %v2450, 0.39905027
        %v2547 = vmul.f32 %v2451, 0.39905027
        %v2548 = vmul.f32 %v2452, 0.39905027
        %v2549 = vmul.f32 %v2453, 0.39905027
        %v2550 = vmul.f32 %v2454, 0.39905027
        %v2551 = vmul.f32 %v2455, 0.39905027
        %v2552 = vmul.f32 %v2456, 0.39905027
        %v2553 = vmul.f32 %v2457, 0.39905027
        %v2554 = vmul.f32 %v2458, 0.39905027
        %v2555 = vmul.f32 %v2459, 0.39905027
        %v2556 = vmul.f32 %v2460, 0.39905027
        %v2557 = vmul.f32 %v2461, 0.39905027
        %v2558 = vmul.f32 %v2462, 0.39905027
        %v2559 = vmul.f32 %v2463, 0.39905027
        %v2560 = vmul.f32 %v2464, 0.39905027
        %v2561 = vmul.f32 %v2465, 0.39905027
        %v2562 = vmul.f32 %v2466, 0.39905027
        %v2563 = vmul.f32 %v2467, 0.39905027
        %v2564 = vmul.f32 %v2468, 0.39905027
        %v2565 = vmul.f32 %v2469, 0.39905027
        %v2566 = vmul.f32 %v2470, 0.39905027
        %v2567 = vmul.f32 %v2471, 0.39905027
        %v2568 = vmul.f32 %v2472, 0.39905027
        %v2569 = vmul.f32 %v2473, 0.39905027
        %v2570 = vadd.f32 %v2426, %v2474
        %v2571 = vadd.f32 %v2427, %v2475
        %v2572 = vadd.f32 %v2428, %v2476
        %v2573 = vadd.f32 %v2429, %v2477
        %v2574 = vadd.f32 %v2430, %v2478
        %v2575 = vadd.f32 %v2431, %v2479
        %v2576 = vadd.f32 %v2432, %v2480
        %v2577 = vadd.f32 %v2433, %v2481
        %v2578 = vadd.f32 %v2434, %v2482
        %v2579 = vadd.f32 %v2435, %v2483
        %v2580 = vadd.f32 %v2436, %v2484
        %v2581 = vadd.f32 %v2437, %v2485
        %v2582 = vadd.f32 %v2438, %v2486
        %v2583 = vadd.f32 %v2439, %v2487
        %v2584 = vadd.f32 %v2440, %v2488
        %v2585 = vadd.f32 %v2441, %v2489
        %v2586 = vadd.f32 %v2442, %v2490
        %v2587 = vadd.f32 %v2443, %v2491
        %v2588 = vadd.f32 %v2444, %v2492
        %v2589 = vadd.f32 %v2445, %v2493
        %v2590 = vadd.f32 %v2446, %v2494
        %v2591 = vadd.f32 %v2447, %v2495
        %v2592 = vadd.f32 %v2448, %v2496
        %v2593 = vadd.f32 %v2449, %v2497
        %v2594 = vmul.f32 %v2570, 0.24203622
        %v2595 = vmul.f32 %v2571, 0.24203622
        %v2596 = vmul.f32 %v2572, 0.24203622
        %v2597 = vmul.f32 %v2573, 0.24203622
        %v2598 = vmul.f32 %v2574, 0.24203622
        %v2599 = vmul.f32 %v2575, 0.24203622
        %v2600 = vmul.f32 %v2576, 0.24203622
        %v2601 = vmul.f32 %v2577, 0.24203622
        %v2602 = vmul.f32 %v2578, 0.24203622
        %v2603 = vmul.f32 %v2579, 0.24203622
        %v2604 = vmul.f32 %v2580, 0.24203622
        %v2605 = vmul.f32 %v2581, 0.24203622
        %v2606 = vmul.f32 %v2582, 0.24203622
        %v2607 = vmul.f32 %v2583, 0.24203622
        %v2608 = vmul.f32 %v2584, 0.24203622
        %v2609 = vmul.f32 %v2585, 0.24203622
        %v2610 = vmul.f32 %v2586, 0.24203622
        %v2611 = vmul.f32 %v2587, 0.24203622
        %v2612 = vmul.f32 %v2588, 0.24203622
        %v2613 = vmul.f32 %v2589, 0.24203622
        %v2614 = vmul.f32 %v2590, 0.24203622
        %v2615 = vmul.f32 %v2591, 0.24203622
        %v2616 = vmul.f32 %v2592, 0.24203622
        %v2617 = vmul.f32 %v2593, 0.24203622
        %v2618 = vadd.f32 %v2546, %v2594
        %v2619 = vadd.f32 %v2547, %v2595
        %v2620 = vadd.f32 %v2548, %v2596
        %v2621 = vadd.f32 %v2549, %v2597
        %v2622 = vadd.f32 %v2550, %v2598
        %v2623 = vadd.f32 %v2551, %v2599
        %v2624 = vadd.f32 %v2552, %v2600
        %v2625 = vadd.f32 %v2553, %v2601
        %v2626 = vadd.f32 %v2554, %v2602
        %v2627 = vadd.f32 %v2555, %v2603
        %v2628 = vadd.f32 %v2556, %v2604
        %v2629 = vadd.f32 %v2557, %v2605
        %v2630 = vadd.f32 %v2558, %v2606
        %v2631 = vadd.f32 %v2559, %v2607
        %v2632 = vadd.f32 %v2560, %v2608
        %v2633 = vadd.f32 %v2561, %v2609
        %v2634 = vadd.f32 %v2562, %v2610
        %v2635 = vadd.f32 %v2563, %v2611
        %v2636 = vadd.f32 %v2564, %v2612
        %v2637 = vadd.f32 %v2565, %v2613
        %v2638 = vadd.f32 %v2566, %v2614
        %v2639 = vadd.f32 %v2567, %v2615
        %v2640 = vadd.f32 %v2568, %v2616
        %v2641 = vadd.f32 %v2569, %v2617
        %v2642 = vadd.f32 %v2402, %v2498
        %v2643 = vadd.f32 %v2403, %v2499
        %v2644 = vadd.f32 %v2404, %v2500
        %v2645 = vadd.f32 %v2405, %v2501
        %v2646 = vadd.f32 %v2406, %v2502
        %v2647 = vadd.f32 %v2407, %v2503
        %v2648 = vadd.f32 %v2408, %v2504
        %v2649 = vadd.f32 %v2409, %v2505
        %v2650 = vadd.f32 %v2410, %v2506
        %v2651 = vadd.f32 %v2411, %v2507
        %v2652 = vadd.f32 %v2412, %v2508
        %v2653 = vadd.f32 %v2413, %v2509
        %v2654 = vadd.f32 %v2414, %v2510
        %v2655 = vadd.f32 %v2415, %v2511
        %v2656 = vadd.f32 %v2416, %v2512
        %v2657 = vadd.f32 %v2417, %v2513
        %v2658 = vadd.f32 %v2418, %v2514
        %v2659 = vadd.f32 %v2419, %v2515
        %v2660 = vadd.f32 %v2420, %v2516
        %v2661 = vadd.f32 %v2421, %v2517
        %v2662 = vadd.f32 %v2422, %v2518
        %v2663 = vadd.f32 %v2423, %v2519
        %v2664 = vadd.f32 %v2424, %v2520
        %v2665 = vadd.f32 %v2425, %v2521
        %v2666 = vmul.f32 %v2642, 0.05400558
        %v2667 = vmul.f32 %v2643, 0.05400558
        %v2668 = vmul.f32 %v2644, 0.05400558
        %v2669 = vmul.f32 %v2645, 0.05400558
        %v2670 = vmul.f32 %v2646, 0.05400558
        %v2671 = vmul.f32 %v2647, 0.05400558
        %v2672 = vmul.f32 %v2648, 0.05400558
        %v2673 = vmul.f32 %v2649, 0.05400558
        %v2674 = vmul.f32 %v2650, 0.05400558
        %v2675 = vmul.f32 %v2651, 0.05400558
        %v2676 = vmul.f32 %v2652, 0.05400558
        %v2677 = vmul.f32 %v2653, 0.05400558
        %v2678 = vmul.f32 %v2654, 0.05400558
        %v2679 = vmul.f32 %v2655, 0.05400558
        %v2680 = vmul.f32 %v2656, 0.05400558
        %v2681 = vmul.f32 %v2657, 0.05400558
        %v2682 = vmul.f32 %v2658, 0.05400558
        %v2683 = vmul.f32 %v2659, 0.05400558
        %v2684 = vmul.f32 %v2660, 0.05400558
        %v2685 = vmul.f32 %v2661, 0.05400558
        %v2686 = vmul.f32 %v2662, 0.05400558
        %v2687 = vmul.f32 %v2663, 0.05400558
        %v2688 = vmul.f32 %v2664, 0.05400558
        %v2689 = vmul.f32 %v2665, 0.05400558
        %v2690 = vadd.f32 %v2618, %v2666
        %v2691 = vadd.f32 %v2619, %v2667
        %v2692 = vadd.f32 %v2620, %v2668
        %v2693 = vadd.f32 %v2621, %v2669
        %v2694 = vadd.f32 %v2622, %v2670
        %v2695 = vadd.f32 %v2623, %v2671
        %v2696 = vadd.f32 %v2624, %v2672
        %v2697 = vadd.f32 %v2625, %v2673
        %v2698 = vadd.f32 %v2626, %v2674
        %v2699 = vadd.f32 %v2627, %v2675
        %v2700 = vadd.f32 %v2628, %v2676
        %v2701 = vadd.f32 %v2629, %v2677
        %v2702 = vadd.f32 %v2630, %v2678
        %v2703 = vadd.f32 %v2631, %v2679
        %v2704 = vadd.f32 %v2632, %v2680
        %v2705 = vadd.f32 %v2633, %v2681
        %v2706 = vadd.f32 %v2634, %v2682
        %v2707 = vadd.f32 %v2635, %v2683
        %v2708 = vadd.f32 %v2636, %v2684
        %v2709 = vadd.f32 %v2637, %v2685
        %v2710 = vadd.f32 %v2638, %v2686
        %v2711 = vadd.f32 %v2639, %v2687
        %v2712 = vadd.f32 %v2640, %v2688
        %v2713 = vadd.f32 %v2641, %v2689
        %v2714 = vadd.f32 %v2378, %v2522
        %v2715 = vadd.f32 %v2379, %v2523
        %v2716 = vadd.f32 %v2380, %v2524
        %v2717 = vadd.f32 %v2381, %v2525
        %v2718 = vadd.f32 %v2382, %v2526
        %v2719 = vadd.f32 %v2383, %v2527
        %v2720 = vadd.f32 %v2384, %v2528
        %v2721 = vadd.f32 %v2385, %v2529
        %v2722 = vadd.f32 %v2386, %v2530
        %v2723 = vadd.f32 %v2387, %v2531
        %v2724 = vadd.f32 %v2388, %v2532
        %v2725 = vadd.f32 %v2389, %v2533
        %v2726 = vadd.f32 %v2390, %v2534
        %v2727 = vadd.f32 %v2391, %v2535
        %v2728 = vadd.f32 %v2392, %v2536
        %v2729 = vadd.f32 %v2393, %v2537
        %v2730 = vadd.f32 %v2394, %v2538
        %v2731 = vadd.f32 %v2395, %v2539
        %v2732 = vadd.f32 %v2396, %v2540
        %v2733 = vadd.f32 %v2397, %v2541
        %v2734 = vadd.f32 %v2398, %v2542
        %v2735 = vadd.f32 %v2399, %v2543
        %v2736 = vadd.f32 %v2400, %v2544
        %v2737 = vadd.f32 %v2401, %v2545
        %v2738 = vmul.f32 %v2714, 0.004433048
        %v2739 = vmul.f32 %v2715, 0.004433048
        %v2740 = vmul.f32 %v2716, 0.004433048
        %v2741 = vmul.f32 %v2717, 0.004433048
        %v2742 = vmul.f32 %v2718, 0.004433048
        %v2743 = vmul.f32 %v2719, 0.004433048
        %v2744 = vmul.f32 %v2720, 0.004433048
        %v2745 = vmul.f32 %v2721, 0.004433048
        %v2746 = vmul.f32 %v2722, 0.004433048
        %v2747 = vmul.f32 %v2723, 0.004433048
        %v2748 = vmul.f32 %v2724, 0.004433048
        %v2749 = vmul.f32 %v2725, 0.004433048
        %v2750 = vmul.f32 %v2726, 0.004433048
        %v2751 = vmul.f32 %v2727, 0.004433048
        %v2752 = vmul.f32 %v2728, 0.004433048
        %v2753 = vmul.f32 %v2729, 0.004433048
        %v2754 = vmul.f32 %v2730, 0.004433048
        %v2755 = vmul.f32 %v2731, 0.004433048
        %v2756 = vmul.f32 %v2732, 0.004433048
        %v2757 = vmul.f32 %v2733, 0.004433048
        %v2758 = vmul.f32 %v2734, 0.004433048
        %v2759 = vmul.f32 %v2735, 0.004433048
        %v2760 = vmul.f32 %v2736, 0.004433048
        %v2761 = vmul.f32 %v2737, 0.004433048
        %v2762 = vadd.f32 %v2690, %v2738
        %v2763 = vadd.f32 %v2691, %v2739
        %v2764 = vadd.f32 %v2692, %v2740
        %v2765 = vadd.f32 %v2693, %v2741
        %v2766 = vadd.f32 %v2694, %v2742
        %v2767 = vadd.f32 %v2695, %v2743
        %v2768 = vadd.f32 %v2696, %v2744
        %v2769 = vadd.f32 %v2697, %v2745
        %v2770 = vadd.f32 %v2698, %v2746
        %v2771 = vadd.f32 %v2699, %v2747
        %v2772 = vadd.f32 %v2700, %v2748
        %v2773 = vadd.f32 %v2701, %v2749
        %v2774 = vadd.f32 %v2702, %v2750
        %v2775 = vadd.f32 %v2703, %v2751
        %v2776 = vadd.f32 %v2704, %v2752
        %v2777 = vadd.f32 %v2705, %v2753
        %v2778 = vadd.f32 %v2706, %v2754
        %v2779 = vadd.f32 %v2707, %v2755
        %v2780 = vadd.f32 %v2708, %v2756
        %v2781 = vadd.f32 %v2709, %v2757
        %v2782 = vadd.f32 %v2710, %v2758
        %v2783 = vadd.f32 %v2711, %v2759
        %v2784 = vadd.f32 %v2712, %v2760
        %v2785 = vadd.f32 %v2713, %v2761
        %v2786 = vld [vmem:[#allocation10] sm:$0xff]
        %v2787 = vld [vmem:[#allocation10 + $0x8] sm:$0xff]
        %v2788 = vld [vmem:[#allocation10 + $0x10] sm:$0xff]
        %v2789 = vld [vmem:[#allocation10 + $0x18] sm:$0xff]
        %v2790 = vld [vmem:[#allocation10 + $0x20] sm:$0xff]
        %v2791 = vld [vmem:[#allocation10 + $0x28] sm:$0xff]
        %v2792 = vld [vmem:[#allocation10 + $0x30] sm:$0xff]
        %v2793 = vld [vmem:[#allocation10 + $0x38] sm:$0xff]
        %v2794 = vld [vmem:[#allocation10 + $0x40] sm:$0xff]
        %v2795 = vld [vmem:[#allocation10 + $0x48] sm:$0xff]
        %v2796 = vld [vmem:[#allocation10 + $0x50] sm:$0xff]
        %v2797 = vld [vmem:[#allocation10 + $0x58] sm:$0xff]
        %v2798 = vld [vmem:[#allocation10 + $0x60] sm:$0xff]
        %v2799 = vld [vmem:[#allocation10 + $0x68] sm:$0xff]
        %v2800 = vld [vmem:[#allocation10 + $0x70] sm:$0xff]
        %v2801 = vld [vmem:[#allocation10 + $0x78] sm:$0xff]
        %2802 = vmatprep.subr.mxu0 0.0
        %v2803 = vand.u32 %v2786, 4294901760
        %2804 = vmatpush1.msra.mxu0 %v2803
        %2805 = vmatprep.subr.mxu0 0.0
        %v2806 = vand.u32 %v2787, 4294901760
        %2807 = vmatpush1.msra.mxu0 %v2806
        %2808 = vmatprep.subr.mxu0 0.0
        %v2809 = vand.u32 %v2788, 4294901760
        %2810 = vmatpush1.msra.mxu0 %v2809
        %2811 = vmatprep.subr.mxu0 0.0
        %v2812 = vand.u32 %v2789, 4294901760
        %2813 = vmatpush1.msra.mxu0 %v2812
        %2814 = vmatprep.subr.mxu0 0.0
        %v2815 = vand.u32 %v2790, 4294901760
        %2816 = vmatpush1.msra.mxu0 %v2815
        %2817 = vmatprep.subr.mxu0 0.0
        %v2818 = vand.u32 %v2791, 4294901760
        %2819 = vmatpush1.msra.mxu0 %v2818
        %2820 = vmatprep.subr.mxu0 0.0
        %v2821 = vand.u32 %v2792, 4294901760
        %2822 = vmatpush1.msra.mxu0 %v2821
        %2823 = vmatprep.subr.mxu0 0.0
        %v2824 = vand.u32 %v2793, 4294901760
        %2825 = vmatpush1.msra.mxu0 %v2824
        %2826 = vmatprep.subr.mxu0 0.0
        %v2827 = vand.u32 %v2794, 4294901760
        %2828 = vmatpush1.msra.mxu0 %v2827
        %2829 = vmatprep.subr.mxu0 0.0
        %v2830 = vand.u32 %v2795, 4294901760
        %2831 = vmatpush1.msra.mxu0 %v2830
        %2832 = vmatprep.subr.mxu0 0.0
        %v2833 = vand.u32 %v2796, 4294901760
        %2834 = vmatpush1.msra.mxu0 %v2833
        %2835 = vmatprep.subr.mxu0 0.0
        %v2836 = vand.u32 %v2797, 4294901760
        %2837 = vmatpush1.msra.mxu0 %v2836
        %2838 = vmatprep.subr.mxu0 0.0
        %v2839 = vand.u32 %v2798, 4294901760
        %2840 = vmatpush1.msra.mxu0 %v2839
        %2841 = vmatprep.subr.mxu0 0.0
        %v2842 = vand.u32 %v2799, 4294901760
        %2843 = vmatpush1.msra.mxu0 %v2842
        %2844 = vmatprep.subr.mxu0 0.0
        %v2845 = vand.u32 %v2800, 4294901760
        %2846 = vmatpush1.msra.mxu0 %v2845
        %2847 = vmatprep.subr.mxu0 0.0
        %v2848 = vand.u32 %v2801, 4294901760
        %2849 = vmatpush1.msra.mxu0 %v2848
        %2850 = vmatprep.subr.mxu0 0.0
        %2851 = vmatpush1.msra.mxu0 0.0
        %2852 = vmatprep.subr.mxu0 0.0
        %2853 = vmatpush1.msra.mxu0 0.0
        %2854 = vmatprep.subr.mxu0 0.0
        %2855 = vmatpush1.msra.mxu0 0.0
        %2856 = vmatprep.subr.mxu0 0.0
        %2857 = vmatpush1.msra.mxu0 0.0
        %2858 = vmatprep.subr.mxu0 0.0
        %2859 = vmatpush1.msra.mxu0 0.0
        %2860 = vmatprep.subr.mxu0 0.0
        %2861 = vmatpush1.msra.mxu0 0.0
        %2862 = vmatprep.subr.mxu0 0.0
        %2863 = vmatpush1.msra.mxu0 0.0
        %2864 = vmatprep.subr.mxu0 0.0
        %2865 = vmatpush1.msra.mxu0 0.0
        %2866 = vmatprep.subr.mxu0 0.0
        %2867 = vmatpush1.msra.mxu0 0.0
        %2868 = vmatprep.subr.mxu0 0.0
        %2869 = vmatpush1.msra.mxu0 0.0
        %2870 = vmatprep.subr.mxu0 0.0
        %2871 = vmatpush1.msra.mxu0 0.0
        %2872 = vmatprep.subr.mxu0 0.0
        %2873 = vmatpush1.msra.mxu0 0.0
        %2874 = vmatprep.subr.mxu0 0.0
        %2875 = vmatpush1.msra.mxu0 0.0
        %2876 = vmatprep.subr.mxu0 0.0
        %2877 = vmatpush1.msra.mxu0 0.0
        %2878 = vmatprep.subr.mxu0 0.0
        %2879 = vmatpush1.msra.mxu0 0.0
        %2880 = vmatprep.subr.mxu0 0.0
        %2881 = vmatpush1.msra.mxu0 0.0
        %2882 = vmatprep.mubr.f32.mxu0 0.0
        %v2883 = vand.u32 %v2762, 4294901760
        %v2884 = vsub.f32 %v2762, %v2883
        %v2885 = vand.u32 %v2884, 4294901760
        %v2886 = vsub.f32 %v2884, %v2885
        %v2887 = vand.u32 %v2886, 4294901760
        %2888 = vmatmul.mubr.f32.gmra.mrb[0].mxu0 %v2887
        %v2889 = vpop.f32.mrb[0].mxu0
        %v2890 = vadd.f32 0.0, %v2889
        %v2891 = vpop.f32.mrb[0].mxu0
        %2892 = vmatprep.mubr.f32.mxu0 0.0
        %v2893 = vand.u32 %v2763, 4294901760
        %v2894 = vsub.f32 %v2763, %v2893
        %v2895 = vand.u32 %v2894, 4294901760
        %v2896 = vsub.f32 %v2894, %v2895
        %v2897 = vand.u32 %v2896, 4294901760
        %2898 = vmatmul.mubr.f32.gmra.mrb[0].mxu0 %v2897
        %v2899 = vpop.f32.mrb[0].mxu0
        %v2900 = vadd.f32 0.0, %v2899
        %v2901 = vpop.f32.mrb[0].mxu0
        %2902 = vmatprep.mubr.f32.mxu0 0.0
        %v2903 = vand.u32 %v2764, 4294901760
        %v2904 = vsub.f32 %v2764, %v2903
        %v2905 = vand.u32 %v2904, 4294901760
        %v2906 = vsub.f32 %v2904, %v2905
        %v2907 = vand.u32 %v2906, 4294901760
        %2908 = vmatmul.mubr.f32.gmra.mrb[0].mxu0 %v2907
        %v2909 = vpop.f32.mrb[0].mxu0
        %v2910 = vadd.f32 0.0, %v2909
        %v2911 = vpop.f32.mrb[0].mxu0
        %2912 = vmatprep.mubr.f32.mxu0 0.0
        %v2913 = vand.u32 %v2765, 4294901760
        %v2914 = vsub.f32 %v2765, %v2913
        %v2915 = vand.u32 %v2914, 4294901760
        %v2916 = vsub.f32 %v2914, %v2915
        %v2917 = vand.u32 %v2916, 4294901760
        %2918 = vmatmul.mubr.f32.gmra.mrb[0].mxu0 %v2917
        %v2919 = vpop.f32.mrb[0].mxu0
        %v2920 = vadd.f32 0.0, %v2919
        %v2921 = vpop.f32.mrb[0].mxu0
        %2922 = vmatprep.mubr.f32.mxu0 0.0
        %v2923 = vand.u32 %v2766, 4294901760
        %v2924 = vsub.f32 %v2766, %v2923
        %v2925 = vand.u32 %v2924, 4294901760
        %v2926 = vsub.f32 %v2924, %v2925
        %v2927 = vand.u32 %v2926, 4294901760
        %2928 = vmatmul.mubr.f32.gmra.mrb[0].mxu0 %v2927
        %v2929 = vpop.f32.mrb[0].mxu0
        %v2930 = vadd.f32 0.0, %v2929
        %v2931 = vpop.f32.mrb[0].mxu0
        %2932 = vmatprep.mubr.f32.mxu0 0.0
        %v2933 = vand.u32 %v2767, 4294901760
        %v2934 = vsub.f32 %v2767, %v2933
        %v2935 = vand.u32 %v2934, 4294901760
        %v2936 = vsub.f32 %v2934, %v2935
        %v2937 = vand.u32 %v2936, 4294901760
        %2938 = vmatmul.mubr.f32.gmra.mrb[0].mxu0 %v2937
        %v2939 = vpop.f32.mrb[0].mxu0
        %v2940 = vadd.f32 0.0, %v2939
        %v2941 = vpop.f32.mrb[0].mxu0
        %2942 = vmatprep.mubr.f32.mxu0 0.0
        %v2943 = vand.u32 %v2768, 4294901760
        %v2944 = vsub.f32 %v2768, %v2943
        %v2945 = vand.u32 %v2944, 4294901760
        %v2946 = vsub.f32 %v2944, %v2945
        %v2947 = vand.u32 %v2946, 4294901760
        %2948 = vmatmul.mubr.f32.gmra.mrb[0].mxu0 %v2947
        %v2949 = vpop.f32.mrb[0].mxu0
        %v2950 = vadd.f32 0.0, %v2949
        %v2951 = vpop.f32.mrb[0].mxu0
        %2952 = vmatprep.mubr.f32.mxu0 0.0
        %v2953 = vand.u32 %v2769, 4294901760
        %v2954 = vsub.f32 %v2769, %v2953
        %v2955 = vand.u32 %v2954, 4294901760
        %v2956 = vsub.f32 %v2954, %v2955
        %v2957 = vand.u32 %v2956, 4294901760
        %2958 = vmatmul.mubr.f32.gmra.mrb[0].mxu0 %v2957
        %v2959 = vpop.f32.mrb[0].mxu0
        %v2960 = vadd.f32 0.0, %v2959
        %v2961 = vpop.f32.mrb[0].mxu0
        %2962 = vmatprep.mubr.f32.mxu0 0.0
        %v2963 = vand.u32 %v2770, 4294901760
        %v2964 = vsub.f32 %v2770, %v2963
        %v2965 = vand.u32 %v2964, 4294901760
        %v2966 = vsub.f32 %v2964, %v2965
        %v2967 = vand.u32 %v2966, 4294901760
        %2968 = vmatmul.mubr.f32.gmra.mrb[0].mxu0 %v2967
        %v2969 = vpop.f32.mrb[0].mxu0
        %v2970 = vadd.f32 0.0, %v2969
        %v2971 = vpop.f32.mrb[0].mxu0
        %2972 = vmatprep.mubr.f32.mxu0 0.0
        %v2973 = vand.u32 %v2771, 4294901760
        %v2974 = vsub.f32 %v2771, %v2973
        %v2975 = vand.u32 %v2974, 4294901760
        %v2976 = vsub.f32 %v2974, %v2975
        %v2977 = vand.u32 %v2976, 4294901760
        %2978 = vmatmul.mubr.f32.gmra.mrb[0].mxu0 %v2977
        %v2979 = vpop.f32.mrb[0].mxu0
        %v2980 = vadd.f32 0.0, %v2979
        %v2981 = vpop.f32.mrb[0].mxu0
        %2982 = vmatprep.mubr.f32.mxu0 0.0
        %v2983 = vand.u32 %v2772, 4294901760
        %v2984 = vsub.f32 %v2772, %v2983
        %v2985 = vand.u32 %v2984, 4294901760
        %v2986 = vsub.f32 %v2984, %v2985
        %v2987 = vand.u32 %v2986, 4294901760
        %2988 = vmatmul.mubr.f32.gmra.mrb[0].mxu0 %v2987
        %v2989 = vpop.f32.mrb[0].mxu0
        %v2990 = vadd.f32 0.0, %v2989
        %v2991 = vpop.f32.mrb[0].mxu0
        %2992 = vmatprep.mubr.f32.mxu0 0.0
        %v2993 = vand.u32 %v2773, 4294901760
        %v2994 = vsub.f32 %v2773, %v2993
        %v2995 = vand.u32 %v2994, 4294901760
        %v2996 = vsub.f32 %v2994, %v2995
        %v2997 = vand.u32 %v2996, 4294901760
        %2998 = vmatmul.mubr.f32.gmra.mrb[0].mxu0 %v2997
        %v2999 = vpop.f32.mrb[0].mxu0
        %v3000 = vadd.f32 0.0, %v2999
        %v3001 = vpop.f32.mrb[0].mxu0
        %3002 = vmatprep.mubr.f32.mxu0 0.0
        %v3003 = vand.u32 %v2774, 4294901760
        %v3004 = vsub.f32 %v2774, %v3003
        %v3005 = vand.u32 %v3004, 4294901760
        %v3006 = vsub.f32 %v3004, %v3005
        %v3007 = vand.u32 %v3006, 4294901760
        %3008 = vmatmul.mubr.f32.gmra.mrb[0].mxu0 %v3007
        %v3009 = vpop.f32.mrb[0].mxu0
        %v3010 = vadd.f32 0.0, %v3009
        %v3011 = vpop.f32.mrb[0].mxu0
        %3012 = vmatprep.mubr.f32.mxu0 0.0
        %v3013 = vand.u32 %v2775, 4294901760
        %v3014 = vsub.f32 %v2775, %v3013
        %v3015 = vand.u32 %v3014, 4294901760
        %v3016 = vsub.f32 %v3014, %v3015
        %v3017 = vand.u32 %v3016, 4294901760
        %3018 = vmatmul.mubr.f32.gmra.mrb[0].mxu0 %v3017
        %v3019 = vpop.f32.mrb[0].mxu0
        %v3020 = vadd.f32 0.0, %v3019
        %v3021 = vpop.f32.mrb[0].mxu0
        %3022 = vmatprep.mubr.f32.mxu0 0.0
        %v3023 = vand.u32 %v2776, 4294901760
        %v3024 = vsub.f32 %v2776, %v3023
        %v3025 = vand.u32 %v3024, 4294901760
        %v3026 = vsub.f32 %v3024, %v3025
        %v3027 = vand.u32 %v3026, 4294901760
        %3028 = vmatmul.mubr.f32.gmra.mrb[0].mxu0 %v3027
        %v3029 = vpop.f32.mrb[0].mxu0
        %v3030 = vadd.f32 0.0, %v3029
        %v3031 = vpop.f32.mrb[0].mxu0
        %3032 = vmatprep.mubr.f32.mxu0 0.0
        %v3033 = vand.u32 %v2777, 4294901760
        %v3034 = vsub.f32 %v2777, %v3033
        %v3035 = vand.u32 %v3034, 4294901760
        %v3036 = vsub.f32 %v3034, %v3035
        %v3037 = vand.u32 %v3036, 4294901760
        %3038 = vmatmul.mubr.f32.gmra.mrb[0].mxu0 %v3037
        %v3039 = vpop.f32.mrb[0].mxu0
        %v3040 = vadd.f32 0.0, %v3039
        %v3041 = vpop.f32.mrb[0].mxu0
        %3042 = vmatprep.mubr.f32.mxu0 0.0
        %v3043 = vand.u32 %v2778, 4294901760
        %v3044 = vsub.f32 %v2778, %v3043
        %v3045 = vand.u32 %v3044, 4294901760
        %v3046 = vsub.f32 %v3044, %v3045
        %v3047 = vand.u32 %v3046, 4294901760
        %3048 = vmatmul.mubr.f32.gmra.mrb[0].mxu0 %v3047
        %v3049 = vpop.f32.mrb[0].mxu0
        %v3050 = vadd.f32 0.0, %v3049
        %v3051 = vpop.f32.mrb[0].mxu0
        %3052 = vmatprep.mubr.f32.mxu0 0.0
        %v3053 = vand.u32 %v2779, 4294901760
        %v3054 = vsub.f32 %v2779, %v3053
        %v3055 = vand.u32 %v3054, 4294901760
        %v3056 = vsub.f32 %v3054, %v3055
        %v3057 = vand.u32 %v3056, 4294901760
        %3058 = vmatmul.mubr.f32.gmra.mrb[0].mxu0 %v3057
        %v3059 = vpop.f32.mrb[0].mxu0
        %v3060 = vadd.f32 0.0, %v3059
        %v3061 = vpop.f32.mrb[0].mxu0
        %3062 = vmatprep.mubr.f32.mxu0 0.0
        %v3063 = vand.u32 %v2780, 4294901760
        %v3064 = vsub.f32 %v2780, %v3063
        %v3065 = vand.u32 %v3064, 4294901760
        %v3066 = vsub.f32 %v3064, %v3065
        %v3067 = vand.u32 %v3066, 4294901760
        %3068 = vmatmul.mubr.f32.gmra.mrb[0].mxu0 %v3067
        %v3069 = vpop.f32.mrb[0].mxu0
        %v3070 = vadd.f32 0.0, %v3069
        %v3071 = vpop.f32.mrb[0].mxu0
        %3072 = vmatprep.mubr.f32.mxu0 0.0
        %v3073 = vand.u32 %v2781, 4294901760
        %v3074 = vsub.f32 %v2781, %v3073
        %v3075 = vand.u32 %v3074, 4294901760
        %v3076 = vsub.f32 %v3074, %v3075
        %v3077 = vand.u32 %v3076, 4294901760
        %3078 = vmatmul.mubr.f32.gmra.mrb[0].mxu0 %v3077
        %v3079 = vpop.f32.mrb[0].mxu0
        %v3080 = vadd.f32 0.0, %v3079
        %v3081 = vpop.f32.mrb[0].mxu0
        %3082 = vmatprep.mubr.f32.mxu0 0.0
        %v3083 = vand.u32 %v2782, 4294901760
        %v3084 = vsub.f32 %v2782, %v3083
        %v3085 = vand.u32 %v3084, 4294901760
        %v3086 = vsub.f32 %v3084, %v3085
        %v3087 = vand.u32 %v3086, 4294901760
        %3088 = vmatmul.mubr.f32.gmra.mrb[0].mxu0 %v3087
        %v3089 = vpop.f32.mrb[0].mxu0
        %v3090 = vadd.f32 0.0, %v3089
        %v3091 = vpop.f32.mrb[0].mxu0
        %3092 = vmatprep.mubr.f32.mxu0 0.0
        %v3093 = vand.u32 %v2783, 4294901760
        %v3094 = vsub.f32 %v2783, %v3093
        %v3095 = vand.u32 %v3094, 4294901760
        %v3096 = vsub.f32 %v3094, %v3095
        %v3097 = vand.u32 %v3096, 4294901760
        %3098 = vmatmul.mubr.f32.gmra.mrb[0].mxu0 %v3097
        %v3099 = vpop.f32.mrb[0].mxu0
        %v3100 = vadd.f32 0.0, %v3099
        %v3101 = vpop.f32.mrb[0].mxu0
        %3102 = vmatprep.mubr.f32.mxu0 0.0
        %v3103 = vand.u32 %v2784, 4294901760
        %v3104 = vsub.f32 %v2784, %v3103
        %v3105 = vand.u32 %v3104, 4294901760
        %v3106 = vsub.f32 %v3104, %v3105
        %v3107 = vand.u32 %v3106, 4294901760
        %3108 = vmatmul.mubr.f32.gmra.mrb[0].mxu0 %v3107
        %v3109 = vpop.f32.mrb[0].mxu0
        %v3110 = vadd.f32 0.0, %v3109
        %v3111 = vpop.f32.mrb[0].mxu0
        %3112 = vmatprep.mubr.f32.mxu0 0.0
        %v3113 = vand.u32 %v2785, 4294901760
        %v3114 = vsub.f32 %v2785, %v3113
        %v3115 = vand.u32 %v3114, 4294901760
        %v3116 = vsub.f32 %v3114, %v3115
        %v3117 = vand.u32 %v3116, 4294901760
        %3118 = vmatmul.mubr.f32.gmra.mrb[0].mxu0 %v3117
        %v3119 = vpop.f32.mrb[0].mxu0
        %v3120 = vadd.f32 0.0, %v3119
        %v3121 = vpop.f32.mrb[0].mxu0
        %3122 = vdwg.mxu0
        %3123 = vmatprep.subr.mxu0 0.0
        %v3124 = vand.u32 %v2786, 4294901760
        %v3125 = vsub.f32 %v2786, %v3124
        %v3126 = vand.u32 %v3125, 4294901760
        %v3127 = vsub.f32 %v3125, %v3126
        %v3128 = vand.u32 %v3127, 4294901760
        %3129 = vmatpush1.msra.mxu0 %v3128
        %3130 = vmatprep.subr.mxu0 0.0
        %v3131 = vand.u32 %v2787, 4294901760
        %v3132 = vsub.f32 %v2787, %v3131
        %v3133 = vand.u32 %v3132, 4294901760
        %v3134 = vsub.f32 %v3132, %v3133
        %v3135 = vand.u32 %v3134, 4294901760
        %3136 = vmatpush1.msra.mxu0 %v3135
        %3137 = vmatprep.subr.mxu0 0.0
        %v3138 = vand.u32 %v2788, 4294901760
        %v3139 = vsub.f32 %v2788, %v3138
        %v3140 = vand.u32 %v3139, 4294901760
        %v3141 = vsub.f32 %v3139, %v3140
        %v3142 = vand.u32 %v3141, 4294901760
        %3143 = vmatpush1.msra.mxu0 %v3142
        %3144 = vmatprep.subr.mxu0 0.0
        %v3145 = vand.u32 %v2789, 4294901760
        %v3146 = vsub.f32 %v2789, %v3145
        %v3147 = vand.u32 %v3146, 4294901760
        %v3148 = vsub.f32 %v3146, %v3147
        %v3149 = vand.u32 %v3148, 4294901760
        %3150 = vmatpush1.msra.mxu0 %v3149
        %3151 = vmatprep.subr.mxu0 0.0
        %v3152 = vand.u32 %v2790, 4294901760
        %v3153 = vsub.f32 %v2790, %v3152
        %v3154 = vand.u32 %v3153, 4294901760
        %v3155 = vsub.f32 %v3153, %v3154
        %v3156 = vand.u32 %v3155, 4294901760
        %3157 = vmatpush1.msra.mxu0 %v3156
        %3158 = vmatprep.subr.mxu0 0.0
        %v3159 = vand.u32 %v2791, 4294901760
        %v3160 = vsub.f32 %v2791, %v3159
        %v3161 = vand.u32 %v3160, 4294901760
        %v3162 = vsub.f32 %v3160, %v3161
        %v3163 = vand.u32 %v3162, 4294901760
        %3164 = vmatpush1.msra.mxu0 %v3163
        %3165 = vmatprep.subr.mxu0 0.0
        %v3166 = vand.u32 %v2792, 4294901760
        %v3167 = vsub.f32 %v2792, %v3166
        %v3168 = vand.u32 %v3167, 4294901760
        %v3169 = vsub.f32 %v3167, %v3168
        %v3170 = vand.u32 %v3169, 4294901760
        %3171 = vmatpush1.msra.mxu0 %v3170
        %3172 = vmatprep.subr.mxu0 0.0
        %v3173 = vand.u32 %v2793, 4294901760
        %v3174 = vsub.f32 %v2793, %v3173
        %v3175 = vand.u32 %v3174, 4294901760
        %v3176 = vsub.f32 %v3174, %v3175
        %v3177 = vand.u32 %v3176, 4294901760
        %3178 = vmatpush1.msra.mxu0 %v3177
        %3179 = vmatprep.subr.mxu0 0.0
        %v3180 = vand.u32 %v2794, 4294901760
        %v3181 = vsub.f32 %v2794, %v3180
        %v3182 = vand.u32 %v3181, 4294901760
        %v3183 = vsub.f32 %v3181, %v3182
        %v3184 = vand.u32 %v3183, 4294901760
        %3185 = vmatpush1.msra.mxu0 %v3184
        %3186 = vmatprep.subr.mxu0 0.0
        %v3187 = vand.u32 %v2795, 4294901760
        %v3188 = vsub.f32 %v2795, %v3187
        %v3189 = vand.u32 %v3188, 4294901760
        %v3190 = vsub.f32 %v3188, %v3189
        %v3191 = vand.u32 %v3190, 4294901760
        %3192 = vmatpush1.msra.mxu0 %v3191
        %3193 = vmatprep.subr.mxu0 0.0
        %v3194 = vand.u32 %v2796, 4294901760
        %v3195 = vsub.f32 %v2796, %v3194
        %v3196 = vand.u32 %v3195, 4294901760
        %v3197 = vsub.f32 %v3195, %v3196
        %v3198 = vand.u32 %v3197, 4294901760
        %3199 = vmatpush1.msra.mxu0 %v3198
        %3200 = vmatprep.subr.mxu0 0.0
        %v3201 = vand.u32 %v2797, 4294901760
        %v3202 = vsub.f32 %v2797, %v3201
        %v3203 = vand.u32 %v3202, 4294901760
        %v3204 = vsub.f32 %v3202, %v3203
        %v3205 = vand.u32 %v3204, 4294901760
        %3206 = vmatpush1.msra.mxu0 %v3205
        %3207 = vmatprep.subr.mxu0 0.0
        %v3208 = vand.u32 %v2798, 4294901760
        %v3209 = vsub.f32 %v2798, %v3208
        %v3210 = vand.u32 %v3209, 4294901760
        %v3211 = vsub.f32 %v3209, %v3210
        %v3212 = vand.u32 %v3211, 4294901760
        %3213 = vmatpush1.msra.mxu0 %v3212
        %3214 = vmatprep.subr.mxu0 0.0
        %v3215 = vand.u32 %v2799, 4294901760
        %v3216 = vsub.f32 %v2799, %v3215
        %v3217 = vand.u32 %v3216, 4294901760
        %v3218 = vsub.f32 %v3216, %v3217
        %v3219 = vand.u32 %v3218, 4294901760
        %3220 = vmatpush1.msra.mxu0 %v3219
        %3221 = vmatprep.subr.mxu0 0.0
        %v3222 = vand.u32 %v2800, 4294901760
        %v3223 = vsub.f32 %v2800, %v3222
        %v3224 = vand.u32 %v3223, 4294901760
        %v3225 = vsub.f32 %v3223, %v3224
        %v3226 = vand.u32 %v3225, 4294901760
        %3227 = vmatpush1.msra.mxu0 %v3226
        %3228 = vmatprep.subr.mxu0 0.0
        %v3229 = vand.u32 %v2801, 4294901760
        %v3230 = vsub.f32 %v2801, %v3229
        %v3231 = vand.u32 %v3230, 4294901760
        %v3232 = vsub.f32 %v3230, %v3231
        %v3233 = vand.u32 %v3232, 4294901760
        %3234 = vmatpush1.msra.mxu0 %v3233
        %3235 = vmatprep.subr.mxu0 0.0
        %3236 = vmatpush1.msra.mxu0 0.0
        %3237 = vmatprep.subr.mxu0 0.0
        %3238 = vmatpush1.msra.mxu0 0.0
        %3239 = vmatprep.subr.mxu0 0.0
        %3240 = vmatpush1.msra.mxu0 0.0
        %3241 = vmatprep.subr.mxu0 0.0
        %3242 = vmatpush1.msra.mxu0 0.0
        %3243 = vmatprep.subr.mxu0 0.0
        %3244 = vmatpush1.msra.mxu0 0.0
        %3245 = vmatprep.subr.mxu0 0.0
        %3246 = vmatpush1.msra.mxu0 0.0
        %3247 = vmatprep.subr.mxu0 0.0
        %3248 = vmatpush1.msra.mxu0 0.0
        %3249 = vmatprep.subr.mxu0 0.0
        %3250 = vmatpush1.msra.mxu0 0.0
        %3251 = vmatprep.subr.mxu0 0.0
        %3252 = vmatpush1.msra.mxu0 0.0
        %3253 = vmatprep.subr.mxu0 0.0
        %3254 = vmatpush1.msra.mxu0 0.0
        %3255 = vmatprep.subr.mxu0 0.0
        %3256 = vmatpush1.msra.mxu0 0.0
        %3257 = vmatprep.subr.mxu0 0.0
        %3258 = vmatpush1.msra.mxu0 0.0
        %3259 = vmatprep.subr.mxu0 0.0
        %3260 = vmatpush1.msra.mxu0 0.0
        %3261 = vmatprep.subr.mxu0 0.0
        %3262 = vmatpush1.msra.mxu0 0.0
        %3263 = vmatprep.subr.mxu0 0.0
        %3264 = vmatpush1.msra.mxu0 0.0
        %3265 = vmatprep.subr.mxu0 0.0
        %3266 = vmatpush1.msra.mxu0 0.0
        %3267 = vmatprep.mubr.f32.mxu0 0.0
        %v3268 = vand.u32 %v2762, 4294901760
        %3269 = vmatmul.mubr.f32.gmra.mrb[0].mxu0 %v3268
        %v3270 = vpop.f32.mrb[0].mxu0
        %v3271 = vadd.f32 %v2890, %v3270
        %v3272 = vpop.f32.mrb[0].mxu0
        %3273 = vmatprep.mubr.f32.mxu0 0.0
        %v3274 = vand.u32 %v2763, 4294901760
        %3275 = vmatmul.mubr.f32.gmra.mrb[0].mxu0 %v3274
        %v3276 = vpop.f32.mrb[0].mxu0
        %v3277 = vadd.f32 %v2900, %v3276
        %v3278 = vpop.f32.mrb[0].mxu0
        %3279 = vmatprep.mubr.f32.mxu0 0.0
        %v3280 = vand.u32 %v2764, 4294901760
        %3281 = vmatmul.mubr.f32.gmra.mrb[0].mxu0 %v3280
        %v3282 = vpop.f32.mrb[0].mxu0
        %v3283 = vadd.f32 %v2910, %v3282
        %v3284 = vpop.f32.mrb[0].mxu0
        %3285 = vmatprep.mubr.f32.mxu0 0.0
        %v3286 = vand.u32 %v2765, 4294901760
        %3287 = vmatmul.mubr.f32.gmra.mrb[0].mxu0 %v3286
        %v3288 = vpop.f32.mrb[0].mxu0
        %v3289 = vadd.f32 %v2920, %v3288
        %v3290 = vpop.f32.mrb[0].mxu0
        %3291 = vmatprep.mubr.f32.mxu0 0.0
        %v3292 = vand.u32 %v2766, 4294901760
        %3293 = vmatmul.mubr.f32.gmra.mrb[0].mxu0 %v3292
        %v3294 = vpop.f32.mrb[0].mxu0
        %v3295 = vadd.f32 %v2930, %v3294
        %v3296 = vpop.f32.mrb[0].mxu0
        %3297 = vmatprep.mubr.f32.mxu0 0.0
        %v3298 = vand.u32 %v2767, 4294901760
        %3299 = vmatmul.mubr.f32.gmra.mrb[0].mxu0 %v3298
        %v3300 = vpop.f32.mrb[0].mxu0
        %v3301 = vadd.f32 %v2940, %v3300
        %v3302 = vpop.f32.mrb[0].mxu0
        %3303 = vmatprep.mubr.f32.mxu0 0.0
        %v3304 = vand.u32 %v2768, 4294901760
        %3305 = vmatmul.mubr.f32.gmra.mrb[0].mxu0 %v3304
        %v3306 = vpop.f32.mrb[0].mxu0
        %v3307 = vadd.f32 %v2950, %v3306
        %v3308 = vpop.f32.mrb[0].mxu0
        %3309 = vmatprep.mubr.f32.mxu0 0.0
        %v3310 = vand.u32 %v2769, 4294901760
        %3311 = vmatmul.mubr.f32.gmra.mrb[0].mxu0 %v3310
        %v3312 = vpop.f32.mrb[0].mxu0
        %v3313 = vadd.f32 %v2960, %v3312
        %v3314 = vpop.f32.mrb[0].mxu0
        %3315 = vmatprep.mubr.f32.mxu0 0.0
        %v3316 = vand.u32 %v2770, 4294901760
        %3317 = vmatmul.mubr.f32.gmra.mrb[0].mxu0 %v3316
        %v3318 = vpop.f32.mrb[0].mxu0
        %v3319 = vadd.f32 %v2970, %v3318
        %v3320 = vpop.f32.mrb[0].mxu0
        %3321 = vmatprep.mubr.f32.mxu0 0.0
        %v3322 = vand.u32 %v2771, 4294901760
        %3323 = vmatmul.mubr.f32.gmra.mrb[0].mxu0 %v3322
        %v3324 = vpop.f32.mrb[0].mxu0
        %v3325 = vadd.f32 %v2980, %v3324
        %v3326 = vpop.f32.mrb[0].mxu0
        %3327 = vmatprep.mubr.f32.mxu0 0.0
        %v3328 = vand.u32 %v2772, 4294901760
        %3329 = vmatmul.mubr.f32.gmra.mrb[0].mxu0 %v3328
        %v3330 = vpop.f32.mrb[0].mxu0
        %v3331 = vadd.f32 %v2990, %v3330
        %v3332 = vpop.f32.mrb[0].mxu0
        %3333 = vmatprep.mubr.f32.mxu0 0.0
        %v3334 = vand.u32 %v2773, 4294901760
        %3335 = vmatmul.mubr.f32.gmra.mrb[0].mxu0 %v3334
        %v3336 = vpop.f32.mrb[0].mxu0
        %v3337 = vadd.f32 %v3000, %v3336
        %v3338 = vpop.f32.mrb[0].mxu0
        %3339 = vmatprep.mubr.f32.mxu0 0.0
        %v3340 = vand.u32 %v2774, 4294901760
        %3341 = vmatmul.mubr.f32.gmra.mrb[0].mxu0 %v3340
        %v3342 = vpop.f32.mrb[0].mxu0
        %v3343 = vadd.f32 %v3010, %v3342
        %v3344 = vpop.f32.mrb[0].mxu0
        %3345 = vmatprep.mubr.f32.mxu0 0.0
        %v3346 = vand.u32 %v2775, 4294901760
        %3347 = vmatmul.mubr.f32.gmra.mrb[0].mxu0 %v3346
        %v3348 = vpop.f32.mrb[0].mxu0
        %v3349 = vadd.f32 %v3020, %v3348
        %v3350 = vpop.f32.mrb[0].mxu0
        %3351 = vmatprep.mubr.f32.mxu0 0.0
        %v3352 = vand.u32 %v2776, 4294901760
        %3353 = vmatmul.mubr.f32.gmra.mrb[0].mxu0 %v3352
        %v3354 = vpop.f32.mrb[0].mxu0
        %v3355 = vadd.f32 %v3030, %v3354
        %v3356 = vpop.f32.mrb[0].mxu0
        %3357 = vmatprep.mubr.f32.mxu0 0.0
        %v3358 = vand.u32 %v2777, 4294901760
        %3359 = vmatmul.mubr.f32.gmra.mrb[0].mxu0 %v3358
        %v3360 = vpop.f32.mrb[0].mxu0
        %v3361 = vadd.f32 %v3040, %v3360
        %v3362 = vpop.f32.mrb[0].mxu0
        %3363 = vmatprep.mubr.f32.mxu0 0.0
        %v3364 = vand.u32 %v2778, 4294901760
        %3365 = vmatmul.mubr.f32.gmra.mrb[0].mxu0 %v3364
        %v3366 = vpop.f32.mrb[0].mxu0
        %v3367 = vadd.f32 %v3050, %v3366
        %v3368 = vpop.f32.mrb[0].mxu0
        %3369 = vmatprep.mubr.f32.mxu0 0.0
        %v3370 = vand.u32 %v2779, 4294901760
        %3371 = vmatmul.mubr.f32.gmra.mrb[0].mxu0 %v3370
        %v3372 = vpop.f32.mrb[0].mxu0
        %v3373 = vadd.f32 %v3060, %v3372
        %v3374 = vpop.f32.mrb[0].mxu0
        %3375 = vmatprep.mubr.f32.mxu0 0.0
        %v3376 = vand.u32 %v2780, 4294901760
        %3377 = vmatmul.mubr.f32.gmra.mrb[0].mxu0 %v3376
        %v3378 = vpop.f32.mrb[0].mxu0
        %v3379 = vadd.f32 %v3070, %v3378
        %v3380 = vpop.f32.mrb[0].mxu0
        %3381 = vmatprep.mubr.f32.mxu0 0.0
        %v3382 = vand.u32 %v2781, 4294901760
        %3383 = vmatmul.mubr.f32.gmra.mrb[0].mxu0 %v3382
        %v3384 = vpop.f32.mrb[0].mxu0
        %v3385 = vadd.f32 %v3080, %v3384
        %v3386 = vpop.f32.mrb[0].mxu0
        %3387 = vmatprep.mubr.f32.mxu0 0.0
        %v3388 = vand.u32 %v2782, 4294901760
        %3389 = vmatmul.mubr.f32.gmra.mrb[0].mxu0 %v3388
        %v3390 = vpop.f32.mrb[0].mxu0
        %v3391 = vadd.f32 %v3090, %v3390
        %v3392 = vpop.f32.mrb[0].mxu0
        %3393 = vmatprep.mubr.f32.mxu0 0.0
        %v3394 = vand.u32 %v2783, 4294901760
        %3395 = vmatmul.mubr.f32.gmra.mrb[0].mxu0 %v3394
        %v3396 = vpop.f32.mrb[0].mxu0
        %v3397 = vadd.f32 %v3100, %v3396
        %v3398 = vpop.f32.mrb[0].mxu0
        %3399 = vmatprep.mubr.f32.mxu0 0.0
        %v3400 = vand.u32 %v2784, 4294901760
        %3401 = vmatmul.mubr.f32.gmra.mrb[0].mxu0 %v3400
        %v3402 = vpop.f32.mrb[0].mxu0
        %v3403 = vadd.f32 %v3110, %v3402
        %v3404 = vpop.f32.mrb[0].mxu0
        %3405 = vmatprep.mubr.f32.mxu0 0.0
        %v3406 = vand.u32 %v2785, 4294901760
        %3407 = vmatmul.mubr.f32.gmra.mrb[0].mxu0 %v3406
        %v3408 = vpop.f32.mrb[0].mxu0
        %v3409 = vadd.f32 %v3120, %v3408
        %v3410 = vpop.f32.mrb[0].mxu0
        %3411 = vdwg.mxu0
        %3412 = vmatprep.subr.mxu0 0.0
        %v3413 = vand.u32 %v2786, 4294901760
        %v3414 = vsub.f32 %v2786, %v3413
        %3415 = vmatpush1.msra.mxu0 %v3414
        %3416 = vmatprep.subr.mxu0 0.0
        %v3417 = vand.u32 %v2787, 4294901760
        %v3418 = vsub.f32 %v2787, %v3417
        %3419 = vmatpush1.msra.mxu0 %v3418
        %3420 = vmatprep.subr.mxu0 0.0
        %v3421 = vand.u32 %v2788, 4294901760
        %v3422 = vsub.f32 %v2788, %v3421
        %3423 = vmatpush1.msra.mxu0 %v3422
        %3424 = vmatprep.subr.mxu0 0.0
        %v3425 = vand.u32 %v2789, 4294901760
        %v3426 = vsub.f32 %v2789, %v3425
        %3427 = vmatpush1.msra.mxu0 %v3426
        %3428 = vmatprep.subr.mxu0 0.0
        %v3429 = vand.u32 %v2790, 4294901760
        %v3430 = vsub.f32 %v2790, %v3429
        %3431 = vmatpush1.msra.mxu0 %v3430
        %3432 = vmatprep.subr.mxu0 0.0
        %v3433 = vand.u32 %v2791, 4294901760
        %v3434 = vsub.f32 %v2791, %v3433
        %3435 = vmatpush1.msra.mxu0 %v3434
        %3436 = vmatprep.subr.mxu0 0.0
        %v3437 = vand.u32 %v2792, 4294901760
        %v3438 = vsub.f32 %v2792, %v3437
        %3439 = vmatpush1.msra.mxu0 %v3438
        %3440 = vmatprep.subr.mxu0 0.0
        %v3441 = vand.u32 %v2793, 4294901760
        %v3442 = vsub.f32 %v2793, %v3441
        %3443 = vmatpush1.msra.mxu0 %v3442
        %3444 = vmatprep.subr.mxu0 0.0
        %v3445 = vand.u32 %v2794, 4294901760
        %v3446 = vsub.f32 %v2794, %v3445
        %3447 = vmatpush1.msra.mxu0 %v3446
        %3448 = vmatprep.subr.mxu0 0.0
        %v3449 = vand.u32 %v2795, 4294901760
        %v3450 = vsub.f32 %v2795, %v3449
        %3451 = vmatpush1.msra.mxu0 %v3450
        %3452 = vmatprep.subr.mxu0 0.0
        %v3453 = vand.u32 %v2796, 4294901760
        %v3454 = vsub.f32 %v2796, %v3453
        %3455 = vmatpush1.msra.mxu0 %v3454
        %3456 = vmatprep.subr.mxu0 0.0
        %v3457 = vand.u32 %v2797, 4294901760
        %v3458 = vsub.f32 %v2797, %v3457
        %3459 = vmatpush1.msra.mxu0 %v3458
        %3460 = vmatprep.subr.mxu0 0.0
        %v3461 = vand.u32 %v2798, 4294901760
        %v3462 = vsub.f32 %v2798, %v3461
        %3463 = vmatpush1.msra.mxu0 %v3462
        %3464 = vmatprep.subr.mxu0 0.0
        %v3465 = vand.u32 %v2799, 4294901760
        %v3466 = vsub.f32 %v2799, %v3465
        %3467 = vmatpush1.msra.mxu0 %v3466
        %3468 = vmatprep.subr.mxu0 0.0
        %v3469 = vand.u32 %v2800, 4294901760
        %v3470 = vsub.f32 %v2800, %v3469
        %3471 = vmatpush1.msra.mxu0 %v3470
        %3472 = vmatprep.subr.mxu0 0.0
        %v3473 = vand.u32 %v2801, 4294901760
        %v3474 = vsub.f32 %v2801, %v3473
        %3475 = vmatpush1.msra.mxu0 %v3474
        %3476 = vmatprep.subr.mxu0 0.0
        %3477 = vmatpush1.msra.mxu0 0.0
        %3478 = vmatprep.subr.mxu0 0.0
        %3479 = vmatpush1.msra.mxu0 0.0
        %3480 = vmatprep.subr.mxu0 0.0
        %3481 = vmatpush1.msra.mxu0 0.0
        %3482 = vmatprep.subr.mxu0 0.0
        %3483 = vmatpush1.msra.mxu0 0.0
        %3484 = vmatprep.subr.mxu0 0.0
        %3485 = vmatpush1.msra.mxu0 0.0
        %3486 = vmatprep.subr.mxu0 0.0
        %3487 = vmatpush1.msra.mxu0 0.0
        %3488 = vmatprep.subr.mxu0 0.0
        %3489 = vmatpush1.msra.mxu0 0.0
        %3490 = vmatprep.subr.mxu0 0.0
        %3491 = vmatpush1.msra.mxu0 0.0
        %3492 = vmatprep.subr.mxu0 0.0
        %3493 = vmatpush1.msra.mxu0 0.0
        %3494 = vmatprep.subr.mxu0 0.0
        %3495 = vmatpush1.msra.mxu0 0.0
        %3496 = vmatprep.subr.mxu0 0.0
        %3497 = vmatpush1.msra.mxu0 0.0
        %3498 = vmatprep.subr.mxu0 0.0
        %3499 = vmatpush1.msra.mxu0 0.0
        %3500 = vmatprep.subr.mxu0 0.0
        %3501 = vmatpush1.msra.mxu0 0.0
        %3502 = vmatprep.subr.mxu0 0.0
        %3503 = vmatpush1.msra.mxu0 0.0
        %3504 = vmatprep.subr.mxu0 0.0
        %3505 = vmatpush1.msra.mxu0 0.0
        %3506 = vmatprep.subr.mxu0 0.0
        %3507 = vmatpush1.msra.mxu0 0.0
        %3508 = vmatprep.mubr.f32.mxu0 0.0
        %v3509 = vand.u32 %v2762, 4294901760
        %v3510 = vsub.f32 %v2762, %v3509
        %3511 = vmatmul.mubr.f32.gmra.mrb[0].mxu0 %v3510
        %v3512 = vpop.f32.mrb[0].mxu0
        %v3513 = vadd.f32 %v3271, %v3512
        %v3514 = vpop.f32.mrb[0].mxu0
        %3515 = vmatprep.mubr.f32.mxu0 0.0
        %v3516 = vand.u32 %v2763, 4294901760
        %v3517 = vsub.f32 %v2763, %v3516
        %3518 = vmatmul.mubr.f32.gmra.mrb[0].mxu0 %v3517
        %v3519 = vpop.f32.mrb[0].mxu0
        %v3520 = vadd.f32 %v3277, %v3519
        %v3521 = vpop.f32.mrb[0].mxu0
        %3522 = vmatprep.mubr.f32.mxu0 0.0
        %v3523 = vand.u32 %v2764, 4294901760
        %v3524 = vsub.f32 %v2764, %v3523
        %3525 = vmatmul.mubr.f32.gmra.mrb[0].mxu0 %v3524
        %v3526 = vpop.f32.mrb[0].mxu0
        %v3527 = vadd.f32 %v3283, %v3526
        %v3528 = vpop.f32.mrb[0].mxu0
        %3529 = vmatprep.mubr.f32.mxu0 0.0
        %v3530 = vand.u32 %v2765, 4294901760
        %v3531 = vsub.f32 %v2765, %v3530
        %3532 = vmatmul.mubr.f32.gmra.mrb[0].mxu0 %v3531
        %v3533 = vpop.f32.mrb[0].mxu0
        %v3534 = vadd.f32 %v3289, %v3533
        %v3535 = vpop.f32.mrb[0].mxu0
        %3536 = vmatprep.mubr.f32.mxu0 0.0
        %v3537 = vand.u32 %v2766, 4294901760
        %v3538 = vsub.f32 %v2766, %v3537
        %3539 = vmatmul.mubr.f32.gmra.mrb[0].mxu0 %v3538
        %v3540 = vpop.f32.mrb[0].mxu0
        %v3541 = vadd.f32 %v3295, %v3540
        %v3542 = vpop.f32.mrb[0].mxu0
        %3543 = vmatprep.mubr.f32.mxu0 0.0
        %v3544 = vand.u32 %v2767, 4294901760
        %v3545 = vsub.f32 %v2767, %v3544
        %3546 = vmatmul.mubr.f32.gmra.mrb[0].mxu0 %v3545
        %v3547 = vpop.f32.mrb[0].mxu0
        %v3548 = vadd.f32 %v3301, %v3547
        %v3549 = vpop.f32.mrb[0].mxu0
        %3550 = vmatprep.mubr.f32.mxu0 0.0
        %v3551 = vand.u32 %v2768, 4294901760
        %v3552 = vsub.f32 %v2768, %v3551
        %3553 = vmatmul.mubr.f32.gmra.mrb[0].mxu0 %v3552
        %v3554 = vpop.f32.mrb[0].mxu0
        %v3555 = vadd.f32 %v3307, %v3554
        %v3556 = vpop.f32.mrb[0].mxu0
        %3557 = vmatprep.mubr.f32.mxu0 0.0
        %v3558 = vand.u32 %v2769, 4294901760
        %v3559 = vsub.f32 %v2769, %v3558
        %3560 = vmatmul.mubr.f32.gmra.mrb[0].mxu0 %v3559
        %v3561 = vpop.f32.mrb[0].mxu0
        %v3562 = vadd.f32 %v3313, %v3561
        %v3563 = vpop.f32.mrb[0].mxu0
        %3564 = vmatprep.mubr.f32.mxu0 0.0
        %v3565 = vand.u32 %v2770, 4294901760
        %v3566 = vsub.f32 %v2770, %v3565
        %3567 = vmatmul.mubr.f32.gmra.mrb[0].mxu0 %v3566
        %v3568 = vpop.f32.mrb[0].mxu0
        %v3569 = vadd.f32 %v3319, %v3568
        %v3570 = vpop.f32.mrb[0].mxu0
        %3571 = vmatprep.mubr.f32.mxu0 0.0
        %v3572 = vand.u32 %v2771, 4294901760
        %v3573 = vsub.f32 %v2771, %v3572
        %3574 = vmatmul.mubr.f32.gmra.mrb[0].mxu0 %v3573
        %v3575 = vpop.f32.mrb[0].mxu0
        %v3576 = vadd.f32 %v3325, %v3575
        %v3577 = vpop.f32.mrb[0].mxu0
        %3578 = vmatprep.mubr.f32.mxu0 0.0
        %v3579 = vand.u32 %v2772, 4294901760
        %v3580 = vsub.f32 %v2772, %v3579
        %3581 = vmatmul.mubr.f32.gmra.mrb[0].mxu0 %v3580
        %v3582 = vpop.f32.mrb[0].mxu0
        %v3583 = vadd.f32 %v3331, %v3582
        %v3584 = vpop.f32.mrb[0].mxu0
        %3585 = vmatprep.mubr.f32.mxu0 0.0
        %v3586 = vand.u32 %v2773, 4294901760
        %v3587 = vsub.f32 %v2773, %v3586
        %3588 = vmatmul.mubr.f32.gmra.mrb[0].mxu0 %v3587
        %v3589 = vpop.f32.mrb[0].mxu0
        %v3590 = vadd.f32 %v3337, %v3589
        %v3591 = vpop.f32.mrb[0].mxu0
        %3592 = vmatprep.mubr.f32.mxu0 0.0
        %v3593 = vand.u32 %v2774, 4294901760
        %v3594 = vsub.f32 %v2774, %v3593
        %3595 = vmatmul.mubr.f32.gmra.mrb[0].mxu0 %v3594
        %v3596 = vpop.f32.mrb[0].mxu0
        %v3597 = vadd.f32 %v3343, %v3596
        %v3598 = vpop.f32.mrb[0].mxu0
        %3599 = vmatprep.mubr.f32.mxu0 0.0
        %v3600 = vand.u32 %v2775, 4294901760
        %v3601 = vsub.f32 %v2775, %v3600
        %3602 = vmatmul.mubr.f32.gmra.mrb[0].mxu0 %v3601
        %v3603 = vpop.f32.mrb[0].mxu0
        %v3604 = vadd.f32 %v3349, %v3603
        %v3605 = vpop.f32.mrb[0].mxu0
        %3606 = vmatprep.mubr.f32.mxu0 0.0
        %v3607 = vand.u32 %v2776, 4294901760
        %v3608 = vsub.f32 %v2776, %v3607
        %3609 = vmatmul.mubr.f32.gmra.mrb[0].mxu0 %v3608
        %v3610 = vpop.f32.mrb[0].mxu0
        %v3611 = vadd.f32 %v3355, %v3610
        %v3612 = vpop.f32.mrb[0].mxu0
        %3613 = vmatprep.mubr.f32.mxu0 0.0
        %v3614 = vand.u32 %v2777, 4294901760
        %v3615 = vsub.f32 %v2777, %v3614
        %3616 = vmatmul.mubr.f32.gmra.mrb[0].mxu0 %v3615
        %v3617 = vpop.f32.mrb[0].mxu0
        %v3618 = vadd.f32 %v3361, %v3617
        %v3619 = vpop.f32.mrb[0].mxu0
        %3620 = vmatprep.mubr.f32.mxu0 0.0
        %v3621 = vand.u32 %v2778, 4294901760
        %v3622 = vsub.f32 %v2778, %v3621
        %3623 = vmatmul.mubr.f32.gmra.mrb[0].mxu0 %v3622
        %v3624 = vpop.f32.mrb[0].mxu0
        %v3625 = vadd.f32 %v3367, %v3624
        %v3626 = vpop.f32.mrb[0].mxu0
        %3627 = vmatprep.mubr.f32.mxu0 0.0
        %v3628 = vand.u32 %v2779, 4294901760
        %v3629 = vsub.f32 %v2779, %v3628
        %3630 = vmatmul.mubr.f32.gmra.mrb[0].mxu0 %v3629
        %v3631 = vpop.f32.mrb[0].mxu0
        %v3632 = vadd.f32 %v3373, %v3631
        %v3633 = vpop.f32.mrb[0].mxu0
        %3634 = vmatprep.mubr.f32.mxu0 0.0
        %v3635 = vand.u32 %v2780, 4294901760
        %v3636 = vsub.f32 %v2780, %v3635
        %3637 = vmatmul.mubr.f32.gmra.mrb[0].mxu0 %v3636
        %v3638 = vpop.f32.mrb[0].mxu0
        %v3639 = vadd.f32 %v3379, %v3638
        %v3640 = vpop.f32.mrb[0].mxu0
        %3641 = vmatprep.mubr.f32.mxu0 0.0
        %v3642 = vand.u32 %v2781, 4294901760
        %v3643 = vsub.f32 %v2781, %v3642
        %3644 = vmatmul.mubr.f32.gmra.mrb[0].mxu0 %v3643
        %v3645 = vpop.f32.mrb[0].mxu0
        %v3646 = vadd.f32 %v3385, %v3645
        %v3647 = vpop.f32.mrb[0].mxu0
        %3648 = vmatprep.mubr.f32.mxu0 0.0
        %v3649 = vand.u32 %v2782, 4294901760
        %v3650 = vsub.f32 %v2782, %v3649
        %3651 = vmatmul.mubr.f32.gmra.mrb[0].mxu0 %v3650
        %v3652 = vpop.f32.mrb[0].mxu0
        %v3653 = vadd.f32 %v3391, %v3652
        %v3654 = vpop.f32.mrb[0].mxu0
        %3655 = vmatprep.mubr.f32.mxu0 0.0
        %v3656 = vand.u32 %v2783, 4294901760
        %v3657 = vsub.f32 %v2783, %v3656
        %3658 = vmatmul.mubr.f32.gmra.mrb[0].mxu0 %v3657
        %v3659 = vpop.f32.mrb[0].mxu0
        %v3660 = vadd.f32 %v3397, %v3659
        %v3661 = vpop.f32.mrb[0].mxu0
        %3662 = vmatprep.mubr.f32.mxu0 0.0
        %v3663 = vand.u32 %v2784, 4294901760
        %v3664 = vsub.f32 %v2784, %v3663
        %3665 = vmatmul.mubr.f32.gmra.mrb[0].mxu0 %v3664
        %v3666 = vpop.f32.mrb[0].mxu0
        %v3667 = vadd.f32 %v3403, %v3666
        %v3668 = vpop.f32.mrb[0].mxu0
        %3669 = vmatprep.mubr.f32.mxu0 0.0
        %v3670 = vand.u32 %v2785, 4294901760
        %v3671 = vsub.f32 %v2785, %v3670
        %3672 = vmatmul.mubr.f32.gmra.mrb[0].mxu0 %v3671
        %v3673 = vpop.f32.mrb[0].mxu0
        %v3674 = vadd.f32 %v3409, %v3673
        %v3675 = vpop.f32.mrb[0].mxu0
        %3676 = vdwg.mxu0
        %3677 = vmatprep.subr.mxu0 0.0
        %v3678 = vand.u32 %v2786, 4294901760
        %3679 = vmatpush1.msra.mxu0 %v3678
        %3680 = vmatprep.subr.mxu0 0.0
        %v3681 = vand.u32 %v2787, 4294901760
        %3682 = vmatpush1.msra.mxu0 %v3681
        %3683 = vmatprep.subr.mxu0 0.0
        %v3684 = vand.u32 %v2788, 4294901760
        %3685 = vmatpush1.msra.mxu0 %v3684
        %3686 = vmatprep.subr.mxu0 0.0
        %v3687 = vand.u32 %v2789, 4294901760
        %3688 = vmatpush1.msra.mxu0 %v3687
        %3689 = vmatprep.subr.mxu0 0.0
        %v3690 = vand.u32 %v2790, 4294901760
        %3691 = vmatpush1.msra.mxu0 %v3690
        %3692 = vmatprep.subr.mxu0 0.0
        %v3693 = vand.u32 %v2791, 4294901760
        %3694 = vmatpush1.msra.mxu0 %v3693
        %3695 = vmatprep.subr.mxu0 0.0
        %v3696 = vand.u32 %v2792, 4294901760
        %3697 = vmatpush1.msra.mxu0 %v3696
        %3698 = vmatprep.subr.mxu0 0.0
        %v3699 = vand.u32 %v2793, 4294901760
        %3700 = vmatpush1.msra.mxu0 %v3699
        %3701 = vmatprep.subr.mxu0 0.0
        %v3702 = vand.u32 %v2794, 4294901760
        %3703 = vmatpush1.msra.mxu0 %v3702
        %3704 = vmatprep.subr.mxu0 0.0
        %v3705 = vand.u32 %v2795, 4294901760
        %3706 = vmatpush1.msra.mxu0 %v3705
        %3707 = vmatprep.subr.mxu0 0.0
        %v3708 = vand.u32 %v2796, 4294901760
        %3709 = vmatpush1.msra.mxu0 %v3708
        %3710 = vmatprep.subr.mxu0 0.0
        %v3711 = vand.u32 %v2797, 4294901760
        %3712 = vmatpush1.msra.mxu0 %v3711
        %3713 = vmatprep.subr.mxu0 0.0
        %v3714 = vand.u32 %v2798, 4294901760
        %3715 = vmatpush1.msra.mxu0 %v3714
        %3716 = vmatprep.subr.mxu0 0.0
        %v3717 = vand.u32 %v2799, 4294901760
        %3718 = vmatpush1.msra.mxu0 %v3717
        %3719 = vmatprep.subr.mxu0 0.0
        %v3720 = vand.u32 %v2800, 4294901760
        %3721 = vmatpush1.msra.mxu0 %v3720
        %3722 = vmatprep.subr.mxu0 0.0
        %v3723 = vand.u32 %v2801, 4294901760
        %3724 = vmatpush1.msra.mxu0 %v3723
        %3725 = vmatprep.subr.mxu0 0.0
        %3726 = vmatpush1.msra.mxu0 0.0
        %3727 = vmatprep.subr.mxu0 0.0
        %3728 = vmatpush1.msra.mxu0 0.0
        %3729 = vmatprep.subr.mxu0 0.0
        %3730 = vmatpush1.msra.mxu0 0.0
        %3731 = vmatprep.subr.mxu0 0.0
        %3732 = vmatpush1.msra.mxu0 0.0
        %3733 = vmatprep.subr.mxu0 0.0
        %3734 = vmatpush1.msra.mxu0 0.0
        %3735 = vmatprep.subr.mxu0 0.0
        %3736 = vmatpush1.msra.mxu0 0.0
        %3737 = vmatprep.subr.mxu0 0.0
        %3738 = vmatpush1.msra.mxu0 0.0
        %3739 = vmatprep.subr.mxu0 0.0
        %3740 = vmatpush1.msra.mxu0 0.0
        %3741 = vmatprep.subr.mxu0 0.0
        %3742 = vmatpush1.msra.mxu0 0.0
        %3743 = vmatprep.subr.mxu0 0.0
        %3744 = vmatpush1.msra.mxu0 0.0
        %3745 = vmatprep.subr.mxu0 0.0
        %3746 = vmatpush1.msra.mxu0 0.0
        %3747 = vmatprep.subr.mxu0 0.0
        %3748 = vmatpush1.msra.mxu0 0.0
        %3749 = vmatprep.subr.mxu0 0.0
        %3750 = vmatpush1.msra.mxu0 0.0
        %3751 = vmatprep.subr.mxu0 0.0
        %3752 = vmatpush1.msra.mxu0 0.0
        %3753 = vmatprep.subr.mxu0 0.0
        %3754 = vmatpush1.msra.mxu0 0.0
        %3755 = vmatprep.subr.mxu0 0.0
        %3756 = vmatpush1.msra.mxu0 0.0
        %3757 = vmatprep.mubr.f32.mxu0 0.0
        %v3758 = vand.u32 %v2762, 4294901760
        %v3759 = vsub.f32 %v2762, %v3758
        %v3760 = vand.u32 %v3759, 4294901760
        %3761 = vmatmul.mubr.f32.gmra.mrb[0].mxu0 %v3760
        %v3762 = vpop.f32.mrb[0].mxu0
        %v3763 = vadd.f32 %v3513, %v3762
        %v3764 = vpop.f32.mrb[0].mxu0
        %3765 = vmatprep.mubr.f32.mxu0 0.0
        %v3766 = vand.u32 %v2763, 4294901760
        %v3767 = vsub.f32 %v2763, %v3766
        %v3768 = vand.u32 %v3767, 4294901760
        %3769 = vmatmul.mubr.f32.gmra.mrb[0].mxu0 %v3768
        %v3770 = vpop.f32.mrb[0].mxu0
        %v3771 = vadd.f32 %v3520, %v3770
        %v3772 = vpop.f32.mrb[0].mxu0
        %3773 = vmatprep.mubr.f32.mxu0 0.0
        %v3774 = vand.u32 %v2764, 4294901760
        %v3775 = vsub.f32 %v2764, %v3774
        %v3776 = vand.u32 %v3775, 4294901760
        %3777 = vmatmul.mubr.f32.gmra.mrb[0].mxu0 %v3776
        %v3778 = vpop.f32.mrb[0].mxu0
        %v3779 = vadd.f32 %v3527, %v3778
        %v3780 = vpop.f32.mrb[0].mxu0
        %3781 = vmatprep.mubr.f32.mxu0 0.0
        %v3782 = vand.u32 %v2765, 4294901760
        %v3783 = vsub.f32 %v2765, %v3782
        %v3784 = vand.u32 %v3783, 4294901760
        %3785 = vmatmul.mubr.f32.gmra.mrb[0].mxu0 %v3784
        %v3786 = vpop.f32.mrb[0].mxu0
        %v3787 = vadd.f32 %v3534, %v3786
        %v3788 = vpop.f32.mrb[0].mxu0
        %3789 = vmatprep.mubr.f32.mxu0 0.0
        %v3790 = vand.u32 %v2766, 4294901760
        %v3791 = vsub.f32 %v2766, %v3790
        %v3792 = vand.u32 %v3791, 4294901760
        %3793 = vmatmul.mubr.f32.gmra.mrb[0].mxu0 %v3792
        %v3794 = vpop.f32.mrb[0].mxu0
        %v3795 = vadd.f32 %v3541, %v3794
        %v3796 = vpop.f32.mrb[0].mxu0
        %3797 = vmatprep.mubr.f32.mxu0 0.0
        %v3798 = vand.u32 %v2767, 4294901760
        %v3799 = vsub.f32 %v2767, %v3798
        %v3800 = vand.u32 %v3799, 4294901760
        %3801 = vmatmul.mubr.f32.gmra.mrb[0].mxu0 %v3800
        %v3802 = vpop.f32.mrb[0].mxu0
        %v3803 = vadd.f32 %v3548, %v3802
        %v3804 = vpop.f32.mrb[0].mxu0
        %3805 = vmatprep.mubr.f32.mxu0 0.0
        %v3806 = vand.u32 %v2768, 4294901760
        %v3807 = vsub.f32 %v2768, %v3806
        %v3808 = vand.u32 %v3807, 4294901760
        %3809 = vmatmul.mubr.f32.gmra.mrb[0].mxu0 %v3808
        %v3810 = vpop.f32.mrb[0].mxu0
        %v3811 = vadd.f32 %v3555, %v3810
        %v3812 = vpop.f32.mrb[0].mxu0
        %3813 = vmatprep.mubr.f32.mxu0 0.0
        %v3814 = vand.u32 %v2769, 4294901760
        %v3815 = vsub.f32 %v2769, %v3814
        %v3816 = vand.u32 %v3815, 4294901760
        %3817 = vmatmul.mubr.f32.gmra.mrb[0].mxu0 %v3816
        %v3818 = vpop.f32.mrb[0].mxu0
        %v3819 = vadd.f32 %v3562, %v3818
        %v3820 = vpop.f32.mrb[0].mxu0
        %3821 = vmatprep.mubr.f32.mxu0 0.0
        %v3822 = vand.u32 %v2770, 4294901760
        %v3823 = vsub.f32 %v2770, %v3822
        %v3824 = vand.u32 %v3823, 4294901760
        %3825 = vmatmul.mubr.f32.gmra.mrb[0].mxu0 %v3824
        %v3826 = vpop.f32.mrb[0].mxu0
        %v3827 = vadd.f32 %v3569, %v3826
        %v3828 = vpop.f32.mrb[0].mxu0
        %3829 = vmatprep.mubr.f32.mxu0 0.0
        %v3830 = vand.u32 %v2771, 4294901760
        %v3831 = vsub.f32 %v2771, %v3830
        %v3832 = vand.u32 %v3831, 4294901760
        %3833 = vmatmul.mubr.f32.gmra.mrb[0].mxu0 %v3832
        %v3834 = vpop.f32.mrb[0].mxu0
        %v3835 = vadd.f32 %v3576, %v3834
        %v3836 = vpop.f32.mrb[0].mxu0
        %3837 = vmatprep.mubr.f32.mxu0 0.0
        %v3838 = vand.u32 %v2772, 4294901760
        %v3839 = vsub.f32 %v2772, %v3838
        %v3840 = vand.u32 %v3839, 4294901760
        %3841 = vmatmul.mubr.f32.gmra.mrb[0].mxu0 %v3840
        %v3842 = vpop.f32.mrb[0].mxu0
        %v3843 = vadd.f32 %v3583, %v3842
        %v3844 = vpop.f32.mrb[0].mxu0
        %3845 = vmatprep.mubr.f32.mxu0 0.0
        %v3846 = vand.u32 %v2773, 4294901760
        %v3847 = vsub.f32 %v2773, %v3846
        %v3848 = vand.u32 %v3847, 4294901760
        %3849 = vmatmul.mubr.f32.gmra.mrb[0].mxu0 %v3848
        %v3850 = vpop.f32.mrb[0].mxu0
        %v3851 = vadd.f32 %v3590, %v3850
        %v3852 = vpop.f32.mrb[0].mxu0
        %3853 = vmatprep.mubr.f32.mxu0 0.0
        %v3854 = vand.u32 %v2774, 4294901760
        %v3855 = vsub.f32 %v2774, %v3854
        %v3856 = vand.u32 %v3855, 4294901760
        %3857 = vmatmul.mubr.f32.gmra.mrb[0].mxu0 %v3856
        %v3858 = vpop.f32.mrb[0].mxu0
        %v3859 = vadd.f32 %v3597, %v3858
        %v3860 = vpop.f32.mrb[0].mxu0
        %3861 = vmatprep.mubr.f32.mxu0 0.0
        %v3862 = vand.u32 %v2775, 4294901760
        %v3863 = vsub.f32 %v2775, %v3862
        %v3864 = vand.u32 %v3863, 4294901760
        %3865 = vmatmul.mubr.f32.gmra.mrb[0].mxu0 %v3864
        %v3866 = vpop.f32.mrb[0].mxu0
        %v3867 = vadd.f32 %v3604, %v3866
        %v3868 = vpop.f32.mrb[0].mxu0
        %3869 = vmatprep.mubr.f32.mxu0 0.0
        %v3870 = vand.u32 %v2776, 4294901760
        %v3871 = vsub.f32 %v2776, %v3870
        %v3872 = vand.u32 %v3871, 4294901760
        %3873 = vmatmul.mubr.f32.gmra.mrb[0].mxu0 %v3872
        %v3874 = vpop.f32.mrb[0].mxu0
        %v3875 = vadd.f32 %v3611, %v3874
        %v3876 = vpop.f32.mrb[0].mxu0
        %3877 = vmatprep.mubr.f32.mxu0 0.0
        %v3878 = vand.u32 %v2777, 4294901760
        %v3879 = vsub.f32 %v2777, %v3878
        %v3880 = vand.u32 %v3879, 4294901760
        %3881 = vmatmul.mubr.f32.gmra.mrb[0].mxu0 %v3880
        %v3882 = vpop.f32.mrb[0].mxu0
        %v3883 = vadd.f32 %v3618, %v3882
        %v3884 = vpop.f32.mrb[0].mxu0
        %3885 = vmatprep.mubr.f32.mxu0 0.0
        %v3886 = vand.u32 %v2778, 4294901760
        %v3887 = vsub.f32 %v2778, %v3886
        %v3888 = vand.u32 %v3887, 4294901760
        %3889 = vmatmul.mubr.f32.gmra.mrb[0].mxu0 %v3888
        %v3890 = vpop.f32.mrb[0].mxu0
        %v3891 = vadd.f32 %v3625, %v3890
        %v3892 = vpop.f32.mrb[0].mxu0
        %3893 = vmatprep.mubr.f32.mxu0 0.0
        %v3894 = vand.u32 %v2779, 4294901760
        %v3895 = vsub.f32 %v2779, %v3894
        %v3896 = vand.u32 %v3895, 4294901760
        %3897 = vmatmul.mubr.f32.gmra.mrb[0].mxu0 %v3896
        %v3898 = vpop.f32.mrb[0].mxu0
        %v3899 = vadd.f32 %v3632, %v3898
        %v3900 = vpop.f32.mrb[0].mxu0
        %3901 = vmatprep.mubr.f32.mxu0 0.0
        %v3902 = vand.u32 %v2780, 4294901760
        %v3903 = vsub.f32 %v2780, %v3902
        %v3904 = vand.u32 %v3903, 4294901760
        %3905 = vmatmul.mubr.f32.gmra.mrb[0].mxu0 %v3904
        %v3906 = vpop.f32.mrb[0].mxu0
        %v3907 = vadd.f32 %v3639, %v3906
        %v3908 = vpop.f32.mrb[0].mxu0
        %3909 = vmatprep.mubr.f32.mxu0 0.0
        %v3910 = vand.u32 %v2781, 4294901760
        %v3911 = vsub.f32 %v2781, %v3910
        %v3912 = vand.u32 %v3911, 4294901760
        %3913 = vmatmul.mubr.f32.gmra.mrb[0].mxu0 %v3912
        %v3914 = vpop.f32.mrb[0].mxu0
        %v3915 = vadd.f32 %v3646, %v3914
        %v3916 = vpop.f32.mrb[0].mxu0
        %3917 = vmatprep.mubr.f32.mxu0 0.0
        %v3918 = vand.u32 %v2782, 4294901760
        %v3919 = vsub.f32 %v2782, %v3918
        %v3920 = vand.u32 %v3919, 4294901760
        %3921 = vmatmul.mubr.f32.gmra.mrb[0].mxu0 %v3920
        %v3922 = vpop.f32.mrb[0].mxu0
        %v3923 = vadd.f32 %v3653, %v3922
        %v3924 = vpop.f32.mrb[0].mxu0
        %3925 = vmatprep.mubr.f32.mxu0 0.0
        %v3926 = vand.u32 %v2783, 4294901760
        %v3927 = vsub.f32 %v2783, %v3926
        %v3928 = vand.u32 %v3927, 4294901760
        %3929 = vmatmul.mubr.f32.gmra.mrb[0].mxu0 %v3928
        %v3930 = vpop.f32.mrb[0].mxu0
        %v3931 = vadd.f32 %v3660, %v3930
        %v3932 = vpop.f32.mrb[0].mxu0
        %3933 = vmatprep.mubr.f32.mxu0 0.0
        %v3934 = vand.u32 %v2784, 4294901760
        %v3935 = vsub.f32 %v2784, %v3934
        %v3936 = vand.u32 %v3935, 4294901760
        %3937 = vmatmul.mubr.f32.gmra.mrb[0].mxu0 %v3936
        %v3938 = vpop.f32.mrb[0].mxu0
        %v3939 = vadd.f32 %v3667, %v3938
        %v3940 = vpop.f32.mrb[0].mxu0
        %3941 = vmatprep.mubr.f32.mxu0 0.0
        %v3942 = vand.u32 %v2785, 4294901760
        %v3943 = vsub.f32 %v2785, %v3942
        %v3944 = vand.u32 %v3943, 4294901760
        %3945 = vmatmul.mubr.f32.gmra.mrb[0].mxu0 %v3944
        %v3946 = vpop.f32.mrb[0].mxu0
        %v3947 = vadd.f32 %v3674, %v3946
        %v3948 = vpop.f32.mrb[0].mxu0
        %3949 = vdwg.mxu0
        %3950 = vmatprep.subr.mxu0 0.0
        %v3951 = vand.u32 %v2786, 4294901760
        %v3952 = vsub.f32 %v2786, %v3951
        %v3953 = vand.u32 %v3952, 4294901760
        %3954 = vmatpush1.msra.mxu0 %v3953
        %3955 = vmatprep.subr.mxu0 0.0
        %v3956 = vand.u32 %v2787, 4294901760
        %v3957 = vsub.f32 %v2787, %v3956
        %v3958 = vand.u32 %v3957, 4294901760
        %3959 = vmatpush1.msra.mxu0 %v3958
        %3960 = vmatprep.subr.mxu0 0.0
        %v3961 = vand.u32 %v2788, 4294901760
        %v3962 = vsub.f32 %v2788, %v3961
        %v3963 = vand.u32 %v3962, 4294901760
        %3964 = vmatpush1.msra.mxu0 %v3963
        %3965 = vmatprep.subr.mxu0 0.0
        %v3966 = vand.u32 %v2789, 4294901760
        %v3967 = vsub.f32 %v2789, %v3966
        %v3968 = vand.u32 %v3967, 4294901760
        %3969 = vmatpush1.msra.mxu0 %v3968
        %3970 = vmatprep.subr.mxu0 0.0
        %v3971 = vand.u32 %v2790, 4294901760
        %v3972 = vsub.f32 %v2790, %v3971
        %v3973 = vand.u32 %v3972, 4294901760
        %3974 = vmatpush1.msra.mxu0 %v3973
        %3975 = vmatprep.subr.mxu0 0.0
        %v3976 = vand.u32 %v2791, 4294901760
        %v3977 = vsub.f32 %v2791, %v3976
        %v3978 = vand.u32 %v3977, 4294901760
        %3979 = vmatpush1.msra.mxu0 %v3978
        %3980 = vmatprep.subr.mxu0 0.0
        %v3981 = vand.u32 %v2792, 4294901760
        %v3982 = vsub.f32 %v2792, %v3981
        %v3983 = vand.u32 %v3982, 4294901760
        %3984 = vmatpush1.msra.mxu0 %v3983
        %3985 = vmatprep.subr.mxu0 0.0
        %v3986 = vand.u32 %v2793, 4294901760
        %v3987 = vsub.f32 %v2793, %v3986
        %v3988 = vand.u32 %v3987, 4294901760
        %3989 = vmatpush1.msra.mxu0 %v3988
        %3990 = vmatprep.subr.mxu0 0.0
        %v3991 = vand.u32 %v2794, 4294901760
        %v3992 = vsub.f32 %v2794, %v3991
        %v3993 = vand.u32 %v3992, 4294901760
        %3994 = vmatpush1.msra.mxu0 %v3993
        %3995 = vmatprep.subr.mxu0 0.0
        %v3996 = vand.u32 %v2795, 4294901760
        %v3997 = vsub.f32 %v2795, %v3996
        %v3998 = vand.u32 %v3997, 4294901760
        %3999 = vmatpush1.msra.mxu0 %v3998
        %4000 = vmatprep.subr.mxu0 0.0
        %v4001 = vand.u32 %v2796, 4294901760
        %v4002 = vsub.f32 %v2796, %v4001
        %v4003 = vand.u32 %v4002, 4294901760
        %4004 = vmatpush1.msra.mxu0 %v4003
        %4005 = vmatprep.subr.mxu0 0.0
        %v4006 = vand.u32 %v2797, 4294901760
        %v4007 = vsub.f32 %v2797, %v4006
        %v4008 = vand.u32 %v4007, 4294901760
        %4009 = vmatpush1.msra.mxu0 %v4008
        %4010 = vmatprep.subr.mxu0 0.0
        %v4011 = vand.u32 %v2798, 4294901760
        %v4012 = vsub.f32 %v2798, %v4011
        %v4013 = vand.u32 %v4012, 4294901760
        %4014 = vmatpush1.msra.mxu0 %v4013
        %4015 = vmatprep.subr.mxu0 0.0
        %v4016 = vand.u32 %v2799, 4294901760
        %v4017 = vsub.f32 %v2799, %v4016
        %v4018 = vand.u32 %v4017, 4294901760
        %4019 = vmatpush1.msra.mxu0 %v4018
        %4020 = vmatprep.subr.mxu0 0.0
        %v4021 = vand.u32 %v2800, 4294901760
        %v4022 = vsub.f32 %v2800, %v4021
        %v4023 = vand.u32 %v4022, 4294901760
        %4024 = vmatpush1.msra.mxu0 %v4023
        %4025 = vmatprep.subr.mxu0 0.0
        %v4026 = vand.u32 %v2801, 4294901760
        %v4027 = vsub.f32 %v2801, %v4026
        %v4028 = vand.u32 %v4027, 4294901760
        %4029 = vmatpush1.msra.mxu0 %v4028
        %4030 = vmatprep.subr.mxu0 0.0
        %4031 = vmatpush1.msra.mxu0 0.0
        %4032 = vmatprep.subr.mxu0 0.0
        %4033 = vmatpush1.msra.mxu0 0.0
        %4034 = vmatprep.subr.mxu0 0.0
        %4035 = vmatpush1.msra.mxu0 0.0
        %4036 = vmatprep.subr.mxu0 0.0
        %4037 = vmatpush1.msra.mxu0 0.0
        %4038 = vmatprep.subr.mxu0 0.0
        %4039 = vmatpush1.msra.mxu0 0.0
        %4040 = vmatprep.subr.mxu0 0.0
        %4041 = vmatpush1.msra.mxu0 0.0
        %4042 = vmatprep.subr.mxu0 0.0
        %4043 = vmatpush1.msra.mxu0 0.0
        %4044 = vmatprep.subr.mxu0 0.0
        %4045 = vmatpush1.msra.mxu0 0.0
        %4046 = vmatprep.subr.mxu0 0.0
        %4047 = vmatpush1.msra.mxu0 0.0
        %4048 = vmatprep.subr.mxu0 0.0
        %4049 = vmatpush1.msra.mxu0 0.0
        %4050 = vmatprep.subr.mxu0 0.0
        %4051 = vmatpush1.msra.mxu0 0.0
        %4052 = vmatprep.subr.mxu0 0.0
        %4053 = vmatpush1.msra.mxu0 0.0
        %4054 = vmatprep.subr.mxu0 0.0
        %4055 = vmatpush1.msra.mxu0 0.0
        %4056 = vmatprep.subr.mxu0 0.0
        %4057 = vmatpush1.msra.mxu0 0.0
        %4058 = vmatprep.subr.mxu0 0.0
        %4059 = vmatpush1.msra.mxu0 0.0
        %4060 = vmatprep.subr.mxu0 0.0
        %4061 = vmatpush1.msra.mxu0 0.0
        %4062 = vmatprep.mubr.f32.mxu0 0.0
        %v4063 = vand.u32 %v2762, 4294901760
        %4064 = vmatmul.mubr.f32.gmra.mrb[0].mxu0 %v4063
        %v4065 = vpop.f32.mrb[0].mxu0
        %v4066 = vadd.f32 %v3763, %v4065
        %v4067 = vpop.f32.mrb[0].mxu0
        %4068 = vmatprep.mubr.f32.mxu0 0.0
        %v4069 = vand.u32 %v2763, 4294901760
        %4070 = vmatmul.mubr.f32.gmra.mrb[0].mxu0 %v4069
        %v4071 = vpop.f32.mrb[0].mxu0
        %v4072 = vadd.f32 %v3771, %v4071
        %v4073 = vpop.f32.mrb[0].mxu0
        %4074 = vmatprep.mubr.f32.mxu0 0.0
        %v4075 = vand.u32 %v2764, 4294901760
        %4076 = vmatmul.mubr.f32.gmra.mrb[0].mxu0 %v4075
        %v4077 = vpop.f32.mrb[0].mxu0
        %v4078 = vadd.f32 %v3779, %v4077
        %v4079 = vpop.f32.mrb[0].mxu0
        %4080 = vmatprep.mubr.f32.mxu0 0.0
        %v4081 = vand.u32 %v2765, 4294901760
        %4082 = vmatmul.mubr.f32.gmra.mrb[0].mxu0 %v4081
        %v4083 = vpop.f32.mrb[0].mxu0
        %v4084 = vadd.f32 %v3787, %v4083
        %v4085 = vpop.f32.mrb[0].mxu0
        %4086 = vmatprep.mubr.f32.mxu0 0.0
        %v4087 = vand.u32 %v2766, 4294901760
        %4088 = vmatmul.mubr.f32.gmra.mrb[0].mxu0 %v4087
        %v4089 = vpop.f32.mrb[0].mxu0
        %v4090 = vadd.f32 %v3795, %v4089
        %v4091 = vpop.f32.mrb[0].mxu0
        %4092 = vmatprep.mubr.f32.mxu0 0.0
        %v4093 = vand.u32 %v2767, 4294901760
        %4094 = vmatmul.mubr.f32.gmra.mrb[0].mxu0 %v4093
        %v4095 = vpop.f32.mrb[0].mxu0
        %v4096 = vadd.f32 %v3803, %v4095
        %v4097 = vpop.f32.mrb[0].mxu0
        %4098 = vmatprep.mubr.f32.mxu0 0.0
        %v4099 = vand.u32 %v2768, 4294901760
        %4100 = vmatmul.mubr.f32.gmra.mrb[0].mxu0 %v4099
        %v4101 = vpop.f32.mrb[0].mxu0
        %v4102 = vadd.f32 %v3811, %v4101
        %v4103 = vpop.f32.mrb[0].mxu0
        %4104 = vmatprep.mubr.f32.mxu0 0.0
        %v4105 = vand.u32 %v2769, 4294901760
        %4106 = vmatmul.mubr.f32.gmra.mrb[0].mxu0 %v4105
        %v4107 = vpop.f32.mrb[0].mxu0
        %v4108 = vadd.f32 %v3819, %v4107
        %v4109 = vpop.f32.mrb[0].mxu0
        %4110 = vmatprep.mubr.f32.mxu0 0.0
        %v4111 = vand.u32 %v2770, 4294901760
        %4112 = vmatmul.mubr.f32.gmra.mrb[0].mxu0 %v4111
        %v4113 = vpop.f32.mrb[0].mxu0
        %v4114 = vadd.f32 %v3827, %v4113
        %v4115 = vpop.f32.mrb[0].mxu0
        %4116 = vmatprep.mubr.f32.mxu0 0.0
        %v4117 = vand.u32 %v2771, 4294901760
        %4118 = vmatmul.mubr.f32.gmra.mrb[0].mxu0 %v4117
        %v4119 = vpop.f32.mrb[0].mxu0
        %v4120 = vadd.f32 %v3835, %v4119
        %v4121 = vpop.f32.mrb[0].mxu0
        %4122 = vmatprep.mubr.f32.mxu0 0.0
        %v4123 = vand.u32 %v2772, 4294901760
        %4124 = vmatmul.mubr.f32.gmra.mrb[0].mxu0 %v4123
        %v4125 = vpop.f32.mrb[0].mxu0
        %v4126 = vadd.f32 %v3843, %v4125
        %v4127 = vpop.f32.mrb[0].mxu0
        %4128 = vmatprep.mubr.f32.mxu0 0.0
        %v4129 = vand.u32 %v2773, 4294901760
        %4130 = vmatmul.mubr.f32.gmra.mrb[0].mxu0 %v4129
        %v4131 = vpop.f32.mrb[0].mxu0
        %v4132 = vadd.f32 %v3851, %v4131
        %v4133 = vpop.f32.mrb[0].mxu0
        %4134 = vmatprep.mubr.f32.mxu0 0.0
        %v4135 = vand.u32 %v2774, 4294901760
        %4136 = vmatmul.mubr.f32.gmra.mrb[0].mxu0 %v4135
        %v4137 = vpop.f32.mrb[0].mxu0
        %v4138 = vadd.f32 %v3859, %v4137
        %v4139 = vpop.f32.mrb[0].mxu0
        %4140 = vmatprep.mubr.f32.mxu0 0.0
        %v4141 = vand.u32 %v2775, 4294901760
        %4142 = vmatmul.mubr.f32.gmra.mrb[0].mxu0 %v4141
        %v4143 = vpop.f32.mrb[0].mxu0
        %v4144 = vadd.f32 %v3867, %v4143
        %v4145 = vpop.f32.mrb[0].mxu0
        %4146 = vmatprep.mubr.f32.mxu0 0.0
        %v4147 = vand.u32 %v2776, 4294901760
        %4148 = vmatmul.mubr.f32.gmra.mrb[0].mxu0 %v4147
        %v4149 = vpop.f32.mrb[0].mxu0
        %v4150 = vadd.f32 %v3875, %v4149
        %v4151 = vpop.f32.mrb[0].mxu0
        %4152 = vmatprep.mubr.f32.mxu0 0.0
        %v4153 = vand.u32 %v2777, 4294901760
        %4154 = vmatmul.mubr.f32.gmra.mrb[0].mxu0 %v4153
        %v4155 = vpop.f32.mrb[0].mxu0
        %v4156 = vadd.f32 %v3883, %v4155
        %v4157 = vpop.f32.mrb[0].mxu0
        %4158 = vmatprep.mubr.f32.mxu0 0.0
        %v4159 = vand.u32 %v2778, 4294901760
        %4160 = vmatmul.mubr.f32.gmra.mrb[0].mxu0 %v4159
        %v4161 = vpop.f32.mrb[0].mxu0
        %v4162 = vadd.f32 %v3891, %v4161
        %v4163 = vpop.f32.mrb[0].mxu0
        %4164 = vmatprep.mubr.f32.mxu0 0.0
        %v4165 = vand.u32 %v2779, 4294901760
        %4166 = vmatmul.mubr.f32.gmra.mrb[0].mxu0 %v4165
        %v4167 = vpop.f32.mrb[0].mxu0
        %v4168 = vadd.f32 %v3899, %v4167
        %v4169 = vpop.f32.mrb[0].mxu0
        %4170 = vmatprep.mubr.f32.mxu0 0.0
        %v4171 = vand.u32 %v2780, 4294901760
        %4172 = vmatmul.mubr.f32.gmra.mrb[0].mxu0 %v4171
        %v4173 = vpop.f32.mrb[0].mxu0
        %v4174 = vadd.f32 %v3907, %v4173
        %v4175 = vpop.f32.mrb[0].mxu0
        %4176 = vmatprep.mubr.f32.mxu0 0.0
        %v4177 = vand.u32 %v2781, 4294901760
        %4178 = vmatmul.mubr.f32.gmra.mrb[0].mxu0 %v4177
        %v4179 = vpop.f32.mrb[0].mxu0
        %v4180 = vadd.f32 %v3915, %v4179
        %v4181 = vpop.f32.mrb[0].mxu0
        %4182 = vmatprep.mubr.f32.mxu0 0.0
        %v4183 = vand.u32 %v2782, 4294901760
        %4184 = vmatmul.mubr.f32.gmra.mrb[0].mxu0 %v4183
        %v4185 = vpop.f32.mrb[0].mxu0
        %v4186 = vadd.f32 %v3923, %v4185
        %v4187 = vpop.f32.mrb[0].mxu0
        %4188 = vmatprep.mubr.f32.mxu0 0.0
        %v4189 = vand.u32 %v2783, 4294901760
        %4190 = vmatmul.mubr.f32.gmra.mrb[0].mxu0 %v4189
        %v4191 = vpop.f32.mrb[0].mxu0
        %v4192 = vadd.f32 %v3931, %v4191
        %v4193 = vpop.f32.mrb[0].mxu0
        %4194 = vmatprep.mubr.f32.mxu0 0.0
        %v4195 = vand.u32 %v2784, 4294901760
        %4196 = vmatmul.mubr.f32.gmra.mrb[0].mxu0 %v4195
        %v4197 = vpop.f32.mrb[0].mxu0
        %v4198 = vadd.f32 %v3939, %v4197
        %v4199 = vpop.f32.mrb[0].mxu0
        %4200 = vmatprep.mubr.f32.mxu0 0.0
        %v4201 = vand.u32 %v2785, 4294901760
        %4202 = vmatmul.mubr.f32.gmra.mrb[0].mxu0 %v4201
        %v4203 = vpop.f32.mrb[0].mxu0
        %v4204 = vadd.f32 %v3947, %v4203
        %v4205 = vpop.f32.mrb[0].mxu0
        %4206 = vdwg.mxu0
        %4207 = vmatprep.subr.mxu0 0.0
        %v4208 = vand.u32 %v2786, 4294901760
        %4209 = vmatpush1.msra.mxu0 %v4208
        %4210 = vmatprep.subr.mxu0 0.0
        %v4211 = vand.u32 %v2787, 4294901760
        %4212 = vmatpush1.msra.mxu0 %v4211
        %4213 = vmatprep.subr.mxu0 0.0
        %v4214 = vand.u32 %v2788, 4294901760
        %4215 = vmatpush1.msra.mxu0 %v4214
        %4216 = vmatprep.subr.mxu0 0.0
        %v4217 = vand.u32 %v2789, 4294901760
        %4218 = vmatpush1.msra.mxu0 %v4217
        %4219 = vmatprep.subr.mxu0 0.0
        %v4220 = vand.u32 %v2790, 4294901760
        %4221 = vmatpush1.msra.mxu0 %v4220
        %4222 = vmatprep.subr.mxu0 0.0
        %v4223 = vand.u32 %v2791, 4294901760
        %4224 = vmatpush1.msra.mxu0 %v4223
        %4225 = vmatprep.subr.mxu0 0.0
        %v4226 = vand.u32 %v2792, 4294901760
        %4227 = vmatpush1.msra.mxu0 %v4226
        %4228 = vmatprep.subr.mxu0 0.0
        %v4229 = vand.u32 %v2793, 4294901760
        %4230 = vmatpush1.msra.mxu0 %v4229
        %4231 = vmatprep.subr.mxu0 0.0
        %v4232 = vand.u32 %v2794, 4294901760
        %4233 = vmatpush1.msra.mxu0 %v4232
        %4234 = vmatprep.subr.mxu0 0.0
        %v4235 = vand.u32 %v2795, 4294901760
        %4236 = vmatpush1.msra.mxu0 %v4235
        %4237 = vmatprep.subr.mxu0 0.0
        %v4238 = vand.u32 %v2796, 4294901760
        %4239 = vmatpush1.msra.mxu0 %v4238
        %4240 = vmatprep.subr.mxu0 0.0
        %v4241 = vand.u32 %v2797, 4294901760
        %4242 = vmatpush1.msra.mxu0 %v4241
        %4243 = vmatprep.subr.mxu0 0.0
        %v4244 = vand.u32 %v2798, 4294901760
        %4245 = vmatpush1.msra.mxu0 %v4244
        %4246 = vmatprep.subr.mxu0 0.0
        %v4247 = vand.u32 %v2799, 4294901760
        %4248 = vmatpush1.msra.mxu0 %v4247
        %4249 = vmatprep.subr.mxu0 0.0
        %v4250 = vand.u32 %v2800, 4294901760
        %4251 = vmatpush1.msra.mxu0 %v4250
        %4252 = vmatprep.subr.mxu0 0.0
        %v4253 = vand.u32 %v2801, 4294901760
        %4254 = vmatpush1.msra.mxu0 %v4253
        %4255 = vmatprep.subr.mxu0 0.0
        %4256 = vmatpush1.msra.mxu0 0.0
        %4257 = vmatprep.subr.mxu0 0.0
        %4258 = vmatpush1.msra.mxu0 0.0
        %4259 = vmatprep.subr.mxu0 0.0
        %4260 = vmatpush1.msra.mxu0 0.0
        %4261 = vmatprep.subr.mxu0 0.0
        %4262 = vmatpush1.msra.mxu0 0.0
        %4263 = vmatprep.subr.mxu0 0.0
        %4264 = vmatpush1.msra.mxu0 0.0
        %4265 = vmatprep.subr.mxu0 0.0
        %4266 = vmatpush1.msra.mxu0 0.0
        %4267 = vmatprep.subr.mxu0 0.0
        %4268 = vmatpush1.msra.mxu0 0.0
        %4269 = vmatprep.subr.mxu0 0.0
        %4270 = vmatpush1.msra.mxu0 0.0
        %4271 = vmatprep.subr.mxu0 0.0
        %4272 = vmatpush1.msra.mxu0 0.0
        %4273 = vmatprep.subr.mxu0 0.0
        %4274 = vmatpush1.msra.mxu0 0.0
        %4275 = vmatprep.subr.mxu0 0.0
        %4276 = vmatpush1.msra.mxu0 0.0
        %4277 = vmatprep.subr.mxu0 0.0
        %4278 = vmatpush1.msra.mxu0 0.0
        %4279 = vmatprep.subr.mxu0 0.0
        %4280 = vmatpush1.msra.mxu0 0.0
        %4281 = vmatprep.subr.mxu0 0.0
        %4282 = vmatpush1.msra.mxu0 0.0
        %4283 = vmatprep.subr.mxu0 0.0
        %4284 = vmatpush1.msra.mxu0 0.0
        %4285 = vmatprep.subr.mxu0 0.0
        %4286 = vmatpush1.msra.mxu0 0.0
        %4287 = vmatprep.mubr.f32.mxu0 0.0
        %v4288 = vand.u32 %v2762, 4294901760
        %4289 = vmatmul.mubr.f32.gmra.mrb[0].mxu0 %v4288
        %v4290 = vpop.f32.mrb[0].mxu0
        %v4291 = vadd.f32 %v4066, %v4290
        %v4292 = vpop.f32.mrb[0].mxu0
        %4293 = vmatprep.mubr.f32.mxu0 0.0
        %v4294 = vand.u32 %v2763, 4294901760
        %4295 = vmatmul.mubr.f32.gmra.mrb[0].mxu0 %v4294
        %v4296 = vpop.f32.mrb[0].mxu0
        %v4297 = vadd.f32 %v4072, %v4296
        %v4298 = vpop.f32.mrb[0].mxu0
        %4299 = vmatprep.mubr.f32.mxu0 0.0
        %v4300 = vand.u32 %v2764, 4294901760
        %4301 = vmatmul.mubr.f32.gmra.mrb[0].mxu0 %v4300
        %v4302 = vpop.f32.mrb[0].mxu0
        %v4303 = vadd.f32 %v4078, %v4302
        %v4304 = vpop.f32.mrb[0].mxu0
        %4305 = vmatprep.mubr.f32.mxu0 0.0
        %v4306 = vand.u32 %v2765, 4294901760
        %4307 = vmatmul.mubr.f32.gmra.mrb[0].mxu0 %v4306
        %v4308 = vpop.f32.mrb[0].mxu0
        %v4309 = vadd.f32 %v4084, %v4308
        %v4310 = vpop.f32.mrb[0].mxu0
        %4311 = vmatprep.mubr.f32.mxu0 0.0
        %v4312 = vand.u32 %v2766, 4294901760
        %4313 = vmatmul.mubr.f32.gmra.mrb[0].mxu0 %v4312
        %v4314 = vpop.f32.mrb[0].mxu0
        %v4315 = vadd.f32 %v4090, %v4314
        %v4316 = vpop.f32.mrb[0].mxu0
        %4317 = vmatprep.mubr.f32.mxu0 0.0
        %v4318 = vand.u32 %v2767, 4294901760
        %4319 = vmatmul.mubr.f32.gmra.mrb[0].mxu0 %v4318
        %v4320 = vpop.f32.mrb[0].mxu0
        %v4321 = vadd.f32 %v4096, %v4320
        %v4322 = vpop.f32.mrb[0].mxu0
        %4323 = vmatprep.mubr.f32.mxu0 0.0
        %v4324 = vand.u32 %v2768, 4294901760
        %4325 = vmatmul.mubr.f32.gmra.mrb[0].mxu0 %v4324
        %v4326 = vpop.f32.mrb[0].mxu0
        %v4327 = vadd.f32 %v4102, %v4326
        %v4328 = vpop.f32.mrb[0].mxu0
        %4329 = vmatprep.mubr.f32.mxu0 0.0
        %v4330 = vand.u32 %v2769, 4294901760
        %4331 = vmatmul.mubr.f32.gmra.mrb[0].mxu0 %v4330
        %v4332 = vpop.f32.mrb[0].mxu0
        %v4333 = vadd.f32 %v4108, %v4332
        %v4334 = vpop.f32.mrb[0].mxu0
        %4335 = vmatprep.mubr.f32.mxu0 0.0
        %v4336 = vand.u32 %v2770, 4294901760
        %4337 = vmatmul.mubr.f32.gmra.mrb[0].mxu0 %v4336
        %v4338 = vpop.f32.mrb[0].mxu0
        %v4339 = vadd.f32 %v4114, %v4338
        %v4340 = vpop.f32.mrb[0].mxu0
        %4341 = vmatprep.mubr.f32.mxu0 0.0
        %v4342 = vand.u32 %v2771, 4294901760
        %4343 = vmatmul.mubr.f32.gmra.mrb[0].mxu0 %v4342
        %v4344 = vpop.f32.mrb[0].mxu0
        %v4345 = vadd.f32 %v4120, %v4344
        %v4346 = vpop.f32.mrb[0].mxu0
        %4347 = vmatprep.mubr.f32.mxu0 0.0
        %v4348 = vand.u32 %v2772, 4294901760
        %4349 = vmatmul.mubr.f32.gmra.mrb[0].mxu0 %v4348
        %v4350 = vpop.f32.mrb[0].mxu0
        %v4351 = vadd.f32 %v4126, %v4350
        %v4352 = vpop.f32.mrb[0].mxu0
        %4353 = vmatprep.mubr.f32.mxu0 0.0
        %v4354 = vand.u32 %v2773, 4294901760
        %4355 = vmatmul.mubr.f32.gmra.mrb[0].mxu0 %v4354
        %v4356 = vpop.f32.mrb[0].mxu0
        %v4357 = vadd.f32 %v4132, %v4356
        %v4358 = vpop.f32.mrb[0].mxu0
        %4359 = vmatprep.mubr.f32.mxu0 0.0
        %v4360 = vand.u32 %v2774, 4294901760
        %4361 = vmatmul.mubr.f32.gmra.mrb[0].mxu0 %v4360
        %v4362 = vpop.f32.mrb[0].mxu0
        %v4363 = vadd.f32 %v4138, %v4362
        %v4364 = vpop.f32.mrb[0].mxu0
        %4365 = vmatprep.mubr.f32.mxu0 0.0
        %v4366 = vand.u32 %v2775, 4294901760
        %4367 = vmatmul.mubr.f32.gmra.mrb[0].mxu0 %v4366
        %v4368 = vpop.f32.mrb[0].mxu0
        %v4369 = vadd.f32 %v4144, %v4368
        %v4370 = vpop.f32.mrb[0].mxu0
        %4371 = vmatprep.mubr.f32.mxu0 0.0
        %v4372 = vand.u32 %v2776, 4294901760
        %4373 = vmatmul.mubr.f32.gmra.mrb[0].mxu0 %v4372
        %v4374 = vpop.f32.mrb[0].mxu0
        %v4375 = vadd.f32 %v4150, %v4374
        %v4376 = vpop.f32.mrb[0].mxu0
        %4377 = vmatprep.mubr.f32.mxu0 0.0
        %v4378 = vand.u32 %v2777, 4294901760
        %4379 = vmatmul.mubr.f32.gmra.mrb[0].mxu0 %v4378
        %v4380 = vpop.f32.mrb[0].mxu0
        %v4381 = vadd.f32 %v4156, %v4380
        %v4382 = vpop.f32.mrb[0].mxu0
        %4383 = vmatprep.mubr.f32.mxu0 0.0
        %v4384 = vand.u32 %v2778, 4294901760
        %4385 = vmatmul.mubr.f32.gmra.mrb[0].mxu0 %v4384
        %v4386 = vpop.f32.mrb[0].mxu0
        %v4387 = vadd.f32 %v4162, %v4386
        %v4388 = vpop.f32.mrb[0].mxu0
        %4389 = vmatprep.mubr.f32.mxu0 0.0
        %v4390 = vand.u32 %v2779, 4294901760
        %4391 = vmatmul.mubr.f32.gmra.mrb[0].mxu0 %v4390
        %v4392 = vpop.f32.mrb[0].mxu0
        %v4393 = vadd.f32 %v4168, %v4392
        %v4394 = vpop.f32.mrb[0].mxu0
        %4395 = vmatprep.mubr.f32.mxu0 0.0
        %v4396 = vand.u32 %v2780, 4294901760
        %4397 = vmatmul.mubr.f32.gmra.mrb[0].mxu0 %v4396
        %v4398 = vpop.f32.mrb[0].mxu0
        %v4399 = vadd.f32 %v4174, %v4398
        %v4400 = vpop.f32.mrb[0].mxu0
        %4401 = vmatprep.mubr.f32.mxu0 0.0
        %v4402 = vand.u32 %v2781, 4294901760
        %4403 = vmatmul.mubr.f32.gmra.mrb[0].mxu0 %v4402
        %v4404 = vpop.f32.mrb[0].mxu0
        %v4405 = vadd.f32 %v4180, %v4404
        %v4406 = vpop.f32.mrb[0].mxu0
        %4407 = vmatprep.mubr.f32.mxu0 0.0
        %v4408 = vand.u32 %v2782, 4294901760
        %4409 = vmatmul.mubr.f32.gmra.mrb[0].mxu0 %v4408
        %v4410 = vpop.f32.mrb[0].mxu0
        %v4411 = vadd.f32 %v4186, %v4410
        %v4412 = vpop.f32.mrb[0].mxu0
        %4413 = vmatprep.mubr.f32.mxu0 0.0
        %v4414 = vand.u32 %v2783, 4294901760
        %4415 = vmatmul.mubr.f32.gmra.mrb[0].mxu0 %v4414
        %v4416 = vpop.f32.mrb[0].mxu0
        %v4417 = vadd.f32 %v4192, %v4416
        %v4418 = vpop.f32.mrb[0].mxu0
        %4419 = vmatprep.mubr.f32.mxu0 0.0
        %v4420 = vand.u32 %v2784, 4294901760
        %4421 = vmatmul.mubr.f32.gmra.mrb[0].mxu0 %v4420
        %v4422 = vpop.f32.mrb[0].mxu0
        %v4423 = vadd.f32 %v4198, %v4422
        %v4424 = vpop.f32.mrb[0].mxu0
        %4425 = vmatprep.mubr.f32.mxu0 0.0
        %v4426 = vand.u32 %v2785, 4294901760
        %4427 = vmatmul.mubr.f32.gmra.mrb[0].mxu0 %v4426
        %v4428 = vpop.f32.mrb[0].mxu0
        %v4429 = vadd.f32 %v4204, %v4428
        %v4430 = vpop.f32.mrb[0].mxu0
        %4431 = vdwg.mxu0
        %v4432 = vmul.f32 %v4291, %v4339
        %v4433 = vmul.f32 %v4297, %v4345
        %v4434 = vmul.f32 %v4303, %v4351
        %v4435 = vmul.f32 %v4309, %v4357
        %v4436 = vmul.f32 %v4315, %v4363
        %v4437 = vmul.f32 %v4321, %v4369
        %v4438 = vmul.f32 %v4327, %v4375
        %v4439 = vmul.f32 %v4333, %v4381
        %v4440 = vmul.f32 %v4387, %v4387
        %v4441 = vmul.f32 %v4393, %v4393
        %v4442 = vmul.f32 %v4399, %v4399
        %v4443 = vmul.f32 %v4405, %v4405
        %v4444 = vmul.f32 %v4411, %v4411
        %v4445 = vmul.f32 %v4417, %v4417
        %v4446 = vmul.f32 %v4423, %v4423
        %v4447 = vmul.f32 %v4429, %v4429
        %v4448 = vsub.f32 %v4432, %v4440
        %v4449 = vsub.f32 %v4433, %v4441
        %v4450 = vsub.f32 %v4434, %v4442
        %v4451 = vsub.f32 %v4435, %v4443
        %v4452 = vsub.f32 %v4436, %v4444
        %v4453 = vsub.f32 %v4437, %v4445
        %v4454 = vsub.f32 %v4438, %v4446
        %v4455 = vsub.f32 %v4439, %v4447
        %v4456 = vadd.f32 %v4291, %v4339
        %v4457 = vadd.f32 %v4297, %v4345
        %v4458 = vadd.f32 %v4303, %v4351
        %v4459 = vadd.f32 %v4309, %v4357
        %v4460 = vadd.f32 %v4315, %v4363
        %v4461 = vadd.f32 %v4321, %v4369
        %v4462 = vadd.f32 %v4327, %v4375
        %v4463 = vadd.f32 %v4333, %v4381
        %v4464 = vmul.f32 %v4456, %v4456
        %v4465 = vmul.f32 %v4457, %v4457
        %v4466 = vmul.f32 %v4458, %v4458
        %v4467 = vmul.f32 %v4459, %v4459
        %v4468 = vmul.f32 %v4460, %v4460
        %v4469 = vmul.f32 %v4461, %v4461
        %v4470 = vmul.f32 %v4462, %v4462
        %v4471 = vmul.f32 %v4463, %v4463
        %v4472 = vmul.f32 %v4448, 4.0
        %v4473 = vmul.f32 %v4449, 4.0
        %v4474 = vmul.f32 %v4450, 4.0
        %v4475 = vmul.f32 %v4451, 4.0
        %v4476 = vmul.f32 %v4452, 4.0
        %v4477 = vmul.f32 %v4453, 4.0
        %v4478 = vmul.f32 %v4454, 4.0
        %v4479 = vmul.f32 %v4455, 4.0
        %v4480 = vsub.f32 %v4464, %v4472
        %v4481 = vsub.f32 %v4465, %v4473
        %v4482 = vsub.f32 %v4466, %v4474
        %v4483 = vsub.f32 %v4467, %v4475
        %v4484 = vsub.f32 %v4468, %v4476
        %v4485 = vsub.f32 %v4469, %v4477
        %v4486 = vsub.f32 %v4470, %v4478
        %v4487 = vsub.f32 %v4471, %v4479
        %v4488 = vand.u32 2147483647, %v4480
        %v4489 = vand.u32 2147483647, %v4481
        %v4490 = vand.u32 2147483647, %v4482
        %v4491 = vand.u32 2147483647, %v4483
        %v4492 = vand.u32 2147483647, %v4484
        %v4493 = vand.u32 2147483647, %v4485
        %v4494 = vand.u32 2147483647, %v4486
        %v4495 = vand.u32 2147483647, %v4487
        %v4496 = vrsqrt.pop %v4488
        %v4497 = vmul.f32 %v4488, %v4496
        %vm4498 = vcmp.eq.f32.partialorder %v4488, inf
        %v4499 = vsel %vm4498, %v4488, %v4497
        %vm4500 = vcmp.eq.f32.partialorder %v4488, 0.0
        %v4501 = vand.u32 %v4488, 2147483648
        %v4502 = vsel %vm4500, %v4501, %v4499
        %v4503 = vrsqrt.pop %v4489
        %v4504 = vmul.f32 %v4489, %v4503
        %vm4505 = vcmp.eq.f32.partialorder %v4489, inf
        %v4506 = vsel %vm4505, %v4489, %v4504
        %vm4507 = vcmp.eq.f32.partialorder %v4489, 0.0
        %v4508 = vand.u32 %v4489, 2147483648
        %v4509 = vsel %vm4507, %v4508, %v4506
        %v4510 = vrsqrt.pop %v4490
        %v4511 = vmul.f32 %v4490, %v4510
        %vm4512 = vcmp.eq.f32.partialorder %v4490, inf
        %v4513 = vsel %vm4512, %v4490, %v4511
        %vm4514 = vcmp.eq.f32.partialorder %v4490, 0.0
        %v4515 = vand.u32 %v4490, 2147483648
        %v4516 = vsel %vm4514, %v4515, %v4513
        %v4517 = vrsqrt.pop %v4491
        %v4518 = vmul.f32 %v4491, %v4517
        %vm4519 = vcmp.eq.f32.partialorder %v4491, inf
        %v4520 = vsel %vm4519, %v4491, %v4518
        %vm4521 = vcmp.eq.f32.partialorder %v4491, 0.0
        %v4522 = vand.u32 %v4491, 2147483648
        %v4523 = vsel %vm4521, %v4522, %v4520
        %v4524 = vrsqrt.pop %v4492
        %v4525 = vmul.f32 %v4492, %v4524
        %vm4526 = vcmp.eq.f32.partialorder %v4492, inf
        %v4527 = vsel %vm4526, %v4492, %v4525
        %vm4528 = vcmp.eq.f32.partialorder %v4492, 0.0
        %v4529 = vand.u32 %v4492, 2147483648
        %v4530 = vsel %vm4528, %v4529, %v4527
        %v4531 = vrsqrt.pop %v4493
        %v4532 = vmul.f32 %v4493, %v4531
        %vm4533 = vcmp.eq.f32.partialorder %v4493, inf
        %v4534 = vsel %vm4533, %v4493, %v4532
        %vm4535 = vcmp.eq.f32.partialorder %v4493, 0.0
        %v4536 = vand.u32 %v4493, 2147483648
        %v4537 = vsel %vm4535, %v4536, %v4534
        %v4538 = vrsqrt.pop %v4494
        %v4539 = vmul.f32 %v4494, %v4538
        %vm4540 = vcmp.eq.f32.partialorder %v4494, inf
        %v4541 = vsel %vm4540, %v4494, %v4539
        %vm4542 = vcmp.eq.f32.partialorder %v4494, 0.0
        %v4543 = vand.u32 %v4494, 2147483648
        %v4544 = vsel %vm4542, %v4543, %v4541
        %v4545 = vrsqrt.pop %v4495
        %v4546 = vmul.f32 %v4495, %v4545
        %vm4547 = vcmp.eq.f32.partialorder %v4495, inf
        %v4548 = vsel %vm4547, %v4495, %v4546
        %vm4549 = vcmp.eq.f32.partialorder %v4495, 0.0
        %v4550 = vand.u32 %v4495, 2147483648
        %v4551 = vsel %vm4549, %v4550, %v4548
        %v4552 = vsub.f32 %v4456, %v4502
        %v4553 = vsub.f32 %v4457, %v4509
        %v4554 = vsub.f32 %v4458, %v4516
        %v4555 = vsub.f32 %v4459, %v4523
        %v4556 = vsub.f32 %v4460, %v4530
        %v4557 = vsub.f32 %v4461, %v4537
        %v4558 = vsub.f32 %v4462, %v4544
        %v4559 = vsub.f32 %v4463, %v4551
        %v4560 = vmul.f32 %v4552, 0.5
        %v4561 = vmul.f32 %v4553, 0.5
        %v4562 = vmul.f32 %v4554, 0.5
        %v4563 = vmul.f32 %v4555, 0.5
        %v4564 = vmul.f32 %v4556, 0.5
        %v4565 = vmul.f32 %v4557, 0.5
        %v4566 = vmul.f32 %v4558, 0.5
        %v4567 = vmul.f32 %v4559, 0.5
        %s4568 = smul.u32 %s28, 4
        %s4569 = sld [smem:[#allocation4 + %s4568]]
        %v4570 = vstv %s4569
        %v4571 = vmul.f32 %v4560, %v4570
        %v4572 = vmul.f32 %v4561, %v4570
        %4573 = vst [vmem:[%s265] sm:$0xff] %v4571
        %4574 = vst [vmem:[%s265 + $0x8] sm:$0xff] %v4572
        %s4575 = sadd.s32 %s4568, 1
        %s4576 = sld [smem:[#allocation4 + %s4575]]
        %v4577 = vstv %s4576
        %v4578 = vmul.f32 %v4562, %v4577
        %v4579 = vmul.f32 %v4563, %v4577
        %s4580 = scalar_lea.vmem %s265, 16 [#allocation13]
        %4581 = vst [vmem:[%s4580] sm:$0xff] %v4578
        %4582 = vst [vmem:[%s4580 + $0x8] sm:$0xff] %v4579
        %s4583 = sadd.s32 %s4568, 2
        %s4584 = sld [smem:[#allocation4 + %s4583]]
        %v4585 = vstv %s4584
        %v4586 = vmul.f32 %v4564, %v4585
        %v4587 = vmul.f32 %v4565, %v4585
        %s4588 = scalar_lea.vmem %s265, 32 [#allocation13]
        %4589 = vst [vmem:[%s4588] sm:$0xff] %v4586
        %4590 = vst [vmem:[%s4588 + $0x8] sm:$0xff] %v4587
        %s4591 = sadd.s32 %s4568, 3
        %s4592 = sld [smem:[#allocation4 + %s4591]]
        %v4593 = vstv %s4592
        %v4594 = vmul.f32 %v4566, %v4593
        %v4595 = vmul.f32 %v4567, %v4593
        %s4596 = scalar_lea.vmem %s265, 48 [#allocation13]
        %4597 = vst [vmem:[%s4596] sm:$0xff] %v4594
        %4598 = vst [vmem:[%s4596 + $0x8] sm:$0xff] %v4595
        %s4599 = sand.u32 %s125, 1
        %s4600 = scalar_lea.sflag [#allocation7], %s4599
        %s4601 = sand.u32 %s125, 1
        %s4602 = smul.addr %s4601, 64
        %s4603 = scalar_lea.vmem [#allocation13], %s4602
        // Predicated region
        $region53: #{tpu_custom_call.1} parent=35 // pred_check
          %p4604 = pneg %p135
        $region54: #{tpu_custom_call.1} parent=35 // pred_check_branch
          %4606 = sbr.rel (%p4604) target = $region56
        $region55: #{tpu_custom_call.1} parent=35 // pred_region
          %s4607 = smul.u32 4, %s28
          %s4609 = ssub.s32 1024, 1024
          %4610 = vsyncadd %s4600, %s4609
          %s4611 = smul.addr %s4607, 2
          %s4612 = smul.addr %s4611, 128
          %s4613 = scalar_lea.hbm %s5, %s4612
          %s4614 = sshll.u32 %s4603, 4
          %s4615 = int_to_ptr.vmem [resolvable:$true] %s4614
          %4620 = dma.vmem_to_hbm [thread:$0]  %s4615, 1024, %s4613, %s4600, 128, 128, 8
        $region56: #{tpu_custom_call.1} parent=35 // pred_fallthru
          _
      $region36: #{tpu_custom_call.1} parent=5 // pred_fallthru
        _
      %p4621 = scmp.le.s32.totalorder 2, %s23
      // Predicated region
      $region57: #{tpu_custom_call.1} parent=5 // pred_check
        %p4622 = pneg %p4621
      $region58: #{tpu_custom_call.1} parent=5 // pred_check_branch
        %4624 = sbr.rel (%p4622) target = $region60
      $region59: #{tpu_custom_call.1} parent=5 // pred_region
        %s4625 = ssub.s32 %s23, 2
        // Predicated region
        $region61: #{tpu_custom_call.1} parent=59 // pred_check
          %p4626 = pneg %p141
        $region62: #{tpu_custom_call.1} parent=59 // pred_check_branch
          %4628 = sbr.rel (%p4626) target = $region64
        $region63: #{tpu_custom_call.1} parent=59 // pred_region
          %s4629 = sand.u32 %s126, 1
          %s4630 = scalar_lea.sflag [#allocation7], %s4629
          %s4631 = sand.u32 %s126, 1
          %s4632 = smul.addr %s4631, 64
          %s4633 = scalar_lea.vmem [#allocation13], %s4632
          %4634 = dma.done %s4630, 1024
        $region64: #{tpu_custom_call.1} parent=59 // pred_fallthru
          _
      $region60: #{tpu_custom_call.1} parent=5 // pred_fallthru
        _
    $region6: #{tpu_custom_call.1} parent=1 // loop_footer
      %s27 = sadd.s32 1, %s23
    $region7: #{tpu_custom_call.1} parent=1 // loop_footer_branch
      %22 = sbr.rel target = $region3
    $region8: #{tpu_custom_call.1} parent=1 // loop_exit
      _
    %4635 = vsyncpa [#allocation6], 1
    %s4636 = scalar_lea.sflag [#allocation6], 1
    %4637 = vsyncpa %s4636, 1
    %4638 = vsyncpa [#allocation9], 1
    %4639 = vsyncpa [#allocation12], 1
    %s4640 = scalar_lea.sflag [#allocation12], 1
    %4641 = vsyncpa %s4640, 1
    %4642 = vsyncpa [#allocation7], 1
    %s4643 = scalar_lea.sflag [#allocation7], 1
    %4644 = vsyncpa %s4643, 1

</llo_original>
